<compile_context>
chip_gen: v5e
topology: v5e:2x2
jax: 0.10.0
libtpu: 0.0.40
codegen_flags: <defaults>
</compile_context>

<pallas_src>
import math

import jax
import jax.numpy as jnp
from jax import lax
from jax.experimental import pallas as pl
from jax.experimental.pallas import tpu as pltpu

LANE = 128
SUBLANE = 8


def _round_up(x, m):
    return ((x + m - 1) // m) * m


def _pad_to(a, shape):
    return jnp.pad(a, [(0, t - s) for s, t in zip(a.shape, shape)])


def _pad_gate_cols(w, H, Hp):
    """w: (..., 3H) with PyTorch gate order [r | z | n] -> (..., 3*Hp), each gate
    occupying its own lane-aligned Hp-wide block (zeros beyond column H)."""
    parts = [
        jnp.pad(w[..., g * H:(g + 1) * H],
                [(0, 0)] * (w.ndim - 1) + [(0, Hp - H)])
        for g in range(3)
    ]
    return jnp.concatenate(parts, axis=-1)


# ----------------------------------------------------------------------------
# Fused kernel: all GRU layers + head in a single invocation (no grid).
#   inputs : x_flat, [w_ih, b_ih, w_hh, b_hh] * L, dense_w, dense_b, enc_w, enc_b
#   outputs: out (S*Bp, Mp), state (L, Bp, Hp)
#   scratch: gi slab (S*Bp, 3Hp), activation slab (S*Bp, Hp)
# Gate order matches PyTorch nn.GRU: [r, z, n]; b_hh(n) stays inside r*(.).
# ----------------------------------------------------------------------------
def _make_fused_kernel(num_layers, seq_len, b_pad, h_pad):
    three_h = 3 * h_pad

    def kernel(*refs):
        x_ref = refs[0]
        layer_refs = refs[1:1 + 4 * num_layers]
        dense_w_ref, dense_b_ref, enc_w_ref, enc_b_ref = \
            refs[1 + 4 * num_layers:1 + 4 * num_layers + 4]
        out_ref, state_ref = refs[-4], refs[-3]
        gi_scr, act_scr = refs[-2], refs[-1]

        for layer in range(num_layers):
            wih_ref, bih_ref, whh_ref, bhh_ref = layer_refs[4 * layer:4 * layer + 4]

            # ---- hoisted input projection: one big MXU matmul over all timesteps ----
            layer_in = x_ref[...] if layer == 0 else act_scr[...]
            gi_scr[...] = (
                jnp.dot(layer_in, wih_ref[...], preferred_element_type=jnp.float32)
                + bih_ref[...]
            )

            # ---- recurrence: only h @ W_hh^T + gate math per timestep ----
            whh = whh_ref[...]                                            # hoisted load
            bhh = jnp.broadcast_to(bhh_ref[...], (b_pad, three_h))        # hoisted bcast

            def step(t, h, whh=whh, bhh=bhh):
                row = pl.multiple_of(t * b_pad, SUBLANE)
                gi_t = gi_scr[pl.ds(row, b_pad), :]                       # (Bp, 3Hp)
                gh = jnp.dot(h, whh, preferred_element_type=jnp.float32) + bhh
                r = jax.nn.sigmoid(gi_t[:, 0:h_pad] + gh[:, 0:h_pad])
                z = jax.nn.sigmoid(gi_t[:, h_pad:2 * h_pad] + gh[:, h_pad:2 * h_pad])
                n = jnp.tanh(gi_t[:, 2 * h_pad:three_h] + r * gh[:, 2 * h_pad:three_h])
                h_new = (1.0 - z) * n + z * h
                act_scr[pl.ds(row, b_pad), :] = h_new
                return h_new

            h0 = jnp.zeros((b_pad, h_pad), jnp.float32)
            h_final = lax.fori_loop(0, seq_len, step, h0, unroll=True)
            state_ref[layer] = h_final

        # ---- fused head on the VMEM-resident activation slab ----
        a = act_scr[...]
        mid = jnp.maximum(
            jnp.dot(a, dense_w_ref[...], preferred_element_type=jnp.float32)
            + dense_b_ref[...], 0.0)
        out_ref[...] = (
            jnp.dot(mid, enc_w_ref[...], preferred_element_type=jnp.float32)
            + enc_b_ref[...]
        )

    return kernel


# ----------------------------------------------------------------------------
# Forward pass: XLA glue (embedding gather, layout, padding) + one fused kernel.
# ----------------------------------------------------------------------------
def seq2seq_encoder_forward(params, X):
    emb_w = params["embedding"]
    gru = params["gru"]
    num_layers = len(gru)
    E = emb_w.shape[1]
    H = gru[0]["w_hh_t"].shape[0]
    maxlen = params["enc_w_t"].shape[1]

    B, S = X.shape
    Bp = _round_up(max(B, SUBLANE), SUBLANE)
    Ep = _round_up(E, LANE)
    Hp = _round_up(H, LANE)
    Dp = _round_up(params["dense_w_t"].shape[1], LANE)
    Mp = _round_up(maxlen, LANE)

    # TODO(synk): embedding gather stays in XLA (jnp.take); a Pallas DMA-gather only
    # pays off for large vocabularies / embedding tables that do not fit VMEM.
    emb = jnp.take(emb_w, X, axis=0)             # (B, S, E)
    x = jnp.transpose(emb, (1, 0, 2))            # (S, B, E) time-major, like X.permute(1,0,2)
    x = _pad_to(x, (S, Bp, Ep)).reshape(S * Bp, Ep)

    args = [x]
    for l, layer in enumerate(gru):
        in_pad = Ep if l == 0 else Hp
        wih = _pad_to(_pad_gate_cols(layer["w_ih_t"], H, Hp), (in_pad, 3 * Hp))
        bih = _pad_gate_cols(layer["b_ih"], H, Hp)
        whh = _pad_to(_pad_gate_cols(layer["w_hh_t"], H, Hp), (Hp, 3 * Hp))
        bhh = _pad_gate_cols(layer["b_hh"], H, Hp)
        args += [wih, bih, whh, bhh]
    args += [
        _pad_to(params["dense_w_t"], (Hp, Dp)),
        _pad_to(params["dense_b"], (1, Dp)),
        _pad_to(params["enc_w_t"], (Dp, Mp)),
        _pad_to(params["enc_b"], (1, Mp)),
    ]

    kernel = _make_fused_kernel(num_layers, S, Bp, Hp)
    out_pad, state_pad = pl.pallas_call(
        kernel,
        out_shape=(
            jax.ShapeDtypeStruct((S * Bp, Mp), jnp.float32),          # lane-dense output
            jax.ShapeDtypeStruct((num_layers, Bp, Hp), jnp.float32),  # final hidden states
        ),
        scratch_shapes=[
            pltpu.VMEM((S * Bp, 3 * Hp), jnp.float32),   # precomputed input projections
            pltpu.VMEM((S * Bp, Hp), jnp.float32),       # inter-layer activation slab
        ],
    )(*args)

    out = out_pad.reshape(S, Bp, Mp)[:, :B, :maxlen]      # (S, B, maxlen)
    state = state_pad[:, :B, :H]                          # (L, B, H)
    return out, state


# ----------------------------------------------------------------------------
# Parameter construction (deterministic, PyTorch-like shapes; weights stored
# pre-transposed as (in_features, 3*hidden) / (in, out)).
# ----------------------------------------------------------------------------
def init_params(key, vocab_size, embed_size, num_hiddens, num_layers, maxlen):
    keys = jax.random.split(key, 4 + 4 * num_layers)
    k_h = 1.0 / math.sqrt(num_hiddens)
    params = {}
    params["embedding"] = jax.random.normal(keys[0], (vocab_size, embed_size), jnp.float32)

    gru = []
    for l in range(num_layers):
        in_sz = embed_size if l == 0 else num_hiddens
        kk = jax.random.split(keys[1 + l], 4)
        gru.append({
            "w_ih_t": jax.random.uniform(kk[0], (in_sz, 3 * num_hiddens), jnp.float32, -k_h, k_h),
            "w_hh_t": jax.random.uniform(kk[1], (num_hiddens, 3 * num_hiddens), jnp.float32, -k_h, k_h),
            "b_ih": jax.random.uniform(kk[2], (1, 3 * num_hiddens), jnp.float32, -k_h, k_h),
            "b_hh": jax.random.uniform(kk[3], (1, 3 * num_hiddens), jnp.float32, -k_h, k_h),
        })
    params["gru"] = gru

    k_d = 1.0 / math.sqrt(num_hiddens)
    params["dense_w_t"] = jax.random.uniform(keys[-4], (num_hiddens, 50), jnp.float32, -k_d, k_d)
    params["dense_b"] = jax.random.uniform(keys[-3], (1, 50), jnp.float32, -k_d, k_d)
    k_e = 1.0 / math.sqrt(50)
    params["enc_w_t"] = jax.random.uniform(keys[-2], (50, maxlen), jnp.float32, -k_e, k_e)
    params["enc_b"] = jax.random.uniform(keys[-1], (1, maxlen), jnp.float32, -k_e, k_e)
    return params


# ----------------------------------------------------------------------------
# Pure-JAX reference (lax.scan GRU, unpadded) for the correctness check.
# ----------------------------------------------------------------------------
def _gru_ref(x, w_ih_t, w_hh_t, b_ih, b_hh):
    H = w_hh_t.shape[0]

    def step(h, xt):
        gi = xt @ w_ih_t + b_ih
        gh = h @ w_hh_t + b_hh
        r = jax.nn.sigmoid(gi[:, :H] + gh[:, :H])
        z = jax.nn.sigmoid(gi[:, H:2 * H] + gh[:, H:2 * H])
        n = jnp.tanh(gi[:, 2 * H:] + r * gh[:, 2 * H:])
        h_new = (1.0 - z) * n + z * h
        return h_new, h_new

    h0 = jnp.zeros((x.shape[1], H), jnp.float32)
    _, out = jax.lax.scan(step, h0, x)
    return out


def _forward_ref(params, X):
    emb = jnp.take(params["embedding"], X, axis=0)
    x = jnp.transpose(emb, (1, 0, 2))
    states = []
    for layer in params["gru"]:
        x = _gru_ref(x, layer["w_ih_t"], layer["w_hh_t"], layer["b_ih"], layer["b_hh"])
        states.append(x[-1])
    state = jnp.stack(states, axis=0)
    h = jnp.maximum(x @ params["dense_w_t"] + params["dense_b"], 0.0)
    out = h @ params["enc_w_t"] + params["enc_b"]
    return out, state


if __name__ == "__main__":
    vocab_size, embed_size, num_hiddens, num_layers, maxlen = 30, 16, 32, 2, 10
    batch, seq_len = 2, 8

    key = jax.random.PRNGKey(0)
    k_param, k_tok = jax.random.split(key)
    params = init_params(k_param, vocab_size, embed_size, num_hiddens, num_layers, maxlen)
    X = jax.random.randint(k_tok, (batch, seq_len), 0, vocab_size, dtype=jnp.int32)

    forward = jax.jit(seq2seq_encoder_forward)
    out, state = forward(params, X)
    out = jax.block_until_ready(out)
    state = jax.block_until_ready(state)

    assert out.shape == (seq_len, batch, maxlen), out.shape
    assert state.shape == (num_layers, batch, num_hiddens), state.shape

    out_ref, state_ref = _forward_ref(params, X)
    assert jnp.allclose(out, out_ref, rtol=1e-4, atol=1e-4), \
        float(jnp.max(jnp.abs(out - out_ref)))
    assert jnp.allclose(state, state_ref, rtol=1e-4, atol=1e-4), \
        float(jnp.max(jnp.abs(state - state_ref)))

    print("KERNEL_OK")
</pallas_src>

<mosaic_0001>
module attributes {stable_mosaic.version = 11 : i64} {
  func.func @kernel(%arg0: memref<64x128xf32, #tpu.memory_space<vmem>>, %arg1: memref<128x384xf32, #tpu.memory_space<vmem>>, %arg2: memref<1x384xf32, #tpu.memory_space<vmem>>, %arg3: memref<128x384xf32, #tpu.memory_space<vmem>>, %arg4: memref<1x384xf32, #tpu.memory_space<vmem>>, %arg5: memref<128x384xf32, #tpu.memory_space<vmem>>, %arg6: memref<1x384xf32, #tpu.memory_space<vmem>>, %arg7: memref<128x384xf32, #tpu.memory_space<vmem>>, %arg8: memref<1x384xf32, #tpu.memory_space<vmem>>, %arg9: memref<128x128xf32, #tpu.memory_space<vmem>>, %arg10: memref<1x128xf32, #tpu.memory_space<vmem>>, %arg11: memref<128x128xf32, #tpu.memory_space<vmem>>, %arg12: memref<1x128xf32, #tpu.memory_space<vmem>>, %arg13: memref<64x128xf32, #tpu.memory_space<vmem>>, %arg14: memref<2x8x128xf32, #tpu.memory_space<vmem>>, %arg15: memref<64x384xf32, #tpu.memory_space<vmem>>, %arg16: memref<64x128xf32, #tpu.memory_space<vmem>>) attributes {dimension_semantics = [], scalar_prefetch = 0 : i64, scratch_operands = 2 : i64, tpu.core_type = #tpu.core_type<tc>} {
    %c0 = arith.constant 0 : index
    %c0_0 = arith.constant 0 : index
    %0 = vector.load %arg0[%c0, %c0_0] : memref<64x128xf32, #tpu.memory_space<vmem>>, vector<64x128xf32>
    %c0_1 = arith.constant 0 : index
    %c0_2 = arith.constant 0 : index
    %1 = vector.load %arg1[%c0_1, %c0_2] : memref<128x384xf32, #tpu.memory_space<vmem>>, vector<128x384xf32>
    %cst = arith.constant dense<0.000000e+00> : vector<64x384xf32>
    %2 = tpu.matmul %0, %1, %cst {dimension_numbers = #tpu.dot_dimension_numbers<[1], [0], [0], [1], [0, 0, 1, 1], [], []>} : vector<64x128xf32>, vector<128x384xf32>, vector<64x384xf32> -> vector<64x384xf32>
    %c0_3 = arith.constant 0 : index
    %c0_4 = arith.constant 0 : index
    %3 = vector.load %arg2[%c0_3, %c0_4] : memref<1x384xf32, #tpu.memory_space<vmem>>, vector<1x384xf32>
    %4 = vector.broadcast %3 : vector<1x384xf32> to vector<64x384xf32>
    %5 = arith.addf %2, %4 : vector<64x384xf32>
    %c0_5 = arith.constant 0 : index
    %c0_6 = arith.constant 0 : index
    %6 = vector.load %arg15[%c0_5, %c0_6] : memref<64x384xf32, #tpu.memory_space<vmem>>, vector<64x384xf32>
    tpu.vector_store %arg15[%c0_5, %c0_6], %5 {strides = array<i32>} : memref<64x384xf32, #tpu.memory_space<vmem>>, vector<64x384xf32>,
    %c0_7 = arith.constant 0 : index
    %c0_8 = arith.constant 0 : index
    %7 = vector.load %arg3[%c0_7, %c0_8] : memref<128x384xf32, #tpu.memory_space<vmem>>, vector<128x384xf32>
    %c0_9 = arith.constant 0 : index
    %c0_10 = arith.constant 0 : index
    %8 = vector.load %arg4[%c0_9, %c0_10] : memref<1x384xf32, #tpu.memory_space<vmem>>, vector<1x384xf32>
    %9 = vector.shape_cast %8 : vector<1x384xf32> to vector<1x384xf32>
    %10 = vector.broadcast %9 : vector<1x384xf32> to vector<8x384xf32>
    %cst_11 = arith.constant 0.000000e+00 : f32
    %11 = vector.broadcast %cst_11 : f32 to vector<8x128xf32>
    %c0_i32 = arith.constant 0 : i32
    %c8_i32 = arith.constant 8 : i32
    %12 = arith.muli %c0_i32, %c8_i32 : i32
    %13 = tpu.assume_multiple %12, 8 : i32
    %14 = arith.index_cast %13 : i32 to index
    %c0_12 = arith.constant 0 : index
    %15 = vector.load %arg15[%14, %c0_12] : memref<64x384xf32, #tpu.memory_space<vmem>>, vector<8x384xf32>
    %cst_13 = arith.constant dense<0.000000e+00> : vector<8x384xf32>
    %16 = tpu.matmul %11, %7, %cst_13 {dimension_numbers = #tpu.dot_dimension_numbers<[1], [0], [0], [1], [0, 0, 1, 1], [], []>} : vector<8x128xf32>, vector<128x384xf32>, vector<8x384xf32> -> vector<8x384xf32>
    %17 = arith.addf %16, %10 : vector<8x384xf32>
    %18 = vector.extract_strided_slice %15 {offsets = [0, 0], sizes = [8, 128], strides = [1, 1]} : vector<8x384xf32> to vector<8x128xf32>
    %19 = vector.extract_strided_slice %17 {offsets = [0, 0], sizes = [8, 128], strides = [1, 1]} : vector<8x384xf32> to vector<8x128xf32>
    %20 = arith.addf %18, %19 : vector<8x128xf32>
    %21 = arith.negf %20 : vector<8x128xf32>
    %22 = math.exp %21 : vector<8x128xf32>
    %cst_14 = arith.constant 1.000000e+00 : f32
    %23 = vector.broadcast %cst_14 : f32 to vector<8x128xf32>
    %24 = arith.addf %23, %22 : vector<8x128xf32>
    %25 = arith.divf %23, %24 : vector<8x128xf32>
    %26 = vector.extract_strided_slice %15 {offsets = [0, 128], sizes = [8, 128], strides = [1, 1]} : vector<8x384xf32> to vector<8x128xf32>
    %27 = vector.extract_strided_slice %17 {offsets = [0, 128], sizes = [8, 128], strides = [1, 1]} : vector<8x384xf32> to vector<8x128xf32>
    %28 = arith.addf %26, %27 : vector<8x128xf32>
    %29 = arith.negf %28 : vector<8x128xf32>
    %30 = math.exp %29 : vector<8x128xf32>
    %cst_15 = arith.constant 1.000000e+00 : f32
    %31 = vector.broadcast %cst_15 : f32 to vector<8x128xf32>
    %32 = arith.addf %31, %30 : vector<8x128xf32>
    %33 = arith.divf %31, %32 : vector<8x128xf32>
    %34 = vector.extract_strided_slice %15 {offsets = [0, 256], sizes = [8, 128], strides = [1, 1]} : vector<8x384xf32> to vector<8x128xf32>
    %35 = vector.extract_strided_slice %17 {offsets = [0, 256], sizes = [8, 128], strides = [1, 1]} : vector<8x384xf32> to vector<8x128xf32>
    %36 = arith.mulf %25, %35 : vector<8x128xf32>
    %37 = arith.addf %34, %36 : vector<8x128xf32>
    %38 = math.tanh %37 : vector<8x128xf32>
    %cst_16 = arith.constant 1.000000e+00 : f32
    %39 = vector.broadcast %cst_16 : f32 to vector<8x128xf32>
    %40 = arith.subf %39, %33 : vector<8x128xf32>
    %41 = arith.mulf %40, %38 : vector<8x128xf32>
    %42 = arith.mulf %33, %11 : vector<8x128xf32>
    %43 = arith.addf %41, %42 : vector<8x128xf32>
    %44 = arith.index_cast %13 : i32 to index
    %c0_17 = arith.constant 0 : index
    %45 = vector.load %arg16[%44, %c0_17] : memref<64x128xf32, #tpu.memory_space<vmem>>, vector<8x128xf32>
    tpu.vector_store %arg16[%44, %c0_17], %43 {strides = array<i32>} : memref<64x128xf32, #tpu.memory_space<vmem>>, vector<8x128xf32>,
    %c1_i32 = arith.constant 1 : i32
    %c8_i32_18 = arith.constant 8 : i32
    %46 = arith.muli %c1_i32, %c8_i32_18 : i32
    %47 = tpu.assume_multiple %46, 8 : i32
    %48 = arith.index_cast %47 : i32 to index
    %c0_19 = arith.constant 0 : index
    %49 = vector.load %arg15[%48, %c0_19] : memref<64x384xf32, #tpu.memory_space<vmem>>, vector<8x384xf32>
    %cst_20 = arith.constant dense<0.000000e+00> : vector<8x384xf32>
    %50 = tpu.matmul %43, %7, %cst_20 {dimension_numbers = #tpu.dot_dimension_numbers<[1], [0], [0], [1], [0, 0, 1, 1], [], []>} : vector<8x128xf32>, vector<128x384xf32>, vector<8x384xf32> -> vector<8x384xf32>
    %51 = arith.addf %50, %10 : vector<8x384xf32>
    %52 = vector.extract_strided_slice %49 {offsets = [0, 0], sizes = [8, 128], strides = [1, 1]} : vector<8x384xf32> to vector<8x128xf32>
    %53 = vector.extract_strided_slice %51 {offsets = [0, 0], sizes = [8, 128], strides = [1, 1]} : vector<8x384xf32> to vector<8x128xf32>
    %54 = arith.addf %52, %53 : vector<8x128xf32>
    %55 = arith.negf %54 : vector<8x128xf32>
    %56 = math.exp %55 : vector<8x128xf32>
    %cst_21 = arith.constant 1.000000e+00 : f32
    %57 = vector.broadcast %cst_21 : f32 to vector<8x128xf32>
    %58 = arith.addf %57, %56 : vector<8x128xf32>
    %59 = arith.divf %57, %58 : vector<8x128xf32>
    %60 = vector.extract_strided_slice %49 {offsets = [0, 128], sizes = [8, 128], strides = [1, 1]} : vector<8x384xf32> to vector<8x128xf32>
    %61 = vector.extract_strided_slice %51 {offsets = [0, 128], sizes = [8, 128], strides = [1, 1]} : vector<8x384xf32> to vector<8x128xf32>
    %62 = arith.addf %60, %61 : vector<8x128xf32>
    %63 = arith.negf %62 : vector<8x128xf32>
    %64 = math.exp %63 : vector<8x128xf32>
    %cst_22 = arith.constant 1.000000e+00 : f32
    %65 = vector.broadcast %cst_22 : f32 to vector<8x128xf32>
    %66 = arith.addf %65, %64 : vector<8x128xf32>
    %67 = arith.divf %65, %66 : vector<8x128xf32>
    %68 = vector.extract_strided_slice %49 {offsets = [0, 256], sizes = [8, 128], strides = [1, 1]} : vector<8x384xf32> to vector<8x128xf32>
    %69 = vector.extract_strided_slice %51 {offsets = [0, 256], sizes = [8, 128], strides = [1, 1]} : vector<8x384xf32> to vector<8x128xf32>
    %70 = arith.mulf %59, %69 : vector<8x128xf32>
    %71 = arith.addf %68, %70 : vector<8x128xf32>
    %72 = math.tanh %71 : vector<8x128xf32>
    %cst_23 = arith.constant 1.000000e+00 : f32
    %73 = vector.broadcast %cst_23 : f32 to vector<8x128xf32>
    %74 = arith.subf %73, %67 : vector<8x128xf32>
    %75 = arith.mulf %74, %72 : vector<8x128xf32>
    %76 = arith.mulf %67, %43 : vector<8x128xf32>
    %77 = arith.addf %75, %76 : vector<8x128xf32>
    %78 = arith.index_cast %47 : i32 to index
    %c0_24 = arith.constant 0 : index
    %79 = vector.load %arg16[%78, %c0_24] : memref<64x128xf32, #tpu.memory_space<vmem>>, vector<8x128xf32>
    tpu.vector_store %arg16[%78, %c0_24], %77 {strides = array<i32>} : memref<64x128xf32, #tpu.memory_space<vmem>>, vector<8x128xf32>,
    %c2_i32 = arith.constant 2 : i32
    %c8_i32_25 = arith.constant 8 : i32
    %80 = arith.muli %c2_i32, %c8_i32_25 : i32
    %81 = tpu.assume_multiple %80, 8 : i32
    %82 = arith.index_cast %81 : i32 to index
    %c0_26 = arith.constant 0 : index
    %83 = vector.load %arg15[%82, %c0_26] : memref<64x384xf32, #tpu.memory_space<vmem>>, vector<8x384xf32>
    %cst_27 = arith.constant dense<0.000000e+00> : vector<8x384xf32>
    %84 = tpu.matmul %77, %7, %cst_27 {dimension_numbers = #tpu.dot_dimension_numbers<[1], [0], [0], [1], [0, 0, 1, 1], [], []>} : vector<8x128xf32>, vector<128x384xf32>, vector<8x384xf32> -> vector<8x384xf32>
    %85 = arith.addf %84, %10 : vector<8x384xf32>
    %86 = vector.extract_strided_slice %83 {offsets = [0, 0], sizes = [8, 128], strides = [1, 1]} : vector<8x384xf32> to vector<8x128xf32>
    %87 = vector.extract_strided_slice %85 {offsets = [0, 0], sizes = [8, 128], strides = [1, 1]} : vector<8x384xf32> to vector<8x128xf32>
    %88 = arith.addf %86, %87 : vector<8x128xf32>
    %89 = arith.negf %88 : vector<8x128xf32>
    %90 = math.exp %89 : vector<8x128xf32>
    %cst_28 = arith.constant 1.000000e+00 : f32
    %91 = vector.broadcast %cst_28 : f32 to vector<8x128xf32>
    %92 = arith.addf %91, %90 : vector<8x128xf32>
    %93 = arith.divf %91, %92 : vector<8x128xf32>
    %94 = vector.extract_strided_slice %83 {offsets = [0, 128], sizes = [8, 128], strides = [1, 1]} : vector<8x384xf32> to vector<8x128xf32>
    %95 = vector.extract_strided_slice %85 {offsets = [0, 128], sizes = [8, 128], strides = [1, 1]} : vector<8x384xf32> to vector<8x128xf32>
    %96 = arith.addf %94, %95 : vector<8x128xf32>
    %97 = arith.negf %96 : vector<8x128xf32>
    %98 = math.exp %97 : vector<8x128xf32>
    %cst_29 = arith.constant 1.000000e+00 : f32
    %99 = vector.broadcast %cst_29 : f32 to vector<8x128xf32>
    %100 = arith.addf %99, %98 : vector<8x128xf32>
    %101 = arith.divf %99, %100 : vector<8x128xf32>
    %102 = vector.extract_strided_slice %83 {offsets = [0, 256], sizes = [8, 128], strides = [1, 1]} : vector<8x384xf32> to vector<8x128xf32>
    %103 = vector.extract_strided_slice %85 {offsets = [0, 256], sizes = [8, 128], strides = [1, 1]} : vector<8x384xf32> to vector<8x128xf32>
    %104 = arith.mulf %93, %103 : vector<8x128xf32>
    %105 = arith.addf %102, %104 : vector<8x128xf32>
    %106 = math.tanh %105 : vector<8x128xf32>
    %cst_30 = arith.constant 1.000000e+00 : f32
    %107 = vector.broadcast %cst_30 : f32 to vector<8x128xf32>
    %108 = arith.subf %107, %101 : vector<8x128xf32>
    %109 = arith.mulf %108, %106 : vector<8x128xf32>
    %110 = arith.mulf %101, %77 : vector<8x128xf32>
    %111 = arith.addf %109, %110 : vector<8x128xf32>
    %112 = arith.index_cast %81 : i32 to index
    %c0_31 = arith.constant 0 : index
    %113 = vector.load %arg16[%112, %c0_31] : memref<64x128xf32, #tpu.memory_space<vmem>>, vector<8x128xf32>
    tpu.vector_store %arg16[%112, %c0_31], %111 {strides = array<i32>} : memref<64x128xf32, #tpu.memory_space<vmem>>, vector<8x128xf32>,
    %c3_i32 = arith.constant 3 : i32
    %c8_i32_32 = arith.constant 8 : i32
    %114 = arith.muli %c3_i32, %c8_i32_32 : i32
    %115 = tpu.assume_multiple %114, 8 : i32
    %116 = arith.index_cast %115 : i32 to index
    %c0_33 = arith.constant 0 : index
    %117 = vector.load %arg15[%116, %c0_33] : memref<64x384xf32, #tpu.memory_space<vmem>>, vector<8x384xf32>
    %cst_34 = arith.constant dense<0.000000e+00> : vector<8x384xf32>
    %118 = tpu.matmul %111, %7, %cst_34 {dimension_numbers = #tpu.dot_dimension_numbers<[1], [0], [0], [1], [0, 0, 1, 1], [], []>} : vector<8x128xf32>, vector<128x384xf32>, vector<8x384xf32> -> vector<8x384xf32>
    %119 = arith.addf %118, %10 : vector<8x384xf32>
    %120 = vector.extract_strided_slice %117 {offsets = [0, 0], sizes = [8, 128], strides = [1, 1]} : vector<8x384xf32> to vector<8x128xf32>
    %121 = vector.extract_strided_slice %119 {offsets = [0, 0], sizes = [8, 128], strides = [1, 1]} : vector<8x384xf32> to vector<8x128xf32>
    %122 = arith.addf %120, %121 : vector<8x128xf32>
    %123 = arith.negf %122 : vector<8x128xf32>
    %124 = math.exp %123 : vector<8x128xf32>
    %cst_35 = arith.constant 1.000000e+00 : f32
    %125 = vector.broadcast %cst_35 : f32 to vector<8x128xf32>
    %126 = arith.addf %125, %124 : vector<8x128xf32>
    %127 = arith.divf %125, %126 : vector<8x128xf32>
    %128 = vector.extract_strided_slice %117 {offsets = [0, 128], sizes = [8, 128], strides = [1, 1]} : vector<8x384xf32> to vector<8x128xf32>
    %129 = vector.extract_strided_slice %119 {offsets = [0, 128], sizes = [8, 128], strides = [1, 1]} : vector<8x384xf32> to vector<8x128xf32>
    %130 = arith.addf %128, %129 : vector<8x128xf32>
    %131 = arith.negf %130 : vector<8x128xf32>
    %132 = math.exp %131 : vector<8x128xf32>
    %cst_36 = arith.constant 1.000000e+00 : f32
    %133 = vector.broadcast %cst_36 : f32 to vector<8x128xf32>
    %134 = arith.addf %133, %132 : vector<8x128xf32>
    %135 = arith.divf %133, %134 : vector<8x128xf32>
    %136 = vector.extract_strided_slice %117 {offsets = [0, 256], sizes = [8, 128], strides = [1, 1]} : vector<8x384xf32> to vector<8x128xf32>
    %137 = vector.extract_strided_slice %119 {offsets = [0, 256], sizes = [8, 128], strides = [1, 1]} : vector<8x384xf32> to vector<8x128xf32>
    %138 = arith.mulf %127, %137 : vector<8x128xf32>
    %139 = arith.addf %136, %138 : vector<8x128xf32>
    %140 = math.tanh %139 : vector<8x128xf32>
    %cst_37 = arith.constant 1.000000e+00 : f32
    %141 = vector.broadcast %cst_37 : f32 to vector<8x128xf32>
    %142 = arith.subf %141, %135 : vector<8x128xf32>
    %143 = arith.mulf %142, %140 : vector<8x128xf32>
    %144 = arith.mulf %135, %111 : vector<8x128xf32>
    %145 = arith.addf %143, %144 : vector<8x128xf32>
    %146 = arith.index_cast %115 : i32 to index
    %c0_38 = arith.constant 0 : index
    %147 = vector.load %arg16[%146, %c0_38] : memref<64x128xf32, #tpu.memory_space<vmem>>, vector<8x128xf32>
    tpu.vector_store %arg16[%146, %c0_38], %145 {strides = array<i32>} : memref<64x128xf32, #tpu.memory_space<vmem>>, vector<8x128xf32>,
    %c4_i32 = arith.constant 4 : i32
    %c8_i32_39 = arith.constant 8 : i32
    %148 = arith.muli %c4_i32, %c8_i32_39 : i32
    %149 = tpu.assume_multiple %148, 8 : i32
    %150 = arith.index_cast %149 : i32 to index
    %c0_40 = arith.constant 0 : index
    %151 = vector.load %arg15[%150, %c0_40] : memref<64x384xf32, #tpu.memory_space<vmem>>, vector<8x384xf32>
    %cst_41 = arith.constant dense<0.000000e+00> : vector<8x384xf32>
    %152 = tpu.matmul %145, %7, %cst_41 {dimension_numbers = #tpu.dot_dimension_numbers<[1], [0], [0], [1], [0, 0, 1, 1], [], []>} : vector<8x128xf32>, vector<128x384xf32>, vector<8x384xf32> -> vector<8x384xf32>
    %153 = arith.addf %152, %10 : vector<8x384xf32>
    %154 = vector.extract_strided_slice %151 {offsets = [0, 0], sizes = [8, 128], strides = [1, 1]} : vector<8x384xf32> to vector<8x128xf32>
    %155 = vector.extract_strided_slice %153 {offsets = [0, 0], sizes = [8, 128], strides = [1, 1]} : vector<8x384xf32> to vector<8x128xf32>
    %156 = arith.addf %154, %155 : vector<8x128xf32>
    %157 = arith.negf %156 : vector<8x128xf32>
    %158 = math.exp %157 : vector<8x128xf32>
    %cst_42 = arith.constant 1.000000e+00 : f32
    %159 = vector.broadcast %cst_42 : f32 to vector<8x128xf32>
    %160 = arith.addf %159, %158 : vector<8x128xf32>
    %161 = arith.divf %159, %160 : vector<8x128xf32>
    %162 = vector.extract_strided_slice %151 {offsets = [0, 128], sizes = [8, 128], strides = [1, 1]} : vector<8x384xf32> to vector<8x128xf32>
    %163 = vector.extract_strided_slice %153 {offsets = [0, 128], sizes = [8, 128], strides = [1, 1]} : vector<8x384xf32> to vector<8x128xf32>
    %164 = arith.addf %162, %163 : vector<8x128xf32>
    %165 = arith.negf %164 : vector<8x128xf32>
    %166 = math.exp %165 : vector<8x128xf32>
    %cst_43 = arith.constant 1.000000e+00 : f32
    %167 = vector.broadcast %cst_43 : f32 to vector<8x128xf32>
    %168 = arith.addf %167, %166 : vector<8x128xf32>
    %169 = arith.divf %167, %168 : vector<8x128xf32>
    %170 = vector.extract_strided_slice %151 {offsets = [0, 256], sizes = [8, 128], strides = [1, 1]} : vector<8x384xf32> to vector<8x128xf32>
    %171 = vector.extract_strided_slice %153 {offsets = [0, 256], sizes = [8, 128], strides = [1, 1]} : vector<8x384xf32> to vector<8x128xf32>
    %172 = arith.mulf %161, %171 : vector<8x128xf32>
    %173 = arith.addf %170, %172 : vector<8x128xf32>
    %174 = math.tanh %173 : vector<8x128xf32>
    %cst_44 = arith.constant 1.000000e+00 : f32
    %175 = vector.broadcast %cst_44 : f32 to vector<8x128xf32>
    %176 = arith.subf %175, %169 : vector<8x128xf32>
    %177 = arith.mulf %176, %174 : vector<8x128xf32>
    %178 = arith.mulf %169, %145 : vector<8x128xf32>
    %179 = arith.addf %177, %178 : vector<8x128xf32>
    %180 = arith.index_cast %149 : i32 to index
    %c0_45 = arith.constant 0 : index
    %181 = vector.load %arg16[%180, %c0_45] : memref<64x128xf32, #tpu.memory_space<vmem>>, vector<8x128xf32>
    tpu.vector_store %arg16[%180, %c0_45], %179 {strides = array<i32>} : memref<64x128xf32, #tpu.memory_space<vmem>>, vector<8x128xf32>,
    %c5_i32 = arith.constant 5 : i32
    %c8_i32_46 = arith.constant 8 : i32
    %182 = arith.muli %c5_i32, %c8_i32_46 : i32
    %183 = tpu.assume_multiple %182, 8 : i32
    %184 = arith.index_cast %183 : i32 to index
    %c0_47 = arith.constant 0 : index
    %185 = vector.load %arg15[%184, %c0_47] : memref<64x384xf32, #tpu.memory_space<vmem>>, vector<8x384xf32>
    %cst_48 = arith.constant dense<0.000000e+00> : vector<8x384xf32>
    %186 = tpu.matmul %179, %7, %cst_48 {dimension_numbers = #tpu.dot_dimension_numbers<[1], [0], [0], [1], [0, 0, 1, 1], [], []>} : vector<8x128xf32>, vector<128x384xf32>, vector<8x384xf32> -> vector<8x384xf32>
    %187 = arith.addf %186, %10 : vector<8x384xf32>
    %188 = vector.extract_strided_slice %185 {offsets = [0, 0], sizes = [8, 128], strides = [1, 1]} : vector<8x384xf32> to vector<8x128xf32>
    %189 = vector.extract_strided_slice %187 {offsets = [0, 0], sizes = [8, 128], strides = [1, 1]} : vector<8x384xf32> to vector<8x128xf32>
    %190 = arith.addf %188, %189 : vector<8x128xf32>
    %191 = arith.negf %190 : vector<8x128xf32>
    %192 = math.exp %191 : vector<8x128xf32>
    %cst_49 = arith.constant 1.000000e+00 : f32
    %193 = vector.broadcast %cst_49 : f32 to vector<8x128xf32>
    %194 = arith.addf %193, %192 : vector<8x128xf32>
    %195 = arith.divf %193, %194 : vector<8x128xf32>
    %196 = vector.extract_strided_slice %185 {offsets = [0, 128], sizes = [8, 128], strides = [1, 1]} : vector<8x384xf32> to vector<8x128xf32>
    %197 = vector.extract_strided_slice %187 {offsets = [0, 128], sizes = [8, 128], strides = [1, 1]} : vector<8x384xf32> to vector<8x128xf32>
    %198 = arith.addf %196, %197 : vector<8x128xf32>
    %199 = arith.negf %198 : vector<8x128xf32>
    %200 = math.exp %199 : vector<8x128xf32>
    %cst_50 = arith.constant 1.000000e+00 : f32
    %201 = vector.broadcast %cst_50 : f32 to vector<8x128xf32>
    %202 = arith.addf %201, %200 : vector<8x128xf32>
    %203 = arith.divf %201, %202 : vector<8x128xf32>
    %204 = vector.extract_strided_slice %185 {offsets = [0, 256], sizes = [8, 128], strides = [1, 1]} : vector<8x384xf32> to vector<8x128xf32>
    %205 = vector.extract_strided_slice %187 {offsets = [0, 256], sizes = [8, 128], strides = [1, 1]} : vector<8x384xf32> to vector<8x128xf32>
    %206 = arith.mulf %195, %205 : vector<8x128xf32>
    %207 = arith.addf %204, %206 : vector<8x128xf32>
    %208 = math.tanh %207 : vector<8x128xf32>
    %cst_51 = arith.constant 1.000000e+00 : f32
    %209 = vector.broadcast %cst_51 : f32 to vector<8x128xf32>
    %210 = arith.subf %209, %203 : vector<8x128xf32>
    %211 = arith.mulf %210, %208 : vector<8x128xf32>
    %212 = arith.mulf %203, %179 : vector<8x128xf32>
    %213 = arith.addf %211, %212 : vector<8x128xf32>
    %214 = arith.index_cast %183 : i32 to index
    %c0_52 = arith.constant 0 : index
    %215 = vector.load %arg16[%214, %c0_52] : memref<64x128xf32, #tpu.memory_space<vmem>>, vector<8x128xf32>
    tpu.vector_store %arg16[%214, %c0_52], %213 {strides = array<i32>} : memref<64x128xf32, #tpu.memory_space<vmem>>, vector<8x128xf32>,
    %c6_i32 = arith.constant 6 : i32
    %c8_i32_53 = arith.constant 8 : i32
    %216 = arith.muli %c6_i32, %c8_i32_53 : i32
    %217 = tpu.assume_multiple %216, 8 : i32
    %218 = arith.index_cast %217 : i32 to index
    %c0_54 = arith.constant 0 : index
    %219 = vector.load %arg15[%218, %c0_54] : memref<64x384xf32, #tpu.memory_space<vmem>>, vector<8x384xf32>
    %cst_55 = arith.constant dense<0.000000e+00> : vector<8x384xf32>
    %220 = tpu.matmul %213, %7, %cst_55 {dimension_numbers = #tpu.dot_dimension_numbers<[1], [0], [0], [1], [0, 0, 1, 1], [], []>} : vector<8x128xf32>, vector<128x384xf32>, vector<8x384xf32> -> vector<8x384xf32>
    %221 = arith.addf %220, %10 : vector<8x384xf32>
    %222 = vector.extract_strided_slice %219 {offsets = [0, 0], sizes = [8, 128], strides = [1, 1]} : vector<8x384xf32> to vector<8x128xf32>
    %223 = vector.extract_strided_slice %221 {offsets = [0, 0], sizes = [8, 128], strides = [1, 1]} : vector<8x384xf32> to vector<8x128xf32>
    %224 = arith.addf %222, %223 : vector<8x128xf32>
    %225 = arith.negf %224 : vector<8x128xf32>
    %226 = math.exp %225 : vector<8x128xf32>
    %cst_56 = arith.constant 1.000000e+00 : f32
    %227 = vector.broadcast %cst_56 : f32 to vector<8x128xf32>
    %228 = arith.addf %227, %226 : vector<8x128xf32>
    %229 = arith.divf %227, %228 : vector<8x128xf32>
    %230 = vector.extract_strided_slice %219 {offsets = [0, 128], sizes = [8, 128], strides = [1, 1]} : vector<8x384xf32> to vector<8x128xf32>
    %231 = vector.extract_strided_slice %221 {offsets = [0, 128], sizes = [8, 128], strides = [1, 1]} : vector<8x384xf32> to vector<8x128xf32>
    %232 = arith.addf %230, %231 : vector<8x128xf32>
    %233 = arith.negf %232 : vector<8x128xf32>
    %234 = math.exp %233 : vector<8x128xf32>
    %cst_57 = arith.constant 1.000000e+00 : f32
    %235 = vector.broadcast %cst_57 : f32 to vector<8x128xf32>
    %236 = arith.addf %235, %234 : vector<8x128xf32>
    %237 = arith.divf %235, %236 : vector<8x128xf32>
    %238 = vector.extract_strided_slice %219 {offsets = [0, 256], sizes = [8, 128], strides = [1, 1]} : vector<8x384xf32> to vector<8x128xf32>
    %239 = vector.extract_strided_slice %221 {offsets = [0, 256], sizes = [8, 128], strides = [1, 1]} : vector<8x384xf32> to vector<8x128xf32>
    %240 = arith.mulf %229, %239 : vector<8x128xf32>
    %241 = arith.addf %238, %240 : vector<8x128xf32>
    %242 = math.tanh %241 : vector<8x128xf32>
    %cst_58 = arith.constant 1.000000e+00 : f32
    %243 = vector.broadcast %cst_58 : f32 to vector<8x128xf32>
    %244 = arith.subf %243, %237 : vector<8x128xf32>
    %245 = arith.mulf %244, %242 : vector<8x128xf32>
    %246 = arith.mulf %237, %213 : vector<8x128xf32>
    %247 = arith.addf %245, %246 : vector<8x128xf32>
    %248 = arith.index_cast %217 : i32 to index
    %c0_59 = arith.constant 0 : index
    %249 = vector.load %arg16[%248, %c0_59] : memref<64x128xf32, #tpu.memory_space<vmem>>, vector<8x128xf32>
    tpu.vector_store %arg16[%248, %c0_59], %247 {strides = array<i32>} : memref<64x128xf32, #tpu.memory_space<vmem>>, vector<8x128xf32>,
    %c7_i32 = arith.constant 7 : i32
    %c8_i32_60 = arith.constant 8 : i32
    %250 = arith.muli %c7_i32, %c8_i32_60 : i32
    %251 = tpu.assume_multiple %250, 8 : i32
    %252 = arith.index_cast %251 : i32 to index
    %c0_61 = arith.constant 0 : index
    %253 = vector.load %arg15[%252, %c0_61] : memref<64x384xf32, #tpu.memory_space<vmem>>, vector<8x384xf32>
    %cst_62 = arith.constant dense<0.000000e+00> : vector<8x384xf32>
    %254 = tpu.matmul %247, %7, %cst_62 {dimension_numbers = #tpu.dot_dimension_numbers<[1], [0], [0], [1], [0, 0, 1, 1], [], []>} : vector<8x128xf32>, vector<128x384xf32>, vector<8x384xf32> -> vector<8x384xf32>
    %255 = arith.addf %254, %10 : vector<8x384xf32>
    %256 = vector.extract_strided_slice %253 {offsets = [0, 0], sizes = [8, 128], strides = [1, 1]} : vector<8x384xf32> to vector<8x128xf32>
    %257 = vector.extract_strided_slice %255 {offsets = [0, 0], sizes = [8, 128], strides = [1, 1]} : vector<8x384xf32> to vector<8x128xf32>
    %258 = arith.addf %256, %257 : vector<8x128xf32>
    %259 = arith.negf %258 : vector<8x128xf32>
    %260 = math.exp %259 : vector<8x128xf32>
    %cst_63 = arith.constant 1.000000e+00 : f32
    %261 = vector.broadcast %cst_63 : f32 to vector<8x128xf32>
    %262 = arith.addf %261, %260 : vector<8x128xf32>
    %263 = arith.divf %261, %262 : vector<8x128xf32>
    %264 = vector.extract_strided_slice %253 {offsets = [0, 128], sizes = [8, 128], strides = [1, 1]} : vector<8x384xf32> to vector<8x128xf32>
    %265 = vector.extract_strided_slice %255 {offsets = [0, 128], sizes = [8, 128], strides = [1, 1]} : vector<8x384xf32> to vector<8x128xf32>
    %266 = arith.addf %264, %265 : vector<8x128xf32>
    %267 = arith.negf %266 : vector<8x128xf32>
    %268 = math.exp %267 : vector<8x128xf32>
    %cst_64 = arith.constant 1.000000e+00 : f32
    %269 = vector.broadcast %cst_64 : f32 to vector<8x128xf32>
    %270 = arith.addf %269, %268 : vector<8x128xf32>
    %271 = arith.divf %269, %270 : vector<8x128xf32>
    %272 = vector.extract_strided_slice %253 {offsets = [0, 256], sizes = [8, 128], strides = [1, 1]} : vector<8x384xf32> to vector<8x128xf32>
    %273 = vector.extract_strided_slice %255 {offsets = [0, 256], sizes = [8, 128], strides = [1, 1]} : vector<8x384xf32> to vector<8x128xf32>
    %274 = arith.mulf %263, %273 : vector<8x128xf32>
    %275 = arith.addf %272, %274 : vector<8x128xf32>
    %276 = math.tanh %275 : vector<8x128xf32>
    %cst_65 = arith.constant 1.000000e+00 : f32
    %277 = vector.broadcast %cst_65 : f32 to vector<8x128xf32>
    %278 = arith.subf %277, %271 : vector<8x128xf32>
    %279 = arith.mulf %278, %276 : vector<8x128xf32>
    %280 = arith.mulf %271, %247 : vector<8x128xf32>
    %281 = arith.addf %279, %280 : vector<8x128xf32>
    %282 = arith.index_cast %251 : i32 to index
    %c0_66 = arith.constant 0 : index
    %283 = vector.load %arg16[%282, %c0_66] : memref<64x128xf32, #tpu.memory_space<vmem>>, vector<8x128xf32>
    tpu.vector_store %arg16[%282, %c0_66], %281 {strides = array<i32>} : memref<64x128xf32, #tpu.memory_space<vmem>>, vector<8x128xf32>,
    %c8_i32_67 = arith.constant 8 : i32
    %c0_68 = arith.constant 0 : index
    %c0_69 = arith.constant 0 : index
    %c0_70 = arith.constant 0 : index
    %284 = vector.load %arg14[%c0_68, %c0_69, %c0_70] : memref<2x8x128xf32, #tpu.memory_space<vmem>>, vector<1x8x128xf32>
    %285 = vector.shape_cast %284 : vector<1x8x128xf32> to vector<8x128xf32>
    %286 = vector.shape_cast %281 : vector<8x128xf32> to vector<1x8x128xf32>
    tpu.vector_store %arg14[%c0_68, %c0_69, %c0_70], %286 {strides = array<i32>} : memref<2x8x128xf32, #tpu.memory_space<vmem>>, vector<1x8x128xf32>,
    %c0_71 = arith.constant 0 : index
    %c0_72 = arith.constant 0 : index
    %287 = vector.load %arg16[%c0_71, %c0_72] : memref<64x128xf32, #tpu.memory_space<vmem>>, vector<64x128xf32>
    %c0_73 = arith.constant 0 : index
    %c0_74 = arith.constant 0 : index
    %288 = vector.load %arg5[%c0_73, %c0_74] : memref<128x384xf32, #tpu.memory_space<vmem>>, vector<128x384xf32>
    %cst_75 = arith.constant dense<0.000000e+00> : vector<64x384xf32>
    %289 = tpu.matmul %287, %288, %cst_75 {dimension_numbers = #tpu.dot_dimension_numbers<[1], [0], [0], [1], [0, 0, 1, 1], [], []>} : vector<64x128xf32>, vector<128x384xf32>, vector<64x384xf32> -> vector<64x384xf32>
    %c0_76 = arith.constant 0 : index
    %c0_77 = arith.constant 0 : index
    %290 = vector.load %arg6[%c0_76, %c0_77] : memref<1x384xf32, #tpu.memory_space<vmem>>, vector<1x384xf32>
    %291 = vector.broadcast %290 : vector<1x384xf32> to vector<64x384xf32>
    %292 = arith.addf %289, %291 : vector<64x384xf32>
    %c0_78 = arith.constant 0 : index
    %c0_79 = arith.constant 0 : index
    %293 = vector.load %arg15[%c0_78, %c0_79] : memref<64x384xf32, #tpu.memory_space<vmem>>, vector<64x384xf32>
    tpu.vector_store %arg15[%c0_78, %c0_79], %292 {strides = array<i32>} : memref<64x384xf32, #tpu.memory_space<vmem>>, vector<64x384xf32>,
    %c0_80 = arith.constant 0 : index
    %c0_81 = arith.constant 0 : index
    %294 = vector.load %arg7[%c0_80, %c0_81] : memref<128x384xf32, #tpu.memory_space<vmem>>, vector<128x384xf32>
    %c0_82 = arith.constant 0 : index
    %c0_83 = arith.constant 0 : index
    %295 = vector.load %arg8[%c0_82, %c0_83] : memref<1x384xf32, #tpu.memory_space<vmem>>, vector<1x384xf32>
    %296 = vector.shape_cast %295 : vector<1x384xf32> to vector<1x384xf32>
    %297 = vector.broadcast %296 : vector<1x384xf32> to vector<8x384xf32>
    %cst_84 = arith.constant 0.000000e+00 : f32
    %298 = vector.broadcast %cst_84 : f32 to vector<8x128xf32>
    %c0_i32_85 = arith.constant 0 : i32
    %c8_i32_86 = arith.constant 8 : i32
    %299 = arith.muli %c0_i32_85, %c8_i32_86 : i32
    %300 = tpu.assume_multiple %299, 8 : i32
    %301 = arith.index_cast %300 : i32 to index
    %c0_87 = arith.constant 0 : index
    %302 = vector.load %arg15[%301, %c0_87] : memref<64x384xf32, #tpu.memory_space<vmem>>, vector<8x384xf32>
    %cst_88 = arith.constant dense<0.000000e+00> : vector<8x384xf32>
    %303 = tpu.matmul %298, %294, %cst_88 {dimension_numbers = #tpu.dot_dimension_numbers<[1], [0], [0], [1], [0, 0, 1, 1], [], []>} : vector<8x128xf32>, vector<128x384xf32>, vector<8x384xf32> -> vector<8x384xf32>
    %304 = arith.addf %303, %297 : vector<8x384xf32>
    %305 = vector.extract_strided_slice %302 {offsets = [0, 0], sizes = [8, 128], strides = [1, 1]} : vector<8x384xf32> to vector<8x128xf32>
    %306 = vector.extract_strided_slice %304 {offsets = [0, 0], sizes = [8, 128], strides = [1, 1]} : vector<8x384xf32> to vector<8x128xf32>
    %307 = arith.addf %305, %306 : vector<8x128xf32>
    %308 = arith.negf %307 : vector<8x128xf32>
    %309 = math.exp %308 : vector<8x128xf32>
    %cst_89 = arith.constant 1.000000e+00 : f32
    %310 = vector.broadcast %cst_89 : f32 to vector<8x128xf32>
    %311 = arith.addf %310, %309 : vector<8x128xf32>
    %312 = arith.divf %310, %311 : vector<8x128xf32>
    %313 = vector.extract_strided_slice %302 {offsets = [0, 128], sizes = [8, 128], strides = [1, 1]} : vector<8x384xf32> to vector<8x128xf32>
    %314 = vector.extract_strided_slice %304 {offsets = [0, 128], sizes = [8, 128], strides = [1, 1]} : vector<8x384xf32> to vector<8x128xf32>
    %315 = arith.addf %313, %314 : vector<8x128xf32>
    %316 = arith.negf %315 : vector<8x128xf32>
    %317 = math.exp %316 : vector<8x128xf32>
    %cst_90 = arith.constant 1.000000e+00 : f32
    %318 = vector.broadcast %cst_90 : f32 to vector<8x128xf32>
    %319 = arith.addf %318, %317 : vector<8x128xf32>
    %320 = arith.divf %318, %319 : vector<8x128xf32>
    %321 = vector.extract_strided_slice %302 {offsets = [0, 256], sizes = [8, 128], strides = [1, 1]} : vector<8x384xf32> to vector<8x128xf32>
    %322 = vector.extract_strided_slice %304 {offsets = [0, 256], sizes = [8, 128], strides = [1, 1]} : vector<8x384xf32> to vector<8x128xf32>
    %323 = arith.mulf %312, %322 : vector<8x128xf32>
    %324 = arith.addf %321, %323 : vector<8x128xf32>
    %325 = math.tanh %324 : vector<8x128xf32>
    %cst_91 = arith.constant 1.000000e+00 : f32
    %326 = vector.broadcast %cst_91 : f32 to vector<8x128xf32>
    %327 = arith.subf %326, %320 : vector<8x128xf32>
    %328 = arith.mulf %327, %325 : vector<8x128xf32>
    %329 = arith.mulf %320, %298 : vector<8x128xf32>
    %330 = arith.addf %328, %329 : vector<8x128xf32>
    %331 = arith.index_cast %300 : i32 to index
    %c0_92 = arith.constant 0 : index
    %332 = vector.load %arg16[%331, %c0_92] : memref<64x128xf32, #tpu.memory_space<vmem>>, vector<8x128xf32>
    tpu.vector_store %arg16[%331, %c0_92], %330 {strides = array<i32>} : memref<64x128xf32, #tpu.memory_space<vmem>>, vector<8x128xf32>,
    %c1_i32_93 = arith.constant 1 : i32
    %c8_i32_94 = arith.constant 8 : i32
    %333 = arith.muli %c1_i32_93, %c8_i32_94 : i32
    %334 = tpu.assume_multiple %333, 8 : i32
    %335 = arith.index_cast %334 : i32 to index
    %c0_95 = arith.constant 0 : index
    %336 = vector.load %arg15[%335, %c0_95] : memref<64x384xf32, #tpu.memory_space<vmem>>, vector<8x384xf32>
    %cst_96 = arith.constant dense<0.000000e+00> : vector<8x384xf32>
    %337 = tpu.matmul %330, %294, %cst_96 {dimension_numbers = #tpu.dot_dimension_numbers<[1], [0], [0], [1], [0, 0, 1, 1], [], []>} : vector<8x128xf32>, vector<128x384xf32>, vector<8x384xf32> -> vector<8x384xf32>
    %338 = arith.addf %337, %297 : vector<8x384xf32>
    %339 = vector.extract_strided_slice %336 {offsets = [0, 0], sizes = [8, 128], strides = [1, 1]} : vector<8x384xf32> to vector<8x128xf32>
    %340 = vector.extract_strided_slice %338 {offsets = [0, 0], sizes = [8, 128], strides = [1, 1]} : vector<8x384xf32> to vector<8x128xf32>
    %341 = arith.addf %339, %340 : vector<8x128xf32>
    %342 = arith.negf %341 : vector<8x128xf32>
    %343 = math.exp %342 : vector<8x128xf32>
    %cst_97 = arith.constant 1.000000e+00 : f32
    %344 = vector.broadcast %cst_97 : f32 to vector<8x128xf32>
    %345 = arith.addf %344, %343 : vector<8x128xf32>
    %346 = arith.divf %344, %345 : vector<8x128xf32>
    %347 = vector.extract_strided_slice %336 {offsets = [0, 128], sizes = [8, 128], strides = [1, 1]} : vector<8x384xf32> to vector<8x128xf32>
    %348 = vector.extract_strided_slice %338 {offsets = [0, 128], sizes = [8, 128], strides = [1, 1]} : vector<8x384xf32> to vector<8x128xf32>
    %349 = arith.addf %347, %348 : vector<8x128xf32>
    %350 = arith.negf %349 : vector<8x128xf32>
    %351 = math.exp %350 : vector<8x128xf32>
    %cst_98 = arith.constant 1.000000e+00 : f32
    %352 = vector.broadcast %cst_98 : f32 to vector<8x128xf32>
    %353 = arith.addf %352, %351 : vector<8x128xf32>
    %354 = arith.divf %352, %353 : vector<8x128xf32>
    %355 = vector.extract_strided_slice %336 {offsets = [0, 256], sizes = [8, 128], strides = [1, 1]} : vector<8x384xf32> to vector<8x128xf32>
    %356 = vector.extract_strided_slice %338 {offsets = [0, 256], sizes = [8, 128], strides = [1, 1]} : vector<8x384xf32> to vector<8x128xf32>
    %357 = arith.mulf %346, %356 : vector<8x128xf32>
    %358 = arith.addf %355, %357 : vector<8x128xf32>
    %359 = math.tanh %358 : vector<8x128xf32>
    %cst_99 = arith.constant 1.000000e+00 : f32
    %360 = vector.broadcast %cst_99 : f32 to vector<8x128xf32>
    %361 = arith.subf %360, %354 : vector<8x128xf32>
    %362 = arith.mulf %361, %359 : vector<8x128xf32>
    %363 = arith.mulf %354, %330 : vector<8x128xf32>
    %364 = arith.addf %362, %363 : vector<8x128xf32>
    %365 = arith.index_cast %334 : i32 to index
    %c0_100 = arith.constant 0 : index
    %366 = vector.load %arg16[%365, %c0_100] : memref<64x128xf32, #tpu.memory_space<vmem>>, vector<8x128xf32>
    tpu.vector_store %arg16[%365, %c0_100], %364 {strides = array<i32>} : memref<64x128xf32, #tpu.memory_space<vmem>>, vector<8x128xf32>,
    %c2_i32_101 = arith.constant 2 : i32
    %c8_i32_102 = arith.constant 8 : i32
    %367 = arith.muli %c2_i32_101, %c8_i32_102 : i32
    %368 = tpu.assume_multiple %367, 8 : i32
    %369 = arith.index_cast %368 : i32 to index
    %c0_103 = arith.constant 0 : index
    %370 = vector.load %arg15[%369, %c0_103] : memref<64x384xf32, #tpu.memory_space<vmem>>, vector<8x384xf32>
    %cst_104 = arith.constant dense<0.000000e+00> : vector<8x384xf32>
    %371 = tpu.matmul %364, %294, %cst_104 {dimension_numbers = #tpu.dot_dimension_numbers<[1], [0], [0], [1], [0, 0, 1, 1], [], []>} : vector<8x128xf32>, vector<128x384xf32>, vector<8x384xf32> -> vector<8x384xf32>
    %372 = arith.addf %371, %297 : vector<8x384xf32>
    %373 = vector.extract_strided_slice %370 {offsets = [0, 0], sizes = [8, 128], strides = [1, 1]} : vector<8x384xf32> to vector<8x128xf32>
    %374 = vector.extract_strided_slice %372 {offsets = [0, 0], sizes = [8, 128], strides = [1, 1]} : vector<8x384xf32> to vector<8x128xf32>
    %375 = arith.addf %373, %374 : vector<8x128xf32>
    %376 = arith.negf %375 : vector<8x128xf32>
    %377 = math.exp %376 : vector<8x128xf32>
    %cst_105 = arith.constant 1.000000e+00 : f32
    %378 = vector.broadcast %cst_105 : f32 to vector<8x128xf32>
    %379 = arith.addf %378, %377 : vector<8x128xf32>
    %380 = arith.divf %378, %379 : vector<8x128xf32>
    %381 = vector.extract_strided_slice %370 {offsets = [0, 128], sizes = [8, 128], strides = [1, 1]} : vector<8x384xf32> to vector<8x128xf32>
    %382 = vector.extract_strided_slice %372 {offsets = [0, 128], sizes = [8, 128], strides = [1, 1]} : vector<8x384xf32> to vector<8x128xf32>
    %383 = arith.addf %381, %382 : vector<8x128xf32>
    %384 = arith.negf %383 : vector<8x128xf32>
    %385 = math.exp %384 : vector<8x128xf32>
    %cst_106 = arith.constant 1.000000e+00 : f32
    %386 = vector.broadcast %cst_106 : f32 to vector<8x128xf32>
    %387 = arith.addf %386, %385 : vector<8x128xf32>
    %388 = arith.divf %386, %387 : vector<8x128xf32>
    %389 = vector.extract_strided_slice %370 {offsets = [0, 256], sizes = [8, 128], strides = [1, 1]} : vector<8x384xf32> to vector<8x128xf32>
    %390 = vector.extract_strided_slice %372 {offsets = [0, 256], sizes = [8, 128], strides = [1, 1]} : vector<8x384xf32> to vector<8x128xf32>
    %391 = arith.mulf %380, %390 : vector<8x128xf32>
    %392 = arith.addf %389, %391 : vector<8x128xf32>
    %393 = math.tanh %392 : vector<8x128xf32>
    %cst_107 = arith.constant 1.000000e+00 : f32
    %394 = vector.broadcast %cst_107 : f32 to vector<8x128xf32>
    %395 = arith.subf %394, %388 : vector<8x128xf32>
    %396 = arith.mulf %395, %393 : vector<8x128xf32>
    %397 = arith.mulf %388, %364 : vector<8x128xf32>
    %398 = arith.addf %396, %397 : vector<8x128xf32>
    %399 = arith.index_cast %368 : i32 to index
    %c0_108 = arith.constant 0 : index
    %400 = vector.load %arg16[%399, %c0_108] : memref<64x128xf32, #tpu.memory_space<vmem>>, vector<8x128xf32>
    tpu.vector_store %arg16[%399, %c0_108], %398 {strides = array<i32>} : memref<64x128xf32, #tpu.memory_space<vmem>>, vector<8x128xf32>,
    %c3_i32_109 = arith.constant 3 : i32
    %c8_i32_110 = arith.constant 8 : i32
    %401 = arith.muli %c3_i32_109, %c8_i32_110 : i32
    %402 = tpu.assume_multiple %401, 8 : i32
    %403 = arith.index_cast %402 : i32 to index
    %c0_111 = arith.constant 0 : index
    %404 = vector.load %arg15[%403, %c0_111] : memref<64x384xf32, #tpu.memory_space<vmem>>, vector<8x384xf32>
    %cst_112 = arith.constant dense<0.000000e+00> : vector<8x384xf32>
    %405 = tpu.matmul %398, %294, %cst_112 {dimension_numbers = #tpu.dot_dimension_numbers<[1], [0], [0], [1], [0, 0, 1, 1], [], []>} : vector<8x128xf32>, vector<128x384xf32>, vector<8x384xf32> -> vector<8x384xf32>
    %406 = arith.addf %405, %297 : vector<8x384xf32>
    %407 = vector.extract_strided_slice %404 {offsets = [0, 0], sizes = [8, 128], strides = [1, 1]} : vector<8x384xf32> to vector<8x128xf32>
    %408 = vector.extract_strided_slice %406 {offsets = [0, 0], sizes = [8, 128], strides = [1, 1]} : vector<8x384xf32> to vector<8x128xf32>
    %409 = arith.addf %407, %408 : vector<8x128xf32>
    %410 = arith.negf %409 : vector<8x128xf32>
    %411 = math.exp %410 : vector<8x128xf32>
    %cst_113 = arith.constant 1.000000e+00 : f32
    %412 = vector.broadcast %cst_113 : f32 to vector<8x128xf32>
    %413 = arith.addf %412, %411 : vector<8x128xf32>
    %414 = arith.divf %412, %413 : vector<8x128xf32>
    %415 = vector.extract_strided_slice %404 {offsets = [0, 128], sizes = [8, 128], strides = [1, 1]} : vector<8x384xf32> to vector<8x128xf32>
    %416 = vector.extract_strided_slice %406 {offsets = [0, 128], sizes = [8, 128], strides = [1, 1]} : vector<8x384xf32> to vector<8x128xf32>
    %417 = arith.addf %415, %416 : vector<8x128xf32>
    %418 = arith.negf %417 : vector<8x128xf32>
    %419 = math.exp %418 : vector<8x128xf32>
    %cst_114 = arith.constant 1.000000e+00 : f32
    %420 = vector.broadcast %cst_114 : f32 to vector<8x128xf32>
    %421 = arith.addf %420, %419 : vector<8x128xf32>
    %422 = arith.divf %420, %421 : vector<8x128xf32>
    %423 = vector.extract_strided_slice %404 {offsets = [0, 256], sizes = [8, 128], strides = [1, 1]} : vector<8x384xf32> to vector<8x128xf32>
    %424 = vector.extract_strided_slice %406 {offsets = [0, 256], sizes = [8, 128], strides = [1, 1]} : vector<8x384xf32> to vector<8x128xf32>
    %425 = arith.mulf %414, %424 : vector<8x128xf32>
    %426 = arith.addf %423, %425 : vector<8x128xf32>
    %427 = math.tanh %426 : vector<8x128xf32>
    %cst_115 = arith.constant 1.000000e+00 : f32
    %428 = vector.broadcast %cst_115 : f32 to vector<8x128xf32>
    %429 = arith.subf %428, %422 : vector<8x128xf32>
    %430 = arith.mulf %429, %427 : vector<8x128xf32>
    %431 = arith.mulf %422, %398 : vector<8x128xf32>
    %432 = arith.addf %430, %431 : vector<8x128xf32>
    %433 = arith.index_cast %402 : i32 to index
    %c0_116 = arith.constant 0 : index
    %434 = vector.load %arg16[%433, %c0_116] : memref<64x128xf32, #tpu.memory_space<vmem>>, vector<8x128xf32>
    tpu.vector_store %arg16[%433, %c0_116], %432 {strides = array<i32>} : memref<64x128xf32, #tpu.memory_space<vmem>>, vector<8x128xf32>,
    %c4_i32_117 = arith.constant 4 : i32
    %c8_i32_118 = arith.constant 8 : i32
    %435 = arith.muli %c4_i32_117, %c8_i32_118 : i32
    %436 = tpu.assume_multiple %435, 8 : i32
    %437 = arith.index_cast %436 : i32 to index
    %c0_119 = arith.constant 0 : index
    %438 = vector.load %arg15[%437, %c0_119] : memref<64x384xf32, #tpu.memory_space<vmem>>, vector<8x384xf32>
    %cst_120 = arith.constant dense<0.000000e+00> : vector<8x384xf32>
    %439 = tpu.matmul %432, %294, %cst_120 {dimension_numbers = #tpu.dot_dimension_numbers<[1], [0], [0], [1], [0, 0, 1, 1], [], []>} : vector<8x128xf32>, vector<128x384xf32>, vector<8x384xf32> -> vector<8x384xf32>
    %440 = arith.addf %439, %297 : vector<8x384xf32>
    %441 = vector.extract_strided_slice %438 {offsets = [0, 0], sizes = [8, 128], strides = [1, 1]} : vector<8x384xf32> to vector<8x128xf32>
    %442 = vector.extract_strided_slice %440 {offsets = [0, 0], sizes = [8, 128], strides = [1, 1]} : vector<8x384xf32> to vector<8x128xf32>
    %443 = arith.addf %441, %442 : vector<8x128xf32>
    %444 = arith.negf %443 : vector<8x128xf32>
    %445 = math.exp %444 : vector<8x128xf32>
    %cst_121 = arith.constant 1.000000e+00 : f32
    %446 = vector.broadcast %cst_121 : f32 to vector<8x128xf32>
    %447 = arith.addf %446, %445 : vector<8x128xf32>
    %448 = arith.divf %446, %447 : vector<8x128xf32>
    %449 = vector.extract_strided_slice %438 {offsets = [0, 128], sizes = [8, 128], strides = [1, 1]} : vector<8x384xf32> to vector<8x128xf32>
    %450 = vector.extract_strided_slice %440 {offsets = [0, 128], sizes = [8, 128], strides = [1, 1]} : vector<8x384xf32> to vector<8x128xf32>
    %451 = arith.addf %449, %450 : vector<8x128xf32>
    %452 = arith.negf %451 : vector<8x128xf32>
    %453 = math.exp %452 : vector<8x128xf32>
    %cst_122 = arith.constant 1.000000e+00 : f32
    %454 = vector.broadcast %cst_122 : f32 to vector<8x128xf32>
    %455 = arith.addf %454, %453 : vector<8x128xf32>
    %456 = arith.divf %454, %455 : vector<8x128xf32>
    %457 = vector.extract_strided_slice %438 {offsets = [0, 256], sizes = [8, 128], strides = [1, 1]} : vector<8x384xf32> to vector<8x128xf32>
    %458 = vector.extract_strided_slice %440 {offsets = [0, 256], sizes = [8, 128], strides = [1, 1]} : vector<8x384xf32> to vector<8x128xf32>
    %459 = arith.mulf %448, %458 : vector<8x128xf32>
    %460 = arith.addf %457, %459 : vector<8x128xf32>
    %461 = math.tanh %460 : vector<8x128xf32>
    %cst_123 = arith.constant 1.000000e+00 : f32
    %462 = vector.broadcast %cst_123 : f32 to vector<8x128xf32>
    %463 = arith.subf %462, %456 : vector<8x128xf32>
    %464 = arith.mulf %463, %461 : vector<8x128xf32>
    %465 = arith.mulf %456, %432 : vector<8x128xf32>
    %466 = arith.addf %464, %465 : vector<8x128xf32>
    %467 = arith.index_cast %436 : i32 to index
    %c0_124 = arith.constant 0 : index
    %468 = vector.load %arg16[%467, %c0_124] : memref<64x128xf32, #tpu.memory_space<vmem>>, vector<8x128xf32>
    tpu.vector_store %arg16[%467, %c0_124], %466 {strides = array<i32>} : memref<64x128xf32, #tpu.memory_space<vmem>>, vector<8x128xf32>,
    %c5_i32_125 = arith.constant 5 : i32
    %c8_i32_126 = arith.constant 8 : i32
    %469 = arith.muli %c5_i32_125, %c8_i32_126 : i32
    %470 = tpu.assume_multiple %469, 8 : i32
    %471 = arith.index_cast %470 : i32 to index
    %c0_127 = arith.constant 0 : index
    %472 = vector.load %arg15[%471, %c0_127] : memref<64x384xf32, #tpu.memory_space<vmem>>, vector<8x384xf32>
    %cst_128 = arith.constant dense<0.000000e+00> : vector<8x384xf32>
    %473 = tpu.matmul %466, %294, %cst_128 {dimension_numbers = #tpu.dot_dimension_numbers<[1], [0], [0], [1], [0, 0, 1, 1], [], []>} : vector<8x128xf32>, vector<128x384xf32>, vector<8x384xf32> -> vector<8x384xf32>
    %474 = arith.addf %473, %297 : vector<8x384xf32>
    %475 = vector.extract_strided_slice %472 {offsets = [0, 0], sizes = [8, 128], strides = [1, 1]} : vector<8x384xf32> to vector<8x128xf32>
    %476 = vector.extract_strided_slice %474 {offsets = [0, 0], sizes = [8, 128], strides = [1, 1]} : vector<8x384xf32> to vector<8x128xf32>
    %477 = arith.addf %475, %476 : vector<8x128xf32>
    %478 = arith.negf %477 : vector<8x128xf32>
    %479 = math.exp %478 : vector<8x128xf32>
    %cst_129 = arith.constant 1.000000e+00 : f32
    %480 = vector.broadcast %cst_129 : f32 to vector<8x128xf32>
    %481 = arith.addf %480, %479 : vector<8x128xf32>
    %482 = arith.divf %480, %481 : vector<8x128xf32>
    %483 = vector.extract_strided_slice %472 {offsets = [0, 128], sizes = [8, 128], strides = [1, 1]} : vector<8x384xf32> to vector<8x128xf32>
    %484 = vector.extract_strided_slice %474 {offsets = [0, 128], sizes = [8, 128], strides = [1, 1]} : vector<8x384xf32> to vector<8x128xf32>
    %485 = arith.addf %483, %484 : vector<8x128xf32>
    %486 = arith.negf %485 : vector<8x128xf32>
    %487 = math.exp %486 : vector<8x128xf32>
    %cst_130 = arith.constant 1.000000e+00 : f32
    %488 = vector.broadcast %cst_130 : f32 to vector<8x128xf32>
    %489 = arith.addf %488, %487 : vector<8x128xf32>
    %490 = arith.divf %488, %489 : vector<8x128xf32>
    %491 = vector.extract_strided_slice %472 {offsets = [0, 256], sizes = [8, 128], strides = [1, 1]} : vector<8x384xf32> to vector<8x128xf32>
    %492 = vector.extract_strided_slice %474 {offsets = [0, 256], sizes = [8, 128], strides = [1, 1]} : vector<8x384xf32> to vector<8x128xf32>
    %493 = arith.mulf %482, %492 : vector<8x128xf32>
    %494 = arith.addf %491, %493 : vector<8x128xf32>
    %495 = math.tanh %494 : vector<8x128xf32>
    %cst_131 = arith.constant 1.000000e+00 : f32
    %496 = vector.broadcast %cst_131 : f32 to vector<8x128xf32>
    %497 = arith.subf %496, %490 : vector<8x128xf32>
    %498 = arith.mulf %497, %495 : vector<8x128xf32>
    %499 = arith.mulf %490, %466 : vector<8x128xf32>
    %500 = arith.addf %498, %499 : vector<8x128xf32>
    %501 = arith.index_cast %470 : i32 to index
    %c0_132 = arith.constant 0 : index
    %502 = vector.load %arg16[%501, %c0_132] : memref<64x128xf32, #tpu.memory_space<vmem>>, vector<8x128xf32>
    tpu.vector_store %arg16[%501, %c0_132], %500 {strides = array<i32>} : memref<64x128xf32, #tpu.memory_space<vmem>>, vector<8x128xf32>,
    %c6_i32_133 = arith.constant 6 : i32
    %c8_i32_134 = arith.constant 8 : i32
    %503 = arith.muli %c6_i32_133, %c8_i32_134 : i32
    %504 = tpu.assume_multiple %503, 8 : i32
    %505 = arith.index_cast %504 : i32 to index
    %c0_135 = arith.constant 0 : index
    %506 = vector.load %arg15[%505, %c0_135] : memref<64x384xf32, #tpu.memory_space<vmem>>, vector<8x384xf32>
    %cst_136 = arith.constant dense<0.000000e+00> : vector<8x384xf32>
    %507 = tpu.matmul %500, %294, %cst_136 {dimension_numbers = #tpu.dot_dimension_numbers<[1], [0], [0], [1], [0, 0, 1, 1], [], []>} : vector<8x128xf32>, vector<128x384xf32>, vector<8x384xf32> -> vector<8x384xf32>
    %508 = arith.addf %507, %297 : vector<8x384xf32>
    %509 = vector.extract_strided_slice %506 {offsets = [0, 0], sizes = [8, 128], strides = [1, 1]} : vector<8x384xf32> to vector<8x128xf32>
    %510 = vector.extract_strided_slice %508 {offsets = [0, 0], sizes = [8, 128], strides = [1, 1]} : vector<8x384xf32> to vector<8x128xf32>
    %511 = arith.addf %509, %510 : vector<8x128xf32>
    %512 = arith.negf %511 : vector<8x128xf32>
    %513 = math.exp %512 : vector<8x128xf32>
    %cst_137 = arith.constant 1.000000e+00 : f32
    %514 = vector.broadcast %cst_137 : f32 to vector<8x128xf32>
    %515 = arith.addf %514, %513 : vector<8x128xf32>
    %516 = arith.divf %514, %515 : vector<8x128xf32>
    %517 = vector.extract_strided_slice %506 {offsets = [0, 128], sizes = [8, 128], strides = [1, 1]} : vector<8x384xf32> to vector<8x128xf32>
    %518 = vector.extract_strided_slice %508 {offsets = [0, 128], sizes = [8, 128], strides = [1, 1]} : vector<8x384xf32> to vector<8x128xf32>
    %519 = arith.addf %517, %518 : vector<8x128xf32>
    %520 = arith.negf %519 : vector<8x128xf32>
    %521 = math.exp %520 : vector<8x128xf32>
    %cst_138 = arith.constant 1.000000e+00 : f32
    %522 = vector.broadcast %cst_138 : f32 to vector<8x128xf32>
    %523 = arith.addf %522, %521 : vector<8x128xf32>
    %524 = arith.divf %522, %523 : vector<8x128xf32>
    %525 = vector.extract_strided_slice %506 {offsets = [0, 256], sizes = [8, 128], strides = [1, 1]} : vector<8x384xf32> to vector<8x128xf32>
    %526 = vector.extract_strided_slice %508 {offsets = [0, 256], sizes = [8, 128], strides = [1, 1]} : vector<8x384xf32> to vector<8x128xf32>
    %527 = arith.mulf %516, %526 : vector<8x128xf32>
    %528 = arith.addf %525, %527 : vector<8x128xf32>
    %529 = math.tanh %528 : vector<8x128xf32>
    %cst_139 = arith.constant 1.000000e+00 : f32
    %530 = vector.broadcast %cst_139 : f32 to vector<8x128xf32>
    %531 = arith.subf %530, %524 : vector<8x128xf32>
    %532 = arith.mulf %531, %529 : vector<8x128xf32>
    %533 = arith.mulf %524, %500 : vector<8x128xf32>
    %534 = arith.addf %532, %533 : vector<8x128xf32>
    %535 = arith.index_cast %504 : i32 to index
    %c0_140 = arith.constant 0 : index
    %536 = vector.load %arg16[%535, %c0_140] : memref<64x128xf32, #tpu.memory_space<vmem>>, vector<8x128xf32>
    tpu.vector_store %arg16[%535, %c0_140], %534 {strides = array<i32>} : memref<64x128xf32, #tpu.memory_space<vmem>>, vector<8x128xf32>,
    %c7_i32_141 = arith.constant 7 : i32
    %c8_i32_142 = arith.constant 8 : i32
    %537 = arith.muli %c7_i32_141, %c8_i32_142 : i32
    %538 = tpu.assume_multiple %537, 8 : i32
    %539 = arith.index_cast %538 : i32 to index
    %c0_143 = arith.constant 0 : index
    %540 = vector.load %arg15[%539, %c0_143] : memref<64x384xf32, #tpu.memory_space<vmem>>, vector<8x384xf32>
    %cst_144 = arith.constant dense<0.000000e+00> : vector<8x384xf32>
    %541 = tpu.matmul %534, %294, %cst_144 {dimension_numbers = #tpu.dot_dimension_numbers<[1], [0], [0], [1], [0, 0, 1, 1], [], []>} : vector<8x128xf32>, vector<128x384xf32>, vector<8x384xf32> -> vector<8x384xf32>
    %542 = arith.addf %541, %297 : vector<8x384xf32>
    %543 = vector.extract_strided_slice %540 {offsets = [0, 0], sizes = [8, 128], strides = [1, 1]} : vector<8x384xf32> to vector<8x128xf32>
    %544 = vector.extract_strided_slice %542 {offsets = [0, 0], sizes = [8, 128], strides = [1, 1]} : vector<8x384xf32> to vector<8x128xf32>
    %545 = arith.addf %543, %544 : vector<8x128xf32>
    %546 = arith.negf %545 : vector<8x128xf32>
    %547 = math.exp %546 : vector<8x128xf32>
    %cst_145 = arith.constant 1.000000e+00 : f32
    %548 = vector.broadcast %cst_145 : f32 to vector<8x128xf32>
    %549 = arith.addf %548, %547 : vector<8x128xf32>
    %550 = arith.divf %548, %549 : vector<8x128xf32>
    %551 = vector.extract_strided_slice %540 {offsets = [0, 128], sizes = [8, 128], strides = [1, 1]} : vector<8x384xf32> to vector<8x128xf32>
    %552 = vector.extract_strided_slice %542 {offsets = [0, 128], sizes = [8, 128], strides = [1, 1]} : vector<8x384xf32> to vector<8x128xf32>
    %553 = arith.addf %551, %552 : vector<8x128xf32>
    %554 = arith.negf %553 : vector<8x128xf32>
    %555 = math.exp %554 : vector<8x128xf32>
    %cst_146 = arith.constant 1.000000e+00 : f32
    %556 = vector.broadcast %cst_146 : f32 to vector<8x128xf32>
    %557 = arith.addf %556, %555 : vector<8x128xf32>
    %558 = arith.divf %556, %557 : vector<8x128xf32>
    %559 = vector.extract_strided_slice %540 {offsets = [0, 256], sizes = [8, 128], strides = [1, 1]} : vector<8x384xf32> to vector<8x128xf32>
    %560 = vector.extract_strided_slice %542 {offsets = [0, 256], sizes = [8, 128], strides = [1, 1]} : vector<8x384xf32> to vector<8x128xf32>
    %561 = arith.mulf %550, %560 : vector<8x128xf32>
    %562 = arith.addf %559, %561 : vector<8x128xf32>
    %563 = math.tanh %562 : vector<8x128xf32>
    %cst_147 = arith.constant 1.000000e+00 : f32
    %564 = vector.broadcast %cst_147 : f32 to vector<8x128xf32>
    %565 = arith.subf %564, %558 : vector<8x128xf32>
    %566 = arith.mulf %565, %563 : vector<8x128xf32>
    %567 = arith.mulf %558, %534 : vector<8x128xf32>
    %568 = arith.addf %566, %567 : vector<8x128xf32>
    %569 = arith.index_cast %538 : i32 to index
    %c0_148 = arith.constant 0 : index
    %570 = vector.load %arg16[%569, %c0_148] : memref<64x128xf32, #tpu.memory_space<vmem>>, vector<8x128xf32>
    tpu.vector_store %arg16[%569, %c0_148], %568 {strides = array<i32>} : memref<64x128xf32, #tpu.memory_space<vmem>>, vector<8x128xf32>,
    %c8_i32_149 = arith.constant 8 : i32
    %c1 = arith.constant 1 : index
    %c0_150 = arith.constant 0 : index
    %c0_151 = arith.constant 0 : index
    %571 = vector.load %arg14[%c1, %c0_150, %c0_151] : memref<2x8x128xf32, #tpu.memory_space<vmem>>, vector<1x8x128xf32>
    %572 = vector.shape_cast %571 : vector<1x8x128xf32> to vector<8x128xf32>
    %573 = vector.shape_cast %568 : vector<8x128xf32> to vector<1x8x128xf32>
    tpu.vector_store %arg14[%c1, %c0_150, %c0_151], %573 {strides = array<i32>} : memref<2x8x128xf32, #tpu.memory_space<vmem>>, vector<1x8x128xf32>,
    %c0_152 = arith.constant 0 : index
    %c0_153 = arith.constant 0 : index
    %574 = vector.load %arg16[%c0_152, %c0_153] : memref<64x128xf32, #tpu.memory_space<vmem>>, vector<64x128xf32>
    %c0_154 = arith.constant 0 : index
    %c0_155 = arith.constant 0 : index
    %575 = vector.load %arg9[%c0_154, %c0_155] : memref<128x128xf32, #tpu.memory_space<vmem>>, vector<128x128xf32>
    %cst_156 = arith.constant dense<0.000000e+00> : vector<64x128xf32>
    %576 = tpu.matmul %574, %575, %cst_156 {dimension_numbers = #tpu.dot_dimension_numbers<[1], [0], [0], [1], [0, 0, 1, 1], [], []>} : vector<64x128xf32>, vector<128x128xf32>, vector<64x128xf32> -> vector<64x128xf32>
    %c0_157 = arith.constant 0 : index
    %c0_158 = arith.constant 0 : index
    %577 = vector.load %arg10[%c0_157, %c0_158] : memref<1x128xf32, #tpu.memory_space<vmem>>, vector<1x128xf32>
    %578 = vector.broadcast %577 : vector<1x128xf32> to vector<64x128xf32>
    %579 = arith.addf %576, %578 : vector<64x128xf32>
    %cst_159 = arith.constant 0.000000e+00 : f32
    %580 = vector.broadcast %cst_159 : f32 to vector<64x128xf32>
    %581 = arith.maximumf %579, %580 : vector<64x128xf32>
    %c0_160 = arith.constant 0 : index
    %c0_161 = arith.constant 0 : index
    %582 = vector.load %arg11[%c0_160, %c0_161] : memref<128x128xf32, #tpu.memory_space<vmem>>, vector<128x128xf32>
    %cst_162 = arith.constant dense<0.000000e+00> : vector<64x128xf32>
    %583 = tpu.matmul %581, %582, %cst_162 {dimension_numbers = #tpu.dot_dimension_numbers<[1], [0], [0], [1], [0, 0, 1, 1], [], []>} : vector<64x128xf32>, vector<128x128xf32>, vector<64x128xf32> -> vector<64x128xf32>
    %c0_163 = arith.constant 0 : index
    %c0_164 = arith.constant 0 : index
    %584 = vector.load %arg12[%c0_163, %c0_164] : memref<1x128xf32, #tpu.memory_space<vmem>>, vector<1x128xf32>
    %585 = vector.broadcast %584 : vector<1x128xf32> to vector<64x128xf32>
    %586 = arith.addf %583, %585 : vector<64x128xf32>
    %c0_165 = arith.constant 0 : index
    %c0_166 = arith.constant 0 : index
    %587 = vector.load %arg13[%c0_165, %c0_166] : memref<64x128xf32, #tpu.memory_space<vmem>>, vector<64x128xf32>
    tpu.vector_store %arg13[%c0_165, %c0_166], %586 {strides = array<i32>} : memref<64x128xf32, #tpu.memory_space<vmem>>, vector<64x128xf32>,
    return
  }
}

</mosaic_0001>

<llo_original>
// kernel: seq2seq_encoder_forward.1
$region0: #{seq2seq_encoder_forward.1}
  #allocation0 [shape = 'u32[]', space=smem, size = 0x4, offset = 0x4, fixed_abs, tag = 'smem constant byte address 0x4 - core index']
  #allocation1 [shape = 'u32[72,128]{1,0:T(1,128)}', space=vmem, size = 0x9000, scoped, tag = 'internal scratch']
  #allocation2 [shape = 'f32[64,384]{1,0:T(8,128)}', space=vmem, size = 0x18000, scoped, tag = 'scratch operand']
  #allocation3 [shape = 'f32[64,128]{1,0:T(8,128)}', space=vmem, size = 0x8000, scoped, tag = 'scratch operand']
  %s0 = inlined_call_operand.vmem [shape: f32[64,128], index: 0, kind: input, shape index: {}]
  %s1 = inlined_call_operand.vmem [shape: f32[128,384], index: 1, kind: input, shape index: {}]
  %s2 = inlined_call_operand.vmem [shape: f32[1,384], index: 2, kind: input, shape index: {}]
  %s3 = inlined_call_operand.vmem [shape: f32[128,384], index: 3, kind: input, shape index: {}]
  %s4 = inlined_call_operand.vmem [shape: f32[1,384], index: 4, kind: input, shape index: {}]
  %s5 = inlined_call_operand.vmem [shape: f32[128,384], index: 5, kind: input, shape index: {}]
  %s6 = inlined_call_operand.vmem [shape: f32[1,384], index: 6, kind: input, shape index: {}]
  %s7 = inlined_call_operand.vmem [shape: f32[128,384], index: 7, kind: input, shape index: {}]
  %s8 = inlined_call_operand.vmem [shape: f32[1,384], index: 8, kind: input, shape index: {}]
  %s9 = inlined_call_operand.vmem [shape: f32[128,128], index: 9, kind: input, shape index: {}]
  %s10 = inlined_call_operand.vmem [shape: f32[1,128], index: 10, kind: input, shape index: {}]
  %s11 = inlined_call_operand.vmem [shape: f32[128,128], index: 11, kind: input, shape index: {}]
  %s12 = inlined_call_operand.vmem [shape: f32[1,128], index: 12, kind: input, shape index: {}]
  %s13 = inlined_call_operand.vmem [shape: f32[64,128], index: 13, kind: output, shape index: {0}]
  %s14 = inlined_call_operand.vmem [shape: f32[2,8,128], index: 14, kind: output, shape index: {1}]
  %15 = xla_tuple %s13, %s14
  %s16 = sld [smem:[#allocation0]]
  $region70: #{seq2seq_encoder_forward.1} parent=0
    _
  %s18 = ssub.s32 1, %s16
  %s19 = scalar_select 0, %s18, %s16
  // Predicated region
  $region2: #{seq2seq_encoder_forward.1} parent=0 // pred_check
    _
  $region3: #{seq2seq_encoder_forward.1} parent=0 // pred_check_branch
    %21 = sbr.rel (0) target = $region5
  $region4: #{seq2seq_encoder_forward.1} parent=0 // pred_region
    _
  $region5: #{seq2seq_encoder_forward.1} parent=0 // pred_fallthru
    _
  // Predicated region
  $region6: #{seq2seq_encoder_forward.1} parent=0 // pred_check
    _
  $region7: #{seq2seq_encoder_forward.1} parent=0 // pred_check_branch
    %23 = sbr.rel (0) target = $region9
  $region8: #{seq2seq_encoder_forward.1} parent=0 // pred_region
    _
  $region9: #{seq2seq_encoder_forward.1} parent=0 // pred_fallthru
    _
  // Predicated region
  $region10: #{seq2seq_encoder_forward.1} parent=0 // pred_check
    _
  $region11: #{seq2seq_encoder_forward.1} parent=0 // pred_check_branch
    %25 = sbr.rel (0) target = $region13
  $region12: #{seq2seq_encoder_forward.1} parent=0 // pred_region
    _
  $region13: #{seq2seq_encoder_forward.1} parent=0 // pred_fallthru
    _
  // Predicated region
  $region14: #{seq2seq_encoder_forward.1} parent=0 // pred_check
    _
  $region15: #{seq2seq_encoder_forward.1} parent=0 // pred_check_branch
    %27 = sbr.rel (0) target = $region17
  $region16: #{seq2seq_encoder_forward.1} parent=0 // pred_region
    _
  $region17: #{seq2seq_encoder_forward.1} parent=0 // pred_fallthru
    _
  // Predicated region
  $region18: #{seq2seq_encoder_forward.1} parent=0 // pred_check
    _
  $region19: #{seq2seq_encoder_forward.1} parent=0 // pred_check_branch
    %29 = sbr.rel (0) target = $region21
  $region20: #{seq2seq_encoder_forward.1} parent=0 // pred_region
    _
  $region21: #{seq2seq_encoder_forward.1} parent=0 // pred_fallthru
    _
  // Predicated region
  $region22: #{seq2seq_encoder_forward.1} parent=0 // pred_check
    _
  $region23: #{seq2seq_encoder_forward.1} parent=0 // pred_check_branch
    %31 = sbr.rel (0) target = $region25
  $region24: #{seq2seq_encoder_forward.1} parent=0 // pred_region
    _
  $region25: #{seq2seq_encoder_forward.1} parent=0 // pred_fallthru
    _
  // Predicated region
  $region26: #{seq2seq_encoder_forward.1} parent=0 // pred_check
    _
  $region27: #{seq2seq_encoder_forward.1} parent=0 // pred_check_branch
    %33 = sbr.rel (0) target = $region29
  $region28: #{seq2seq_encoder_forward.1} parent=0 // pred_region
    _
  $region29: #{seq2seq_encoder_forward.1} parent=0 // pred_fallthru
    _
  // Predicated region
  $region30: #{seq2seq_encoder_forward.1} parent=0 // pred_check
    _
  $region31: #{seq2seq_encoder_forward.1} parent=0 // pred_check_branch
    %35 = sbr.rel (0) target = $region33
  $region32: #{seq2seq_encoder_forward.1} parent=0 // pred_region
    _
  $region33: #{seq2seq_encoder_forward.1} parent=0 // pred_fallthru
    _
  // Predicated region
  $region34: #{seq2seq_encoder_forward.1} parent=0 // pred_check
    _
  $region35: #{seq2seq_encoder_forward.1} parent=0 // pred_check_branch
    %37 = sbr.rel (0) target = $region37
  $region36: #{seq2seq_encoder_forward.1} parent=0 // pred_region
    _
  $region37: #{seq2seq_encoder_forward.1} parent=0 // pred_fallthru
    _
  // Predicated region
  $region38: #{seq2seq_encoder_forward.1} parent=0 // pred_check
    _
  $region39: #{seq2seq_encoder_forward.1} parent=0 // pred_check_branch
    %39 = sbr.rel (0) target = $region41
  $region40: #{seq2seq_encoder_forward.1} parent=0 // pred_region
    _
  $region41: #{seq2seq_encoder_forward.1} parent=0 // pred_fallthru
    _
  // Predicated region
  $region42: #{seq2seq_encoder_forward.1} parent=0 // pred_check
    _
  $region43: #{seq2seq_encoder_forward.1} parent=0 // pred_check_branch
    %41 = sbr.rel (0) target = $region45
  $region44: #{seq2seq_encoder_forward.1} parent=0 // pred_region
    _
  $region45: #{seq2seq_encoder_forward.1} parent=0 // pred_fallthru
    _
  // Predicated region
  $region46: #{seq2seq_encoder_forward.1} parent=0 // pred_check
    _
  $region47: #{seq2seq_encoder_forward.1} parent=0 // pred_check_branch
    %43 = sbr.rel (0) target = $region49
  $region48: #{seq2seq_encoder_forward.1} parent=0 // pred_region
    _
  $region49: #{seq2seq_encoder_forward.1} parent=0 // pred_fallthru
    _
  // Predicated region
  $region50: #{seq2seq_encoder_forward.1} parent=0 // pred_check
    _
  $region51: #{seq2seq_encoder_forward.1} parent=0 // pred_check_branch
    %45 = sbr.rel (0) target = $region53
  $region52: #{seq2seq_encoder_forward.1} parent=0 // pred_region
    _
  $region53: #{seq2seq_encoder_forward.1} parent=0 // pred_fallthru
    _
  %v46 = vld [vmem:[%s0] sm:$0xff]
  %v47 = vld [vmem:[%s0 + $0x8] sm:$0xff]
  %v48 = vld [vmem:[%s0 + $0x10] sm:$0xff]
  %v49 = vld [vmem:[%s0 + $0x18] sm:$0xff]
  %v50 = vld [vmem:[%s0 + $0x20] sm:$0xff]
  %v51 = vld [vmem:[%s0 + $0x28] sm:$0xff]
  %v52 = vld [vmem:[%s0 + $0x30] sm:$0xff]
  %v53 = vld [vmem:[%s0 + $0x38] sm:$0xff]
  %v54 = vld [vmem:[%s1] sm:$0xff]
  %v55 = vld [vmem:[%s1 + $0x8] sm:$0xff]
  %v56 = vld [vmem:[%s1 + $0x10] sm:$0xff]
  %v57 = vld [vmem:[%s1 + $0x18] sm:$0xff]
  %v58 = vld [vmem:[%s1 + $0x20] sm:$0xff]
  %v59 = vld [vmem:[%s1 + $0x28] sm:$0xff]
  %v60 = vld [vmem:[%s1 + $0x30] sm:$0xff]
  %v61 = vld [vmem:[%s1 + $0x38] sm:$0xff]
  %v62 = vld [vmem:[%s1 + $0x40] sm:$0xff]
  %v63 = vld [vmem:[%s1 + $0x48] sm:$0xff]
  %v64 = vld [vmem:[%s1 + $0x50] sm:$0xff]
  %v65 = vld [vmem:[%s1 + $0x58] sm:$0xff]
  %v66 = vld [vmem:[%s1 + $0x60] sm:$0xff]
  %v67 = vld [vmem:[%s1 + $0x68] sm:$0xff]
  %v68 = vld [vmem:[%s1 + $0x70] sm:$0xff]
  %v69 = vld [vmem:[%s1 + $0x78] sm:$0xff]
  %v70 = vld [vmem:[%s1 + $0x80] sm:$0xff]
  %v71 = vld [vmem:[%s1 + $0x88] sm:$0xff]
  %v72 = vld [vmem:[%s1 + $0x90] sm:$0xff]
  %v73 = vld [vmem:[%s1 + $0x98] sm:$0xff]
  %v74 = vld [vmem:[%s1 + $0xa0] sm:$0xff]
  %v75 = vld [vmem:[%s1 + $0xa8] sm:$0xff]
  %v76 = vld [vmem:[%s1 + $0xb0] sm:$0xff]
  %v77 = vld [vmem:[%s1 + $0xb8] sm:$0xff]
  %v78 = vld [vmem:[%s1 + $0xc0] sm:$0xff]
  %v79 = vld [vmem:[%s1 + $0xc8] sm:$0xff]
  %v80 = vld [vmem:[%s1 + $0xd0] sm:$0xff]
  %v81 = vld [vmem:[%s1 + $0xd8] sm:$0xff]
  %v82 = vld [vmem:[%s1 + $0xe0] sm:$0xff]
  %v83 = vld [vmem:[%s1 + $0xe8] sm:$0xff]
  %v84 = vld [vmem:[%s1 + $0xf0] sm:$0xff]
  %v85 = vld [vmem:[%s1 + $0xf8] sm:$0xff]
  %v86 = vld [vmem:[%s1 + $0x100] sm:$0xff]
  %v87 = vld [vmem:[%s1 + $0x108] sm:$0xff]
  %v88 = vld [vmem:[%s1 + $0x110] sm:$0xff]
  %v89 = vld [vmem:[%s1 + $0x118] sm:$0xff]
  %v90 = vld [vmem:[%s1 + $0x120] sm:$0xff]
  %v91 = vld [vmem:[%s1 + $0x128] sm:$0xff]
  %v92 = vld [vmem:[%s1 + $0x130] sm:$0xff]
  %v93 = vld [vmem:[%s1 + $0x138] sm:$0xff]
  %v94 = vld [vmem:[%s1 + $0x140] sm:$0xff]
  %v95 = vld [vmem:[%s1 + $0x148] sm:$0xff]
  %v96 = vld [vmem:[%s1 + $0x150] sm:$0xff]
  %v97 = vld [vmem:[%s1 + $0x158] sm:$0xff]
  %v98 = vld [vmem:[%s1 + $0x160] sm:$0xff]
  %v99 = vld [vmem:[%s1 + $0x168] sm:$0xff]
  %v100 = vld [vmem:[%s1 + $0x170] sm:$0xff]
  %v101 = vld [vmem:[%s1 + $0x178] sm:$0xff]
  %v102 = vld [vmem:[%s2] sm:$0x7]
  %v104 = vperm.slane %v102, 0
  %v105 = vperm.slane %v102, 1
  %v106 = vperm.slane %v102, 2
  %110 = vmatpush.msra.mxu0 %v99
  %111 = vmatpush.msra.mxu0 %v96
  %112 = vmatpush.msra.mxu0 %v93
  %113 = vmatpush.msra.mxu0 %v90
  %114 = vmatpush.msra.mxu0 %v87
  %115 = vmatpush.msra.mxu0 %v84
  %116 = vmatpush.msra.mxu0 %v81
  %117 = vmatpush.msra.mxu0 %v78
  %118 = vmatpush.msra.mxu0 %v75
  %119 = vmatpush.msra.mxu0 %v72
  %120 = vmatpush.msra.mxu0 %v69
  %121 = vmatpush.msra.mxu0 %v66
  %122 = vmatpush.msra.mxu0 %v63
  %123 = vmatpush.msra.mxu0 %v60
  %124 = vmatpush.msra.mxu0 %v57
  %125 = vmatpush.msra.mxu0 %v54
  %126 = vmatmul.f32.gmra.mxu0 %v46
  %v127 = vpop.f32.mrf.mxu0
  %v128 = vadd.f32 %v104, %v127
  %129 = vmatmul.f32.gmra.mxu0 %v47
  %v130 = vpop.f32.mrf.mxu0
  %v131 = vadd.f32 %v104, %v130
  %132 = vmatmul.f32.gmra.mxu0 %v48
  %v133 = vpop.f32.mrf.mxu0
  %v134 = vadd.f32 %v104, %v133
  %135 = vmatmul.f32.gmra.mxu0 %v49
  %v136 = vpop.f32.mrf.mxu0
  %v137 = vadd.f32 %v104, %v136
  %138 = vmatmul.f32.gmra.mxu0 %v50
  %v139 = vpop.f32.mrf.mxu0
  %v140 = vadd.f32 %v104, %v139
  %141 = vmatmul.f32.gmra.mxu0 %v51
  %v142 = vpop.f32.mrf.mxu0
  %v143 = vadd.f32 %v104, %v142
  %144 = vmatmul.f32.gmra.mxu0 %v52
  %v145 = vpop.f32.mrf.mxu0
  %v146 = vadd.f32 %v104, %v145
  %147 = vmatmul.f32.gmra.mxu0 %v53
  %v148 = vpop.f32.mrf.mxu0
  %v149 = vadd.f32 %v104, %v148
  %150 = vdwg.mxu0
  %151 = vmatpush.msra.mxu0 %v100
  %152 = vmatpush.msra.mxu0 %v97
  %153 = vmatpush.msra.mxu0 %v94
  %154 = vmatpush.msra.mxu0 %v91
  %155 = vmatpush.msra.mxu0 %v88
  %156 = vmatpush.msra.mxu0 %v85
  %157 = vmatpush.msra.mxu0 %v82
  %158 = vmatpush.msra.mxu0 %v79
  %159 = vmatpush.msra.mxu0 %v76
  %160 = vmatpush.msra.mxu0 %v73
  %161 = vmatpush.msra.mxu0 %v70
  %162 = vmatpush.msra.mxu0 %v67
  %163 = vmatpush.msra.mxu0 %v64
  %164 = vmatpush.msra.mxu0 %v61
  %165 = vmatpush.msra.mxu0 %v58
  %166 = vmatpush.msra.mxu0 %v55
  %167 = vmatmul.f32.gmra.mxu0 %v46
  %v168 = vpop.f32.mrf.mxu0
  %v169 = vadd.f32 %v105, %v168
  %170 = vmatmul.f32.gmra.mxu0 %v47
  %v171 = vpop.f32.mrf.mxu0
  %v172 = vadd.f32 %v105, %v171
  %173 = vmatmul.f32.gmra.mxu0 %v48
  %v174 = vpop.f32.mrf.mxu0
  %v175 = vadd.f32 %v105, %v174
  %176 = vmatmul.f32.gmra.mxu0 %v49
  %v177 = vpop.f32.mrf.mxu0
  %v178 = vadd.f32 %v105, %v177
  %179 = vmatmul.f32.gmra.mxu0 %v50
  %v180 = vpop.f32.mrf.mxu0
  %v181 = vadd.f32 %v105, %v180
  %182 = vmatmul.f32.gmra.mxu0 %v51
  %v183 = vpop.f32.mrf.mxu0
  %v184 = vadd.f32 %v105, %v183
  %185 = vmatmul.f32.gmra.mxu0 %v52
  %v186 = vpop.f32.mrf.mxu0
  %v187 = vadd.f32 %v105, %v186
  %188 = vmatmul.f32.gmra.mxu0 %v53
  %v189 = vpop.f32.mrf.mxu0
  %v190 = vadd.f32 %v105, %v189
  %191 = vdwg.mxu0
  %192 = vmatpush.msra.mxu0 %v101
  %193 = vmatpush.msra.mxu0 %v98
  %194 = vmatpush.msra.mxu0 %v95
  %195 = vmatpush.msra.mxu0 %v92
  %196 = vmatpush.msra.mxu0 %v89
  %197 = vmatpush.msra.mxu0 %v86
  %198 = vmatpush.msra.mxu0 %v83
  %199 = vmatpush.msra.mxu0 %v80
  %200 = vmatpush.msra.mxu0 %v77
  %201 = vmatpush.msra.mxu0 %v74
  %202 = vmatpush.msra.mxu0 %v71
  %203 = vmatpush.msra.mxu0 %v68
  %204 = vmatpush.msra.mxu0 %v65
  %205 = vmatpush.msra.mxu0 %v62
  %206 = vmatpush.msra.mxu0 %v59
  %207 = vmatpush.msra.mxu0 %v56
  %208 = vmatmul.f32.gmra.mxu0 %v46
  %v209 = vpop.f32.mrf.mxu0
  %v210 = vadd.f32 %v106, %v209
  %211 = vmatmul.f32.gmra.mxu0 %v47
  %v212 = vpop.f32.mrf.mxu0
  %v213 = vadd.f32 %v106, %v212
  %214 = vmatmul.f32.gmra.mxu0 %v48
  %v215 = vpop.f32.mrf.mxu0
  %v216 = vadd.f32 %v106, %v215
  %217 = vmatmul.f32.gmra.mxu0 %v49
  %v218 = vpop.f32.mrf.mxu0
  %v219 = vadd.f32 %v106, %v218
  %220 = vmatmul.f32.gmra.mxu0 %v50
  %v221 = vpop.f32.mrf.mxu0
  %v222 = vadd.f32 %v106, %v221
  %223 = vmatmul.f32.gmra.mxu0 %v51
  %v224 = vpop.f32.mrf.mxu0
  %v225 = vadd.f32 %v106, %v224
  %226 = vmatmul.f32.gmra.mxu0 %v52
  %v227 = vpop.f32.mrf.mxu0
  %v228 = vadd.f32 %v106, %v227
  %229 = vmatmul.f32.gmra.mxu0 %v53
  %v230 = vpop.f32.mrf.mxu0
  %v231 = vadd.f32 %v106, %v230
  %232 = vdwg.mxu0
  %233 = vst [vmem:[#allocation2] sm:$0xff] %v128
  %234 = vst [vmem:[#allocation2 + $0x8] sm:$0xff] %v169
  %235 = vst [vmem:[#allocation2 + $0x10] sm:$0xff] %v210
  %236 = vst [vmem:[#allocation2 + $0x18] sm:$0xff] %v131
  %237 = vst [vmem:[#allocation2 + $0x20] sm:$0xff] %v172
  %238 = vst [vmem:[#allocation2 + $0x28] sm:$0xff] %v213
  %239 = vst [vmem:[#allocation2 + $0x30] sm:$0xff] %v134
  %240 = vst [vmem:[#allocation2 + $0x38] sm:$0xff] %v175
  %241 = vst [vmem:[#allocation2 + $0x40] sm:$0xff] %v216
  %242 = vst [vmem:[#allocation2 + $0x48] sm:$0xff] %v137
  %243 = vst [vmem:[#allocation2 + $0x50] sm:$0xff] %v178
  %244 = vst [vmem:[#allocation2 + $0x58] sm:$0xff] %v219
  %245 = vst [vmem:[#allocation2 + $0x60] sm:$0xff] %v140
  %246 = vst [vmem:[#allocation2 + $0x68] sm:$0xff] %v181
  %247 = vst [vmem:[#allocation2 + $0x70] sm:$0xff] %v222
  %248 = vst [vmem:[#allocation2 + $0x78] sm:$0xff] %v143
  %249 = vst [vmem:[#allocation2 + $0x80] sm:$0xff] %v184
  %250 = vst [vmem:[#allocation2 + $0x88] sm:$0xff] %v225
  %251 = vst [vmem:[#allocation2 + $0x90] sm:$0xff] %v146
  %252 = vst [vmem:[#allocation2 + $0x98] sm:$0xff] %v187
  %253 = vst [vmem:[#allocation2 + $0xa0] sm:$0xff] %v228
  %254 = vst [vmem:[#allocation2 + $0xa8] sm:$0xff] %v149
  %255 = vst [vmem:[#allocation2 + $0xb0] sm:$0xff] %v190
  %256 = vst [vmem:[#allocation2 + $0xb8] sm:$0xff] %v231
  %v257 = vld [vmem:[%s3] sm:$0xff]
  %v258 = vld [vmem:[%s3 + $0x8] sm:$0xff]
  %v259 = vld [vmem:[%s3 + $0x10] sm:$0xff]
  %v260 = vld [vmem:[%s3 + $0x18] sm:$0xff]
  %v261 = vld [vmem:[%s3 + $0x20] sm:$0xff]
  %v262 = vld [vmem:[%s3 + $0x28] sm:$0xff]
  %v263 = vld [vmem:[%s3 + $0x30] sm:$0xff]
  %v264 = vld [vmem:[%s3 + $0x38] sm:$0xff]
  %v265 = vld [vmem:[%s3 + $0x40] sm:$0xff]
  %v266 = vld [vmem:[%s3 + $0x48] sm:$0xff]
  %v267 = vld [vmem:[%s3 + $0x50] sm:$0xff]
  %v268 = vld [vmem:[%s3 + $0x58] sm:$0xff]
  %v269 = vld [vmem:[%s3 + $0x60] sm:$0xff]
  %v270 = vld [vmem:[%s3 + $0x68] sm:$0xff]
  %v271 = vld [vmem:[%s3 + $0x70] sm:$0xff]
  %v272 = vld [vmem:[%s3 + $0x78] sm:$0xff]
  %v273 = vld [vmem:[%s3 + $0x80] sm:$0xff]
  %v274 = vld [vmem:[%s3 + $0x88] sm:$0xff]
  %v275 = vld [vmem:[%s3 + $0x90] sm:$0xff]
  %v276 = vld [vmem:[%s3 + $0x98] sm:$0xff]
  %v277 = vld [vmem:[%s3 + $0xa0] sm:$0xff]
  %v278 = vld [vmem:[%s3 + $0xa8] sm:$0xff]
  %v279 = vld [vmem:[%s3 + $0xb0] sm:$0xff]
  %v280 = vld [vmem:[%s3 + $0xb8] sm:$0xff]
  %v281 = vld [vmem:[%s3 + $0xc0] sm:$0xff]
  %v282 = vld [vmem:[%s3 + $0xc8] sm:$0xff]
  %v283 = vld [vmem:[%s3 + $0xd0] sm:$0xff]
  %v284 = vld [vmem:[%s3 + $0xd8] sm:$0xff]
  %v285 = vld [vmem:[%s3 + $0xe0] sm:$0xff]
  %v286 = vld [vmem:[%s3 + $0xe8] sm:$0xff]
  %v287 = vld [vmem:[%s3 + $0xf0] sm:$0xff]
  %v288 = vld [vmem:[%s3 + $0xf8] sm:$0xff]
  %v289 = vld [vmem:[%s3 + $0x100] sm:$0xff]
  %v290 = vld [vmem:[%s3 + $0x108] sm:$0xff]
  %v291 = vld [vmem:[%s3 + $0x110] sm:$0xff]
  %v292 = vld [vmem:[%s3 + $0x118] sm:$0xff]
  %v293 = vld [vmem:[%s3 + $0x120] sm:$0xff]
  %v294 = vld [vmem:[%s3 + $0x128] sm:$0xff]
  %v295 = vld [vmem:[%s3 + $0x130] sm:$0xff]
  %v296 = vld [vmem:[%s3 + $0x138] sm:$0xff]
  %v297 = vld [vmem:[%s3 + $0x140] sm:$0xff]
  %v298 = vld [vmem:[%s3 + $0x148] sm:$0xff]
  %v299 = vld [vmem:[%s3 + $0x150] sm:$0xff]
  %v300 = vld [vmem:[%s3 + $0x158] sm:$0xff]
  %v301 = vld [vmem:[%s3 + $0x160] sm:$0xff]
  %v302 = vld [vmem:[%s3 + $0x168] sm:$0xff]
  %v303 = vld [vmem:[%s3 + $0x170] sm:$0xff]
  %v304 = vld [vmem:[%s3 + $0x178] sm:$0xff]
  %v305 = vld [vmem:[%s4] sm:$0x7]
  %v307 = vperm.slane %v305, 0
  %v308 = vperm.slane %v305, 1
  %v309 = vperm.slane %v305, 2
  %s313 = smul.u32 0, 3
  %s314 = smul.addr %s313, 8
  %s315 = scalar_lea.vmem [#allocation2], %s314
  %v316 = vld [vmem:[%s315] sm:$0xff]
  %v317 = vld [vmem:[%s315 + $0x8] sm:$0xff]
  %v318 = vld [vmem:[%s315 + $0x10] sm:$0xff]
  %319 = vmatpush.msra.mxu0 %v302
  %320 = vmatpush.msra.mxu0 %v299
  %321 = vmatpush.msra.mxu0 %v296
  %322 = vmatpush.msra.mxu0 %v293
  %323 = vmatpush.msra.mxu0 %v290
  %324 = vmatpush.msra.mxu0 %v287
  %325 = vmatpush.msra.mxu0 %v284
  %326 = vmatpush.msra.mxu0 %v281
  %327 = vmatpush.msra.mxu0 %v278
  %328 = vmatpush.msra.mxu0 %v275
  %329 = vmatpush.msra.mxu0 %v272
  %330 = vmatpush.msra.mxu0 %v269
  %331 = vmatpush.msra.mxu0 %v266
  %332 = vmatpush.msra.mxu0 %v263
  %333 = vmatpush.msra.mxu0 %v260
  %334 = vmatpush.msra.mxu0 %v257
  %335 = vmatmul.f32.gmra.mxu0 0.0
  %v336 = vpop.f32.mrf.mxu0
  %v337 = vadd.f32 %v307, %v336
  %338 = vdwg.mxu0
  %339 = vmatpush.msra.mxu0 %v303
  %340 = vmatpush.msra.mxu0 %v300
  %341 = vmatpush.msra.mxu0 %v297
  %342 = vmatpush.msra.mxu0 %v294
  %343 = vmatpush.msra.mxu0 %v291
  %344 = vmatpush.msra.mxu0 %v288
  %345 = vmatpush.msra.mxu0 %v285
  %346 = vmatpush.msra.mxu0 %v282
  %347 = vmatpush.msra.mxu0 %v279
  %348 = vmatpush.msra.mxu0 %v276
  %349 = vmatpush.msra.mxu0 %v273
  %350 = vmatpush.msra.mxu0 %v270
  %351 = vmatpush.msra.mxu0 %v267
  %352 = vmatpush.msra.mxu0 %v264
  %353 = vmatpush.msra.mxu0 %v261
  %354 = vmatpush.msra.mxu0 %v258
  %355 = vmatmul.f32.gmra.mxu0 0.0
  %v356 = vpop.f32.mrf.mxu0
  %v357 = vadd.f32 %v308, %v356
  %358 = vdwg.mxu0
  %359 = vmatpush.msra.mxu0 %v304
  %360 = vmatpush.msra.mxu0 %v301
  %361 = vmatpush.msra.mxu0 %v298
  %362 = vmatpush.msra.mxu0 %v295
  %363 = vmatpush.msra.mxu0 %v292
  %364 = vmatpush.msra.mxu0 %v289
  %365 = vmatpush.msra.mxu0 %v286
  %366 = vmatpush.msra.mxu0 %v283
  %367 = vmatpush.msra.mxu0 %v280
  %368 = vmatpush.msra.mxu0 %v277
  %369 = vmatpush.msra.mxu0 %v274
  %370 = vmatpush.msra.mxu0 %v271
  %371 = vmatpush.msra.mxu0 %v268
  %372 = vmatpush.msra.mxu0 %v265
  %373 = vmatpush.msra.mxu0 %v262
  %374 = vmatpush.msra.mxu0 %v259
  %375 = vmatmul.f32.gmra.mxu0 0.0
  %v376 = vpop.f32.mrf.mxu0
  %v377 = vadd.f32 %v309, %v376
  %378 = vdwg.mxu0
  %v379 = vadd.f32 %v316, %v337
  %v380 = vxor.u32 %v379, 2147483648
  %v381 = vmul.f32 %v380, 1.442695
  %v382 = vpow.pop %v381
  %v383 = vadd.f32 %v382, 1.0
  %v384 = vrcp.pop %v383
  %v385 = vmul.f32 %v383, %v384
  %v386 = vsub.f32 1.0, %v385
  %v387 = vmul.f32 %v384, %v386
  %v388 = vadd.f32 %v384, %v387
  %vm389 = vweird.f32 %v383
  %vm390 = vweird.f32 %v384
  %vm391 = vmor %vm389, %vm390
  %v392 = vsel %vm391, %v384, %v388
  %v393 = vand.u32 2147483647, %v383
  %vm394 = vcmp.eq.f32.partialorder %v393, 8.507059e+37
  %v395 = vand.u32 %v383, 2147483648
  %v396 = vor.u32 1.1754944e-38, %v395
  %v397 = vsel %vm394, %v396, %v392
  %v398 = vmul.f32 1.0, %v397
  %v399 = vadd.f32 %v317, %v357
  %v400 = vxor.u32 %v399, 2147483648
  %v401 = vmul.f32 %v400, 1.442695
  %v402 = vpow.pop %v401
  %v403 = vadd.f32 %v402, 1.0
  %v404 = vrcp.pop %v403
  %v405 = vmul.f32 %v403, %v404
  %v406 = vsub.f32 1.0, %v405
  %v407 = vmul.f32 %v404, %v406
  %v408 = vadd.f32 %v404, %v407
  %vm409 = vweird.f32 %v403
  %vm410 = vweird.f32 %v404
  %vm411 = vmor %vm409, %vm410
  %v412 = vsel %vm411, %v404, %v408
  %v413 = vand.u32 2147483647, %v403
  %vm414 = vcmp.eq.f32.partialorder %v413, 8.507059e+37
  %v415 = vand.u32 %v403, 2147483648
  %v416 = vor.u32 1.1754944e-38, %v415
  %v417 = vsel %vm414, %v416, %v412
  %v418 = vmul.f32 1.0, %v417
  %v419 = vmul.f32 %v398, %v377
  %v420 = vadd.f32 %v318, %v419
  %v421 = vtanh.pop %v420
  %v422 = vsub.f32 1.0, %v418
  %v423 = vmul.f32 %v422, %v421
  %v424 = vmul.f32 %v418, 0.0
  %v425 = vadd.f32 %v423, %v424
  %426 = vst [vmem:[#allocation3] sm:$0xff] %v425
  %s427 = smul.u32 1, 3
  %s428 = smul.addr %s427, 8
  %s429 = scalar_lea.vmem [#allocation2], %s428
  %v430 = vld [vmem:[%s429] sm:$0xff]
  %v431 = vld [vmem:[%s429 + $0x8] sm:$0xff]
  %v432 = vld [vmem:[%s429 + $0x10] sm:$0xff]
  %433 = vmatpush.msra.mxu0 %v302
  %434 = vmatpush.msra.mxu0 %v299
  %435 = vmatpush.msra.mxu0 %v296
  %436 = vmatpush.msra.mxu0 %v293
  %437 = vmatpush.msra.mxu0 %v290
  %438 = vmatpush.msra.mxu0 %v287
  %439 = vmatpush.msra.mxu0 %v284
  %440 = vmatpush.msra.mxu0 %v281
  %441 = vmatpush.msra.mxu0 %v278
  %442 = vmatpush.msra.mxu0 %v275
  %443 = vmatpush.msra.mxu0 %v272
  %444 = vmatpush.msra.mxu0 %v269
  %445 = vmatpush.msra.mxu0 %v266
  %446 = vmatpush.msra.mxu0 %v263
  %447 = vmatpush.msra.mxu0 %v260
  %448 = vmatpush.msra.mxu0 %v257
  %449 = vmatmul.f32.gmra.mxu0 %v425
  %v450 = vpop.f32.mrf.mxu0
  %v451 = vadd.f32 %v307, %v450
  %452 = vdwg.mxu0
  %453 = vmatpush.msra.mxu0 %v303
  %454 = vmatpush.msra.mxu0 %v300
  %455 = vmatpush.msra.mxu0 %v297
  %456 = vmatpush.msra.mxu0 %v294
  %457 = vmatpush.msra.mxu0 %v291
  %458 = vmatpush.msra.mxu0 %v288
  %459 = vmatpush.msra.mxu0 %v285
  %460 = vmatpush.msra.mxu0 %v282
  %461 = vmatpush.msra.mxu0 %v279
  %462 = vmatpush.msra.mxu0 %v276
  %463 = vmatpush.msra.mxu0 %v273
  %464 = vmatpush.msra.mxu0 %v270
  %465 = vmatpush.msra.mxu0 %v267
  %466 = vmatpush.msra.mxu0 %v264
  %467 = vmatpush.msra.mxu0 %v261
  %468 = vmatpush.msra.mxu0 %v258
  %469 = vmatmul.f32.gmra.mxu0 %v425
  %v470 = vpop.f32.mrf.mxu0
  %v471 = vadd.f32 %v308, %v470
  %472 = vdwg.mxu0
  %473 = vmatpush.msra.mxu0 %v304
  %474 = vmatpush.msra.mxu0 %v301
  %475 = vmatpush.msra.mxu0 %v298
  %476 = vmatpush.msra.mxu0 %v295
  %477 = vmatpush.msra.mxu0 %v292
  %478 = vmatpush.msra.mxu0 %v289
  %479 = vmatpush.msra.mxu0 %v286
  %480 = vmatpush.msra.mxu0 %v283
  %481 = vmatpush.msra.mxu0 %v280
  %482 = vmatpush.msra.mxu0 %v277
  %483 = vmatpush.msra.mxu0 %v274
  %484 = vmatpush.msra.mxu0 %v271
  %485 = vmatpush.msra.mxu0 %v268
  %486 = vmatpush.msra.mxu0 %v265
  %487 = vmatpush.msra.mxu0 %v262
  %488 = vmatpush.msra.mxu0 %v259
  %489 = vmatmul.f32.gmra.mxu0 %v425
  %v490 = vpop.f32.mrf.mxu0
  %v491 = vadd.f32 %v309, %v490
  %492 = vdwg.mxu0
  %v493 = vadd.f32 %v430, %v451
  %v494 = vxor.u32 %v493, 2147483648
  %v495 = vmul.f32 %v494, 1.442695
  %v496 = vpow.pop %v495
  %v497 = vadd.f32 %v496, 1.0
  %v498 = vrcp.pop %v497
  %v499 = vmul.f32 %v497, %v498
  %v500 = vsub.f32 1.0, %v499
  %v501 = vmul.f32 %v498, %v500
  %v502 = vadd.f32 %v498, %v501
  %vm503 = vweird.f32 %v497
  %vm504 = vweird.f32 %v498
  %vm505 = vmor %vm503, %vm504
  %v506 = vsel %vm505, %v498, %v502
  %v507 = vand.u32 2147483647, %v497
  %vm508 = vcmp.eq.f32.partialorder %v507, 8.507059e+37
  %v509 = vand.u32 %v497, 2147483648
  %v510 = vor.u32 1.1754944e-38, %v509
  %v511 = vsel %vm508, %v510, %v506
  %v512 = vmul.f32 1.0, %v511
  %v513 = vadd.f32 %v431, %v471
  %v514 = vxor.u32 %v513, 2147483648
  %v515 = vmul.f32 %v514, 1.442695
  %v516 = vpow.pop %v515
  %v517 = vadd.f32 %v516, 1.0
  %v518 = vrcp.pop %v517
  %v519 = vmul.f32 %v517, %v518
  %v520 = vsub.f32 1.0, %v519
  %v521 = vmul.f32 %v518, %v520
  %v522 = vadd.f32 %v518, %v521
  %vm523 = vweird.f32 %v517
  %vm524 = vweird.f32 %v518
  %vm525 = vmor %vm523, %vm524
  %v526 = vsel %vm525, %v518, %v522
  %v527 = vand.u32 2147483647, %v517
  %vm528 = vcmp.eq.f32.partialorder %v527, 8.507059e+37
  %v529 = vand.u32 %v517, 2147483648
  %v530 = vor.u32 1.1754944e-38, %v529
  %v531 = vsel %vm528, %v530, %v526
  %v532 = vmul.f32 1.0, %v531
  %v533 = vmul.f32 %v512, %v491
  %v534 = vadd.f32 %v432, %v533
  %v535 = vtanh.pop %v534
  %v536 = vsub.f32 1.0, %v532
  %v537 = vmul.f32 %v536, %v535
  %v538 = vmul.f32 %v532, %v425
  %v539 = vadd.f32 %v537, %v538
  %s540 = scalar_lea.vmem [#allocation3], 8
  %541 = vst [vmem:[%s540] sm:$0xff] %v539
  %s542 = smul.u32 2, 3
  %s543 = smul.addr %s542, 8
  %s544 = scalar_lea.vmem [#allocation2], %s543
  %v545 = vld [vmem:[%s544] sm:$0xff]
  %v546 = vld [vmem:[%s544 + $0x8] sm:$0xff]
  %v547 = vld [vmem:[%s544 + $0x10] sm:$0xff]
  %548 = vmatpush.msra.mxu0 %v302
  %549 = vmatpush.msra.mxu0 %v299
  %550 = vmatpush.msra.mxu0 %v296
  %551 = vmatpush.msra.mxu0 %v293
  %552 = vmatpush.msra.mxu0 %v290
  %553 = vmatpush.msra.mxu0 %v287
  %554 = vmatpush.msra.mxu0 %v284
  %555 = vmatpush.msra.mxu0 %v281
  %556 = vmatpush.msra.mxu0 %v278
  %557 = vmatpush.msra.mxu0 %v275
  %558 = vmatpush.msra.mxu0 %v272
  %559 = vmatpush.msra.mxu0 %v269
  %560 = vmatpush.msra.mxu0 %v266
  %561 = vmatpush.msra.mxu0 %v263
  %562 = vmatpush.msra.mxu0 %v260
  %563 = vmatpush.msra.mxu0 %v257
  %564 = vmatmul.f32.gmra.mxu0 %v539
  %v565 = vpop.f32.mrf.mxu0
  %v566 = vadd.f32 %v307, %v565
  %567 = vdwg.mxu0
  %568 = vmatpush.msra.mxu0 %v303
  %569 = vmatpush.msra.mxu0 %v300
  %570 = vmatpush.msra.mxu0 %v297
  %571 = vmatpush.msra.mxu0 %v294
  %572 = vmatpush.msra.mxu0 %v291
  %573 = vmatpush.msra.mxu0 %v288
  %574 = vmatpush.msra.mxu0 %v285
  %575 = vmatpush.msra.mxu0 %v282
  %576 = vmatpush.msra.mxu0 %v279
  %577 = vmatpush.msra.mxu0 %v276
  %578 = vmatpush.msra.mxu0 %v273
  %579 = vmatpush.msra.mxu0 %v270
  %580 = vmatpush.msra.mxu0 %v267
  %581 = vmatpush.msra.mxu0 %v264
  %582 = vmatpush.msra.mxu0 %v261
  %583 = vmatpush.msra.mxu0 %v258
  %584 = vmatmul.f32.gmra.mxu0 %v539
  %v585 = vpop.f32.mrf.mxu0
  %v586 = vadd.f32 %v308, %v585
  %587 = vdwg.mxu0
  %588 = vmatpush.msra.mxu0 %v304
  %589 = vmatpush.msra.mxu0 %v301
  %590 = vmatpush.msra.mxu0 %v298
  %591 = vmatpush.msra.mxu0 %v295
  %592 = vmatpush.msra.mxu0 %v292
  %593 = vmatpush.msra.mxu0 %v289
  %594 = vmatpush.msra.mxu0 %v286
  %595 = vmatpush.msra.mxu0 %v283
  %596 = vmatpush.msra.mxu0 %v280
  %597 = vmatpush.msra.mxu0 %v277
  %598 = vmatpush.msra.mxu0 %v274
  %599 = vmatpush.msra.mxu0 %v271
  %600 = vmatpush.msra.mxu0 %v268
  %601 = vmatpush.msra.mxu0 %v265
  %602 = vmatpush.msra.mxu0 %v262
  %603 = vmatpush.msra.mxu0 %v259
  %604 = vmatmul.f32.gmra.mxu0 %v539
  %v605 = vpop.f32.mrf.mxu0
  %v606 = vadd.f32 %v309, %v605
  %607 = vdwg.mxu0
  %v608 = vadd.f32 %v545, %v566
  %v609 = vxor.u32 %v608, 2147483648
  %v610 = vmul.f32 %v609, 1.442695
  %v611 = vpow.pop %v610
  %v612 = vadd.f32 %v611, 1.0
  %v613 = vrcp.pop %v612
  %v614 = vmul.f32 %v612, %v613
  %v615 = vsub.f32 1.0, %v614
  %v616 = vmul.f32 %v613, %v615
  %v617 = vadd.f32 %v613, %v616
  %vm618 = vweird.f32 %v612
  %vm619 = vweird.f32 %v613
  %vm620 = vmor %vm618, %vm619
  %v621 = vsel %vm620, %v613, %v617
  %v622 = vand.u32 2147483647, %v612
  %vm623 = vcmp.eq.f32.partialorder %v622, 8.507059e+37
  %v624 = vand.u32 %v612, 2147483648
  %v625 = vor.u32 1.1754944e-38, %v624
  %v626 = vsel %vm623, %v625, %v621
  %v627 = vmul.f32 1.0, %v626
  %v628 = vadd.f32 %v546, %v586
  %v629 = vxor.u32 %v628, 2147483648
  %v630 = vmul.f32 %v629, 1.442695
  %v631 = vpow.pop %v630
  %v632 = vadd.f32 %v631, 1.0
  %v633 = vrcp.pop %v632
  %v634 = vmul.f32 %v632, %v633
  %v635 = vsub.f32 1.0, %v634
  %v636 = vmul.f32 %v633, %v635
  %v637 = vadd.f32 %v633, %v636
  %vm638 = vweird.f32 %v632
  %vm639 = vweird.f32 %v633
  %vm640 = vmor %vm638, %vm639
  %v641 = vsel %vm640, %v633, %v637
  %v642 = vand.u32 2147483647, %v632
  %vm643 = vcmp.eq.f32.partialorder %v642, 8.507059e+37
  %v644 = vand.u32 %v632, 2147483648
  %v645 = vor.u32 1.1754944e-38, %v644
  %v646 = vsel %vm643, %v645, %v641
  %v647 = vmul.f32 1.0, %v646
  %v648 = vmul.f32 %v627, %v606
  %v649 = vadd.f32 %v547, %v648
  %v650 = vtanh.pop %v649
  %v651 = vsub.f32 1.0, %v647
  %v652 = vmul.f32 %v651, %v650
  %v653 = vmul.f32 %v647, %v539
  %v654 = vadd.f32 %v652, %v653
  %s655 = scalar_lea.vmem [#allocation3], 16
  %656 = vst [vmem:[%s655] sm:$0xff] %v654
  %s657 = smul.u32 3, 3
  %s658 = smul.addr %s657, 8
  %s659 = scalar_lea.vmem [#allocation2], %s658
  %v660 = vld [vmem:[%s659] sm:$0xff]
  %v661 = vld [vmem:[%s659 + $0x8] sm:$0xff]
  %v662 = vld [vmem:[%s659 + $0x10] sm:$0xff]
  %663 = vmatpush.msra.mxu0 %v302
  %664 = vmatpush.msra.mxu0 %v299
  %665 = vmatpush.msra.mxu0 %v296
  %666 = vmatpush.msra.mxu0 %v293
  %667 = vmatpush.msra.mxu0 %v290
  %668 = vmatpush.msra.mxu0 %v287
  %669 = vmatpush.msra.mxu0 %v284
  %670 = vmatpush.msra.mxu0 %v281
  %671 = vmatpush.msra.mxu0 %v278
  %672 = vmatpush.msra.mxu0 %v275
  %673 = vmatpush.msra.mxu0 %v272
  %674 = vmatpush.msra.mxu0 %v269
  %675 = vmatpush.msra.mxu0 %v266
  %676 = vmatpush.msra.mxu0 %v263
  %677 = vmatpush.msra.mxu0 %v260
  %678 = vmatpush.msra.mxu0 %v257
  %679 = vmatmul.f32.gmra.mxu0 %v654
  %v680 = vpop.f32.mrf.mxu0
  %v681 = vadd.f32 %v307, %v680
  %682 = vdwg.mxu0
  %683 = vmatpush.msra.mxu0 %v303
  %684 = vmatpush.msra.mxu0 %v300
  %685 = vmatpush.msra.mxu0 %v297
  %686 = vmatpush.msra.mxu0 %v294
  %687 = vmatpush.msra.mxu0 %v291
  %688 = vmatpush.msra.mxu0 %v288
  %689 = vmatpush.msra.mxu0 %v285
  %690 = vmatpush.msra.mxu0 %v282
  %691 = vmatpush.msra.mxu0 %v279
  %692 = vmatpush.msra.mxu0 %v276
  %693 = vmatpush.msra.mxu0 %v273
  %694 = vmatpush.msra.mxu0 %v270
  %695 = vmatpush.msra.mxu0 %v267
  %696 = vmatpush.msra.mxu0 %v264
  %697 = vmatpush.msra.mxu0 %v261
  %698 = vmatpush.msra.mxu0 %v258
  %699 = vmatmul.f32.gmra.mxu0 %v654
  %v700 = vpop.f32.mrf.mxu0
  %v701 = vadd.f32 %v308, %v700
  %702 = vdwg.mxu0
  %703 = vmatpush.msra.mxu0 %v304
  %704 = vmatpush.msra.mxu0 %v301
  %705 = vmatpush.msra.mxu0 %v298
  %706 = vmatpush.msra.mxu0 %v295
  %707 = vmatpush.msra.mxu0 %v292
  %708 = vmatpush.msra.mxu0 %v289
  %709 = vmatpush.msra.mxu0 %v286
  %710 = vmatpush.msra.mxu0 %v283
  %711 = vmatpush.msra.mxu0 %v280
  %712 = vmatpush.msra.mxu0 %v277
  %713 = vmatpush.msra.mxu0 %v274
  %714 = vmatpush.msra.mxu0 %v271
  %715 = vmatpush.msra.mxu0 %v268
  %716 = vmatpush.msra.mxu0 %v265
  %717 = vmatpush.msra.mxu0 %v262
  %718 = vmatpush.msra.mxu0 %v259
  %719 = vmatmul.f32.gmra.mxu0 %v654
  %v720 = vpop.f32.mrf.mxu0
  %v721 = vadd.f32 %v309, %v720
  %722 = vdwg.mxu0
  %v723 = vadd.f32 %v660, %v681
  %v724 = vxor.u32 %v723, 2147483648
  %v725 = vmul.f32 %v724, 1.442695
  %v726 = vpow.pop %v725
  %v727 = vadd.f32 %v726, 1.0
  %v728 = vrcp.pop %v727
  %v729 = vmul.f32 %v727, %v728
  %v730 = vsub.f32 1.0, %v729
  %v731 = vmul.f32 %v728, %v730
  %v732 = vadd.f32 %v728, %v731
  %vm733 = vweird.f32 %v727
  %vm734 = vweird.f32 %v728
  %vm735 = vmor %vm733, %vm734
  %v736 = vsel %vm735, %v728, %v732
  %v737 = vand.u32 2147483647, %v727
  %vm738 = vcmp.eq.f32.partialorder %v737, 8.507059e+37
  %v739 = vand.u32 %v727, 2147483648
  %v740 = vor.u32 1.1754944e-38, %v739
  %v741 = vsel %vm738, %v740, %v736
  %v742 = vmul.f32 1.0, %v741
  %v743 = vadd.f32 %v661, %v701
  %v744 = vxor.u32 %v743, 2147483648
  %v745 = vmul.f32 %v744, 1.442695
  %v746 = vpow.pop %v745
  %v747 = vadd.f32 %v746, 1.0
  %v748 = vrcp.pop %v747
  %v749 = vmul.f32 %v747, %v748
  %v750 = vsub.f32 1.0, %v749
  %v751 = vmul.f32 %v748, %v750
  %v752 = vadd.f32 %v748, %v751
  %vm753 = vweird.f32 %v747
  %vm754 = vweird.f32 %v748
  %vm755 = vmor %vm753, %vm754
  %v756 = vsel %vm755, %v748, %v752
  %v757 = vand.u32 2147483647, %v747
  %vm758 = vcmp.eq.f32.partialorder %v757, 8.507059e+37
  %v759 = vand.u32 %v747, 2147483648
  %v760 = vor.u32 1.1754944e-38, %v759
  %v761 = vsel %vm758, %v760, %v756
  %v762 = vmul.f32 1.0, %v761
  %v763 = vmul.f32 %v742, %v721
  %v764 = vadd.f32 %v662, %v763
  %v765 = vtanh.pop %v764
  %v766 = vsub.f32 1.0, %v762
  %v767 = vmul.f32 %v766, %v765
  %v768 = vmul.f32 %v762, %v654
  %v769 = vadd.f32 %v767, %v768
  %s770 = scalar_lea.vmem [#allocation3], 24
  %771 = vst [vmem:[%s770] sm:$0xff] %v769
  %s772 = smul.u32 4, 3
  %s773 = smul.addr %s772, 8
  %s774 = scalar_lea.vmem [#allocation2], %s773
  %v775 = vld [vmem:[%s774] sm:$0xff]
  %v776 = vld [vmem:[%s774 + $0x8] sm:$0xff]
  %v777 = vld [vmem:[%s774 + $0x10] sm:$0xff]
  %778 = vmatpush.msra.mxu0 %v302
  %779 = vmatpush.msra.mxu0 %v299
  %780 = vmatpush.msra.mxu0 %v296
  %781 = vmatpush.msra.mxu0 %v293
  %782 = vmatpush.msra.mxu0 %v290
  %783 = vmatpush.msra.mxu0 %v287
  %784 = vmatpush.msra.mxu0 %v284
  %785 = vmatpush.msra.mxu0 %v281
  %786 = vmatpush.msra.mxu0 %v278
  %787 = vmatpush.msra.mxu0 %v275
  %788 = vmatpush.msra.mxu0 %v272
  %789 = vmatpush.msra.mxu0 %v269
  %790 = vmatpush.msra.mxu0 %v266
  %791 = vmatpush.msra.mxu0 %v263
  %792 = vmatpush.msra.mxu0 %v260
  %793 = vmatpush.msra.mxu0 %v257
  %794 = vmatmul.f32.gmra.mxu0 %v769
  %v795 = vpop.f32.mrf.mxu0
  %v796 = vadd.f32 %v307, %v795
  %797 = vdwg.mxu0
  %798 = vmatpush.msra.mxu0 %v303
  %799 = vmatpush.msra.mxu0 %v300
  %800 = vmatpush.msra.mxu0 %v297
  %801 = vmatpush.msra.mxu0 %v294
  %802 = vmatpush.msra.mxu0 %v291
  %803 = vmatpush.msra.mxu0 %v288
  %804 = vmatpush.msra.mxu0 %v285
  %805 = vmatpush.msra.mxu0 %v282
  %806 = vmatpush.msra.mxu0 %v279
  %807 = vmatpush.msra.mxu0 %v276
  %808 = vmatpush.msra.mxu0 %v273
  %809 = vmatpush.msra.mxu0 %v270
  %810 = vmatpush.msra.mxu0 %v267
  %811 = vmatpush.msra.mxu0 %v264
  %812 = vmatpush.msra.mxu0 %v261
  %813 = vmatpush.msra.mxu0 %v258
  %814 = vmatmul.f32.gmra.mxu0 %v769
  %v815 = vpop.f32.mrf.mxu0
  %v816 = vadd.f32 %v308, %v815
  %817 = vdwg.mxu0
  %818 = vmatpush.msra.mxu0 %v304
  %819 = vmatpush.msra.mxu0 %v301
  %820 = vmatpush.msra.mxu0 %v298
  %821 = vmatpush.msra.mxu0 %v295
  %822 = vmatpush.msra.mxu0 %v292
  %823 = vmatpush.msra.mxu0 %v289
  %824 = vmatpush.msra.mxu0 %v286
  %825 = vmatpush.msra.mxu0 %v283
  %826 = vmatpush.msra.mxu0 %v280
  %827 = vmatpush.msra.mxu0 %v277
  %828 = vmatpush.msra.mxu0 %v274
  %829 = vmatpush.msra.mxu0 %v271
  %830 = vmatpush.msra.mxu0 %v268
  %831 = vmatpush.msra.mxu0 %v265
  %832 = vmatpush.msra.mxu0 %v262
  %833 = vmatpush.msra.mxu0 %v259
  %834 = vmatmul.f32.gmra.mxu0 %v769
  %v835 = vpop.f32.mrf.mxu0
  %v836 = vadd.f32 %v309, %v835
  %837 = vdwg.mxu0
  %v838 = vadd.f32 %v775, %v796
  %v839 = vxor.u32 %v838, 2147483648
  %v840 = vmul.f32 %v839, 1.442695
  %v841 = vpow.pop %v840
  %v842 = vadd.f32 %v841, 1.0
  %v843 = vrcp.pop %v842
  %v844 = vmul.f32 %v842, %v843
  %v845 = vsub.f32 1.0, %v844
  %v846 = vmul.f32 %v843, %v845
  %v847 = vadd.f32 %v843, %v846
  %vm848 = vweird.f32 %v842
  %vm849 = vweird.f32 %v843
  %vm850 = vmor %vm848, %vm849
  %v851 = vsel %vm850, %v843, %v847
  %v852 = vand.u32 2147483647, %v842
  %vm853 = vcmp.eq.f32.partialorder %v852, 8.507059e+37
  %v854 = vand.u32 %v842, 2147483648
  %v855 = vor.u32 1.1754944e-38, %v854
  %v856 = vsel %vm853, %v855, %v851
  %v857 = vmul.f32 1.0, %v856
  %v858 = vadd.f32 %v776, %v816
  %v859 = vxor.u32 %v858, 2147483648
  %v860 = vmul.f32 %v859, 1.442695
  %v861 = vpow.pop %v860
  %v862 = vadd.f32 %v861, 1.0
  %v863 = vrcp.pop %v862
  %v864 = vmul.f32 %v862, %v863
  %v865 = vsub.f32 1.0, %v864
  %v866 = vmul.f32 %v863, %v865
  %v867 = vadd.f32 %v863, %v866
  %vm868 = vweird.f32 %v862
  %vm869 = vweird.f32 %v863
  %vm870 = vmor %vm868, %vm869
  %v871 = vsel %vm870, %v863, %v867
  %v872 = vand.u32 2147483647, %v862
  %vm873 = vcmp.eq.f32.partialorder %v872, 8.507059e+37
  %v874 = vand.u32 %v862, 2147483648
  %v875 = vor.u32 1.1754944e-38, %v874
  %v876 = vsel %vm873, %v875, %v871
  %v877 = vmul.f32 1.0, %v876
  %v878 = vmul.f32 %v857, %v836
  %v879 = vadd.f32 %v777, %v878
  %v880 = vtanh.pop %v879
  %v881 = vsub.f32 1.0, %v877
  %v882 = vmul.f32 %v881, %v880
  %v883 = vmul.f32 %v877, %v769
  %v884 = vadd.f32 %v882, %v883
  %s885 = scalar_lea.vmem [#allocation3], 32
  %886 = vst [vmem:[%s885] sm:$0xff] %v884
  %s887 = smul.u32 5, 3
  %s888 = smul.addr %s887, 8
  %s889 = scalar_lea.vmem [#allocation2], %s888
  %v890 = vld [vmem:[%s889] sm:$0xff]
  %v891 = vld [vmem:[%s889 + $0x8] sm:$0xff]
  %v892 = vld [vmem:[%s889 + $0x10] sm:$0xff]
  %893 = vmatpush.msra.mxu0 %v302
  %894 = vmatpush.msra.mxu0 %v299
  %895 = vmatpush.msra.mxu0 %v296
  %896 = vmatpush.msra.mxu0 %v293
  %897 = vmatpush.msra.mxu0 %v290
  %898 = vmatpush.msra.mxu0 %v287
  %899 = vmatpush.msra.mxu0 %v284
  %900 = vmatpush.msra.mxu0 %v281
  %901 = vmatpush.msra.mxu0 %v278
  %902 = vmatpush.msra.mxu0 %v275
  %903 = vmatpush.msra.mxu0 %v272
  %904 = vmatpush.msra.mxu0 %v269
  %905 = vmatpush.msra.mxu0 %v266
  %906 = vmatpush.msra.mxu0 %v263
  %907 = vmatpush.msra.mxu0 %v260
  %908 = vmatpush.msra.mxu0 %v257
  %909 = vmatmul.f32.gmra.mxu0 %v884
  %v910 = vpop.f32.mrf.mxu0
  %v911 = vadd.f32 %v307, %v910
  %912 = vdwg.mxu0
  %913 = vmatpush.msra.mxu0 %v303
  %914 = vmatpush.msra.mxu0 %v300
  %915 = vmatpush.msra.mxu0 %v297
  %916 = vmatpush.msra.mxu0 %v294
  %917 = vmatpush.msra.mxu0 %v291
  %918 = vmatpush.msra.mxu0 %v288
  %919 = vmatpush.msra.mxu0 %v285
  %920 = vmatpush.msra.mxu0 %v282
  %921 = vmatpush.msra.mxu0 %v279
  %922 = vmatpush.msra.mxu0 %v276
  %923 = vmatpush.msra.mxu0 %v273
  %924 = vmatpush.msra.mxu0 %v270
  %925 = vmatpush.msra.mxu0 %v267
  %926 = vmatpush.msra.mxu0 %v264
  %927 = vmatpush.msra.mxu0 %v261
  %928 = vmatpush.msra.mxu0 %v258
  %929 = vmatmul.f32.gmra.mxu0 %v884
  %v930 = vpop.f32.mrf.mxu0
  %v931 = vadd.f32 %v308, %v930
  %932 = vdwg.mxu0
  %933 = vmatpush.msra.mxu0 %v304
  %934 = vmatpush.msra.mxu0 %v301
  %935 = vmatpush.msra.mxu0 %v298
  %936 = vmatpush.msra.mxu0 %v295
  %937 = vmatpush.msra.mxu0 %v292
  %938 = vmatpush.msra.mxu0 %v289
  %939 = vmatpush.msra.mxu0 %v286
  %940 = vmatpush.msra.mxu0 %v283
  %941 = vmatpush.msra.mxu0 %v280
  %942 = vmatpush.msra.mxu0 %v277
  %943 = vmatpush.msra.mxu0 %v274
  %944 = vmatpush.msra.mxu0 %v271
  %945 = vmatpush.msra.mxu0 %v268
  %946 = vmatpush.msra.mxu0 %v265
  %947 = vmatpush.msra.mxu0 %v262
  %948 = vmatpush.msra.mxu0 %v259
  %949 = vmatmul.f32.gmra.mxu0 %v884
  %v950 = vpop.f32.mrf.mxu0
  %v951 = vadd.f32 %v309, %v950
  %952 = vdwg.mxu0
  %v953 = vadd.f32 %v890, %v911
  %v954 = vxor.u32 %v953, 2147483648
  %v955 = vmul.f32 %v954, 1.442695
  %v956 = vpow.pop %v955
  %v957 = vadd.f32 %v956, 1.0
  %v958 = vrcp.pop %v957
  %v959 = vmul.f32 %v957, %v958
  %v960 = vsub.f32 1.0, %v959
  %v961 = vmul.f32 %v958, %v960
  %v962 = vadd.f32 %v958, %v961
  %vm963 = vweird.f32 %v957
  %vm964 = vweird.f32 %v958
  %vm965 = vmor %vm963, %vm964
  %v966 = vsel %vm965, %v958, %v962
  %v967 = vand.u32 2147483647, %v957
  %vm968 = vcmp.eq.f32.partialorder %v967, 8.507059e+37
  %v969 = vand.u32 %v957, 2147483648
  %v970 = vor.u32 1.1754944e-38, %v969
  %v971 = vsel %vm968, %v970, %v966
  %v972 = vmul.f32 1.0, %v971
  %v973 = vadd.f32 %v891, %v931
  %v974 = vxor.u32 %v973, 2147483648
  %v975 = vmul.f32 %v974, 1.442695
  %v976 = vpow.pop %v975
  %v977 = vadd.f32 %v976, 1.0
  %v978 = vrcp.pop %v977
  %v979 = vmul.f32 %v977, %v978
  %v980 = vsub.f32 1.0, %v979
  %v981 = vmul.f32 %v978, %v980
  %v982 = vadd.f32 %v978, %v981
  %vm983 = vweird.f32 %v977
  %vm984 = vweird.f32 %v978
  %vm985 = vmor %vm983, %vm984
  %v986 = vsel %vm985, %v978, %v982
  %v987 = vand.u32 2147483647, %v977
  %vm988 = vcmp.eq.f32.partialorder %v987, 8.507059e+37
  %v989 = vand.u32 %v977, 2147483648
  %v990 = vor.u32 1.1754944e-38, %v989
  %v991 = vsel %vm988, %v990, %v986
  %v992 = vmul.f32 1.0, %v991
  %v993 = vmul.f32 %v972, %v951
  %v994 = vadd.f32 %v892, %v993
  %v995 = vtanh.pop %v994
  %v996 = vsub.f32 1.0, %v992
  %v997 = vmul.f32 %v996, %v995
  %v998 = vmul.f32 %v992, %v884
  %v999 = vadd.f32 %v997, %v998
  %s1000 = scalar_lea.vmem [#allocation3], 40
  %1001 = vst [vmem:[%s1000] sm:$0xff] %v999
  %s1002 = smul.u32 6, 3
  %s1003 = smul.addr %s1002, 8
  %s1004 = scalar_lea.vmem [#allocation2], %s1003
  %v1005 = vld [vmem:[%s1004] sm:$0xff]
  %v1006 = vld [vmem:[%s1004 + $0x8] sm:$0xff]
  %v1007 = vld [vmem:[%s1004 + $0x10] sm:$0xff]
  %1008 = vmatpush.msra.mxu0 %v302
  %1009 = vmatpush.msra.mxu0 %v299
  %1010 = vmatpush.msra.mxu0 %v296
  %1011 = vmatpush.msra.mxu0 %v293
  %1012 = vmatpush.msra.mxu0 %v290
  %1013 = vmatpush.msra.mxu0 %v287
  %1014 = vmatpush.msra.mxu0 %v284
  %1015 = vmatpush.msra.mxu0 %v281
  %1016 = vmatpush.msra.mxu0 %v278
  %1017 = vmatpush.msra.mxu0 %v275
  %1018 = vmatpush.msra.mxu0 %v272
  %1019 = vmatpush.msra.mxu0 %v269
  %1020 = vmatpush.msra.mxu0 %v266
  %1021 = vmatpush.msra.mxu0 %v263
  %1022 = vmatpush.msra.mxu0 %v260
  %1023 = vmatpush.msra.mxu0 %v257
  %1024 = vmatmul.f32.gmra.mxu0 %v999
  %v1025 = vpop.f32.mrf.mxu0
  %v1026 = vadd.f32 %v307, %v1025
  %1027 = vdwg.mxu0
  %1028 = vmatpush.msra.mxu0 %v303
  %1029 = vmatpush.msra.mxu0 %v300
  %1030 = vmatpush.msra.mxu0 %v297
  %1031 = vmatpush.msra.mxu0 %v294
  %1032 = vmatpush.msra.mxu0 %v291
  %1033 = vmatpush.msra.mxu0 %v288
  %1034 = vmatpush.msra.mxu0 %v285
  %1035 = vmatpush.msra.mxu0 %v282
  %1036 = vmatpush.msra.mxu0 %v279
  %1037 = vmatpush.msra.mxu0 %v276
  %1038 = vmatpush.msra.mxu0 %v273
  %1039 = vmatpush.msra.mxu0 %v270
  %1040 = vmatpush.msra.mxu0 %v267
  %1041 = vmatpush.msra.mxu0 %v264
  %1042 = vmatpush.msra.mxu0 %v261
  %1043 = vmatpush.msra.mxu0 %v258
  %1044 = vmatmul.f32.gmra.mxu0 %v999
  %v1045 = vpop.f32.mrf.mxu0
  %v1046 = vadd.f32 %v308, %v1045
  %1047 = vdwg.mxu0
  %1048 = vmatpush.msra.mxu0 %v304
  %1049 = vmatpush.msra.mxu0 %v301
  %1050 = vmatpush.msra.mxu0 %v298
  %1051 = vmatpush.msra.mxu0 %v295
  %1052 = vmatpush.msra.mxu0 %v292
  %1053 = vmatpush.msra.mxu0 %v289
  %1054 = vmatpush.msra.mxu0 %v286
  %1055 = vmatpush.msra.mxu0 %v283
  %1056 = vmatpush.msra.mxu0 %v280
  %1057 = vmatpush.msra.mxu0 %v277
  %1058 = vmatpush.msra.mxu0 %v274
  %1059 = vmatpush.msra.mxu0 %v271
  %1060 = vmatpush.msra.mxu0 %v268
  %1061 = vmatpush.msra.mxu0 %v265
  %1062 = vmatpush.msra.mxu0 %v262
  %1063 = vmatpush.msra.mxu0 %v259
  %1064 = vmatmul.f32.gmra.mxu0 %v999
  %v1065 = vpop.f32.mrf.mxu0
  %v1066 = vadd.f32 %v309, %v1065
  %1067 = vdwg.mxu0
  %v1068 = vadd.f32 %v1005, %v1026
  %v1069 = vxor.u32 %v1068, 2147483648
  %v1070 = vmul.f32 %v1069, 1.442695
  %v1071 = vpow.pop %v1070
  %v1072 = vadd.f32 %v1071, 1.0
  %v1073 = vrcp.pop %v1072
  %v1074 = vmul.f32 %v1072, %v1073
  %v1075 = vsub.f32 1.0, %v1074
  %v1076 = vmul.f32 %v1073, %v1075
  %v1077 = vadd.f32 %v1073, %v1076
  %vm1078 = vweird.f32 %v1072
  %vm1079 = vweird.f32 %v1073
  %vm1080 = vmor %vm1078, %vm1079
  %v1081 = vsel %vm1080, %v1073, %v1077
  %v1082 = vand.u32 2147483647, %v1072
  %vm1083 = vcmp.eq.f32.partialorder %v1082, 8.507059e+37
  %v1084 = vand.u32 %v1072, 2147483648
  %v1085 = vor.u32 1.1754944e-38, %v1084
  %v1086 = vsel %vm1083, %v1085, %v1081
  %v1087 = vmul.f32 1.0, %v1086
  %v1088 = vadd.f32 %v1006, %v1046
  %v1089 = vxor.u32 %v1088, 2147483648
  %v1090 = vmul.f32 %v1089, 1.442695
  %v1091 = vpow.pop %v1090
  %v1092 = vadd.f32 %v1091, 1.0
  %v1093 = vrcp.pop %v1092
  %v1094 = vmul.f32 %v1092, %v1093
  %v1095 = vsub.f32 1.0, %v1094
  %v1096 = vmul.f32 %v1093, %v1095
  %v1097 = vadd.f32 %v1093, %v1096
  %vm1098 = vweird.f32 %v1092
  %vm1099 = vweird.f32 %v1093
  %vm1100 = vmor %vm1098, %vm1099
  %v1101 = vsel %vm1100, %v1093, %v1097
  %v1102 = vand.u32 2147483647, %v1092
  %vm1103 = vcmp.eq.f32.partialorder %v1102, 8.507059e+37
  %v1104 = vand.u32 %v1092, 2147483648
  %v1105 = vor.u32 1.1754944e-38, %v1104
  %v1106 = vsel %vm1103, %v1105, %v1101
  %v1107 = vmul.f32 1.0, %v1106
  %v1108 = vmul.f32 %v1087, %v1066
  %v1109 = vadd.f32 %v1007, %v1108
  %v1110 = vtanh.pop %v1109
  %v1111 = vsub.f32 1.0, %v1107
  %v1112 = vmul.f32 %v1111, %v1110
  %v1113 = vmul.f32 %v1107, %v999
  %v1114 = vadd.f32 %v1112, %v1113
  %s1115 = scalar_lea.vmem [#allocation3], 48
  %1116 = vst [vmem:[%s1115] sm:$0xff] %v1114
  %s1117 = smul.u32 7, 3
  %s1118 = smul.addr %s1117, 8
  %s1119 = scalar_lea.vmem [#allocation2], %s1118
  %v1120 = vld [vmem:[%s1119] sm:$0xff]
  %v1121 = vld [vmem:[%s1119 + $0x8] sm:$0xff]
  %v1122 = vld [vmem:[%s1119 + $0x10] sm:$0xff]
  %1123 = vmatpush.msra.mxu0 %v302
  %1124 = vmatpush.msra.mxu0 %v299
  %1125 = vmatpush.msra.mxu0 %v296
  %1126 = vmatpush.msra.mxu0 %v293
  %1127 = vmatpush.msra.mxu0 %v290
  %1128 = vmatpush.msra.mxu0 %v287
  %1129 = vmatpush.msra.mxu0 %v284
  %1130 = vmatpush.msra.mxu0 %v281
  %1131 = vmatpush.msra.mxu0 %v278
  %1132 = vmatpush.msra.mxu0 %v275
  %1133 = vmatpush.msra.mxu0 %v272
  %1134 = vmatpush.msra.mxu0 %v269
  %1135 = vmatpush.msra.mxu0 %v266
  %1136 = vmatpush.msra.mxu0 %v263
  %1137 = vmatpush.msra.mxu0 %v260
  %1138 = vmatpush.msra.mxu0 %v257
  %1139 = vmatmul.f32.gmra.mxu0 %v1114
  %v1140 = vpop.f32.mrf.mxu0
  %v1141 = vadd.f32 %v307, %v1140
  %1142 = vdwg.mxu0
  %1143 = vmatpush.msra.mxu0 %v303
  %1144 = vmatpush.msra.mxu0 %v300
  %1145 = vmatpush.msra.mxu0 %v297
  %1146 = vmatpush.msra.mxu0 %v294
  %1147 = vmatpush.msra.mxu0 %v291
  %1148 = vmatpush.msra.mxu0 %v288
  %1149 = vmatpush.msra.mxu0 %v285
  %1150 = vmatpush.msra.mxu0 %v282
  %1151 = vmatpush.msra.mxu0 %v279
  %1152 = vmatpush.msra.mxu0 %v276
  %1153 = vmatpush.msra.mxu0 %v273
  %1154 = vmatpush.msra.mxu0 %v270
  %1155 = vmatpush.msra.mxu0 %v267
  %1156 = vmatpush.msra.mxu0 %v264
  %1157 = vmatpush.msra.mxu0 %v261
  %1158 = vmatpush.msra.mxu0 %v258
  %1159 = vmatmul.f32.gmra.mxu0 %v1114
  %v1160 = vpop.f32.mrf.mxu0
  %v1161 = vadd.f32 %v308, %v1160
  %1162 = vdwg.mxu0
  %1163 = vmatpush.msra.mxu0 %v304
  %1164 = vmatpush.msra.mxu0 %v301
  %1165 = vmatpush.msra.mxu0 %v298
  %1166 = vmatpush.msra.mxu0 %v295
  %1167 = vmatpush.msra.mxu0 %v292
  %1168 = vmatpush.msra.mxu0 %v289
  %1169 = vmatpush.msra.mxu0 %v286
  %1170 = vmatpush.msra.mxu0 %v283
  %1171 = vmatpush.msra.mxu0 %v280
  %1172 = vmatpush.msra.mxu0 %v277
  %1173 = vmatpush.msra.mxu0 %v274
  %1174 = vmatpush.msra.mxu0 %v271
  %1175 = vmatpush.msra.mxu0 %v268
  %1176 = vmatpush.msra.mxu0 %v265
  %1177 = vmatpush.msra.mxu0 %v262
  %1178 = vmatpush.msra.mxu0 %v259
  %1179 = vmatmul.f32.gmra.mxu0 %v1114
  %v1180 = vpop.f32.mrf.mxu0
  %v1181 = vadd.f32 %v309, %v1180
  %1182 = vdwg.mxu0
  %v1183 = vadd.f32 %v1120, %v1141
  %v1184 = vxor.u32 %v1183, 2147483648
  %v1185 = vmul.f32 %v1184, 1.442695
  %v1186 = vpow.pop %v1185
  %v1187 = vadd.f32 %v1186, 1.0
  %v1188 = vrcp.pop %v1187
  %v1189 = vmul.f32 %v1187, %v1188
  %v1190 = vsub.f32 1.0, %v1189
  %v1191 = vmul.f32 %v1188, %v1190
  %v1192 = vadd.f32 %v1188, %v1191
  %vm1193 = vweird.f32 %v1187
  %vm1194 = vweird.f32 %v1188
  %vm1195 = vmor %vm1193, %vm1194
  %v1196 = vsel %vm1195, %v1188, %v1192
  %v1197 = vand.u32 2147483647, %v1187
  %vm1198 = vcmp.eq.f32.partialorder %v1197, 8.507059e+37
  %v1199 = vand.u32 %v1187, 2147483648
  %v1200 = vor.u32 1.1754944e-38, %v1199
  %v1201 = vsel %vm1198, %v1200, %v1196
  %v1202 = vmul.f32 1.0, %v1201
  %v1203 = vadd.f32 %v1121, %v1161
  %v1204 = vxor.u32 %v1203, 2147483648
  %v1205 = vmul.f32 %v1204, 1.442695
  %v1206 = vpow.pop %v1205
  %v1207 = vadd.f32 %v1206, 1.0
  %v1208 = vrcp.pop %v1207
  %v1209 = vmul.f32 %v1207, %v1208
  %v1210 = vsub.f32 1.0, %v1209
  %v1211 = vmul.f32 %v1208, %v1210
  %v1212 = vadd.f32 %v1208, %v1211
  %vm1213 = vweird.f32 %v1207
  %vm1214 = vweird.f32 %v1208
  %vm1215 = vmor %vm1213, %vm1214
  %v1216 = vsel %vm1215, %v1208, %v1212
  %v1217 = vand.u32 2147483647, %v1207
  %vm1218 = vcmp.eq.f32.partialorder %v1217, 8.507059e+37
  %v1219 = vand.u32 %v1207, 2147483648
  %v1220 = vor.u32 1.1754944e-38, %v1219
  %v1221 = vsel %vm1218, %v1220, %v1216
  %v1222 = vmul.f32 1.0, %v1221
  %v1223 = vmul.f32 %v1202, %v1181
  %v1224 = vadd.f32 %v1122, %v1223
  %v1225 = vtanh.pop %v1224
  %v1226 = vsub.f32 1.0, %v1222
  %v1227 = vmul.f32 %v1226, %v1225
  %v1228 = vmul.f32 %v1222, %v1114
  %v1229 = vadd.f32 %v1227, %v1228
  %s1230 = scalar_lea.vmem [#allocation3], 56
  %1231 = vst [vmem:[%s1230] sm:$0xff] %v1229
  %1232 = vst [vmem:[%s14] sm:$0xff] %v1229
  %v1233 = vld [vmem:[#allocation3] sm:$0xff]
  %v1234 = vld [vmem:[#allocation3 + $0x8] sm:$0xff]
  %v1235 = vld [vmem:[#allocation3 + $0x10] sm:$0xff]
  %v1236 = vld [vmem:[#allocation3 + $0x18] sm:$0xff]
  %v1237 = vld [vmem:[#allocation3 + $0x20] sm:$0xff]
  %v1238 = vld [vmem:[#allocation3 + $0x28] sm:$0xff]
  %v1239 = vld [vmem:[#allocation3 + $0x30] sm:$0xff]
  %v1240 = vld [vmem:[#allocation3 + $0x38] sm:$0xff]
  %v1241 = vld [vmem:[%s5] sm:$0xff]
  %v1242 = vld [vmem:[%s5 + $0x8] sm:$0xff]
  %v1243 = vld [vmem:[%s5 + $0x10] sm:$0xff]
  %v1244 = vld [vmem:[%s5 + $0x18] sm:$0xff]
  %v1245 = vld [vmem:[%s5 + $0x20] sm:$0xff]
  %v1246 = vld [vmem:[%s5 + $0x28] sm:$0xff]
  %v1247 = vld [vmem:[%s5 + $0x30] sm:$0xff]
  %v1248 = vld [vmem:[%s5 + $0x38] sm:$0xff]
  %v1249 = vld [vmem:[%s5 + $0x40] sm:$0xff]
  %v1250 = vld [vmem:[%s5 + $0x48] sm:$0xff]
  %v1251 = vld [vmem:[%s5 + $0x50] sm:$0xff]
  %v1252 = vld [vmem:[%s5 + $0x58] sm:$0xff]
  %v1253 = vld [vmem:[%s5 + $0x60] sm:$0xff]
  %v1254 = vld [vmem:[%s5 + $0x68] sm:$0xff]
  %v1255 = vld [vmem:[%s5 + $0x70] sm:$0xff]
  %v1256 = vld [vmem:[%s5 + $0x78] sm:$0xff]
  %v1257 = vld [vmem:[%s5 + $0x80] sm:$0xff]
  %v1258 = vld [vmem:[%s5 + $0x88] sm:$0xff]
  %v1259 = vld [vmem:[%s5 + $0x90] sm:$0xff]
  %v1260 = vld [vmem:[%s5 + $0x98] sm:$0xff]
  %v1261 = vld [vmem:[%s5 + $0xa0] sm:$0xff]
  %v1262 = vld [vmem:[%s5 + $0xa8] sm:$0xff]
  %v1263 = vld [vmem:[%s5 + $0xb0] sm:$0xff]
  %v1264 = vld [vmem:[%s5 + $0xb8] sm:$0xff]
  %v1265 = vld [vmem:[%s5 + $0xc0] sm:$0xff]
  %v1266 = vld [vmem:[%s5 + $0xc8] sm:$0xff]
  %v1267 = vld [vmem:[%s5 + $0xd0] sm:$0xff]
  %v1268 = vld [vmem:[%s5 + $0xd8] sm:$0xff]
  %v1269 = vld [vmem:[%s5 + $0xe0] sm:$0xff]
  %v1270 = vld [vmem:[%s5 + $0xe8] sm:$0xff]
  %v1271 = vld [vmem:[%s5 + $0xf0] sm:$0xff]
  %v1272 = vld [vmem:[%s5 + $0xf8] sm:$0xff]
  %v1273 = vld [vmem:[%s5 + $0x100] sm:$0xff]
  %v1274 = vld [vmem:[%s5 + $0x108] sm:$0xff]
  %v1275 = vld [vmem:[%s5 + $0x110] sm:$0xff]
  %v1276 = vld [vmem:[%s5 + $0x118] sm:$0xff]
  %v1277 = vld [vmem:[%s5 + $0x120] sm:$0xff]
  %v1278 = vld [vmem:[%s5 + $0x128] sm:$0xff]
  %v1279 = vld [vmem:[%s5 + $0x130] sm:$0xff]
  %v1280 = vld [vmem:[%s5 + $0x138] sm:$0xff]
  %v1281 = vld [vmem:[%s5 + $0x140] sm:$0xff]
  %v1282 = vld [vmem:[%s5 + $0x148] sm:$0xff]
  %v1283 = vld [vmem:[%s5 + $0x150] sm:$0xff]
  %v1284 = vld [vmem:[%s5 + $0x158] sm:$0xff]
  %v1285 = vld [vmem:[%s5 + $0x160] sm:$0xff]
  %v1286 = vld [vmem:[%s5 + $0x168] sm:$0xff]
  %v1287 = vld [vmem:[%s5 + $0x170] sm:$0xff]
  %v1288 = vld [vmem:[%s5 + $0x178] sm:$0xff]
  %v1289 = vld [vmem:[%s6] sm:$0x7]
  %v1291 = vperm.slane %v1289, 0
  %v1292 = vperm.slane %v1289, 1
  %v1293 = vperm.slane %v1289, 2
  %1297 = vmatpush.msra.mxu0 %v1286
  %1298 = vmatpush.msra.mxu0 %v1283
  %1299 = vmatpush.msra.mxu0 %v1280
  %1300 = vmatpush.msra.mxu0 %v1277
  %1301 = vmatpush.msra.mxu0 %v1274
  %1302 = vmatpush.msra.mxu0 %v1271
  %1303 = vmatpush.msra.mxu0 %v1268
  %1304 = vmatpush.msra.mxu0 %v1265
  %1305 = vmatpush.msra.mxu0 %v1262
  %1306 = vmatpush.msra.mxu0 %v1259
  %1307 = vmatpush.msra.mxu0 %v1256
  %1308 = vmatpush.msra.mxu0 %v1253
  %1309 = vmatpush.msra.mxu0 %v1250
  %1310 = vmatpush.msra.mxu0 %v1247
  %1311 = vmatpush.msra.mxu0 %v1244
  %1312 = vmatpush.msra.mxu0 %v1241
  %1313 = vmatmul.f32.gmra.mxu0 %v1233
  %v1314 = vpop.f32.mrf.mxu0
  %v1315 = vadd.f32 %v1291, %v1314
  %1316 = vmatmul.f32.gmra.mxu0 %v1234
  %v1317 = vpop.f32.mrf.mxu0
  %v1318 = vadd.f32 %v1291, %v1317
  %1319 = vmatmul.f32.gmra.mxu0 %v1235
  %v1320 = vpop.f32.mrf.mxu0
  %v1321 = vadd.f32 %v1291, %v1320
  %1322 = vmatmul.f32.gmra.mxu0 %v1236
  %v1323 = vpop.f32.mrf.mxu0
  %v1324 = vadd.f32 %v1291, %v1323
  %1325 = vmatmul.f32.gmra.mxu0 %v1237
  %v1326 = vpop.f32.mrf.mxu0
  %v1327 = vadd.f32 %v1291, %v1326
  %1328 = vmatmul.f32.gmra.mxu0 %v1238
  %v1329 = vpop.f32.mrf.mxu0
  %v1330 = vadd.f32 %v1291, %v1329
  %1331 = vmatmul.f32.gmra.mxu0 %v1239
  %v1332 = vpop.f32.mrf.mxu0
  %v1333 = vadd.f32 %v1291, %v1332
  %1334 = vmatmul.f32.gmra.mxu0 %v1240
  %v1335 = vpop.f32.mrf.mxu0
  %v1336 = vadd.f32 %v1291, %v1335
  %1337 = vdwg.mxu0
  %1338 = vmatpush.msra.mxu0 %v1287
  %1339 = vmatpush.msra.mxu0 %v1284
  %1340 = vmatpush.msra.mxu0 %v1281
  %1341 = vmatpush.msra.mxu0 %v1278
  %1342 = vmatpush.msra.mxu0 %v1275
  %1343 = vmatpush.msra.mxu0 %v1272
  %1344 = vmatpush.msra.mxu0 %v1269
  %1345 = vmatpush.msra.mxu0 %v1266
  %1346 = vmatpush.msra.mxu0 %v1263
  %1347 = vmatpush.msra.mxu0 %v1260
  %1348 = vmatpush.msra.mxu0 %v1257
  %1349 = vmatpush.msra.mxu0 %v1254
  %1350 = vmatpush.msra.mxu0 %v1251
  %1351 = vmatpush.msra.mxu0 %v1248
  %1352 = vmatpush.msra.mxu0 %v1245
  %1353 = vmatpush.msra.mxu0 %v1242
  %1354 = vmatmul.f32.gmra.mxu0 %v1233
  %v1355 = vpop.f32.mrf.mxu0
  %v1356 = vadd.f32 %v1292, %v1355
  %1357 = vmatmul.f32.gmra.mxu0 %v1234
  %v1358 = vpop.f32.mrf.mxu0
  %v1359 = vadd.f32 %v1292, %v1358
  %1360 = vmatmul.f32.gmra.mxu0 %v1235
  %v1361 = vpop.f32.mrf.mxu0
  %v1362 = vadd.f32 %v1292, %v1361
  %1363 = vmatmul.f32.gmra.mxu0 %v1236
  %v1364 = vpop.f32.mrf.mxu0
  %v1365 = vadd.f32 %v1292, %v1364
  %1366 = vmatmul.f32.gmra.mxu0 %v1237
  %v1367 = vpop.f32.mrf.mxu0
  %v1368 = vadd.f32 %v1292, %v1367
  %1369 = vmatmul.f32.gmra.mxu0 %v1238
  %v1370 = vpop.f32.mrf.mxu0
  %v1371 = vadd.f32 %v1292, %v1370
  %1372 = vmatmul.f32.gmra.mxu0 %v1239
  %v1373 = vpop.f32.mrf.mxu0
  %v1374 = vadd.f32 %v1292, %v1373
  %1375 = vmatmul.f32.gmra.mxu0 %v1240
  %v1376 = vpop.f32.mrf.mxu0
  %v1377 = vadd.f32 %v1292, %v1376
  %1378 = vdwg.mxu0
  %1379 = vmatpush.msra.mxu0 %v1288
  %1380 = vmatpush.msra.mxu0 %v1285
  %1381 = vmatpush.msra.mxu0 %v1282
  %1382 = vmatpush.msra.mxu0 %v1279
  %1383 = vmatpush.msra.mxu0 %v1276
  %1384 = vmatpush.msra.mxu0 %v1273
  %1385 = vmatpush.msra.mxu0 %v1270
  %1386 = vmatpush.msra.mxu0 %v1267
  %1387 = vmatpush.msra.mxu0 %v1264
  %1388 = vmatpush.msra.mxu0 %v1261
  %1389 = vmatpush.msra.mxu0 %v1258
  %1390 = vmatpush.msra.mxu0 %v1255
  %1391 = vmatpush.msra.mxu0 %v1252
  %1392 = vmatpush.msra.mxu0 %v1249
  %1393 = vmatpush.msra.mxu0 %v1246
  %1394 = vmatpush.msra.mxu0 %v1243
  %1395 = vmatmul.f32.gmra.mxu0 %v1233
  %v1396 = vpop.f32.mrf.mxu0
  %v1397 = vadd.f32 %v1293, %v1396
  %1398 = vmatmul.f32.gmra.mxu0 %v1234
  %v1399 = vpop.f32.mrf.mxu0
  %v1400 = vadd.f32 %v1293, %v1399
  %1401 = vmatmul.f32.gmra.mxu0 %v1235
  %v1402 = vpop.f32.mrf.mxu0
  %v1403 = vadd.f32 %v1293, %v1402
  %1404 = vmatmul.f32.gmra.mxu0 %v1236
  %v1405 = vpop.f32.mrf.mxu0
  %v1406 = vadd.f32 %v1293, %v1405
  %1407 = vmatmul.f32.gmra.mxu0 %v1237
  %v1408 = vpop.f32.mrf.mxu0
  %v1409 = vadd.f32 %v1293, %v1408
  %1410 = vmatmul.f32.gmra.mxu0 %v1238
  %v1411 = vpop.f32.mrf.mxu0
  %v1412 = vadd.f32 %v1293, %v1411
  %1413 = vmatmul.f32.gmra.mxu0 %v1239
  %v1414 = vpop.f32.mrf.mxu0
  %v1415 = vadd.f32 %v1293, %v1414
  %1416 = vmatmul.f32.gmra.mxu0 %v1240
  %v1417 = vpop.f32.mrf.mxu0
  %v1418 = vadd.f32 %v1293, %v1417
  %1419 = vdwg.mxu0
  %1420 = vst [vmem:[#allocation2] sm:$0xff] %v1315
  %1421 = vst [vmem:[#allocation2 + $0x8] sm:$0xff] %v1356
  %1422 = vst [vmem:[#allocation2 + $0x10] sm:$0xff] %v1397
  %1423 = vst [vmem:[#allocation2 + $0x18] sm:$0xff] %v1318
  %1424 = vst [vmem:[#allocation2 + $0x20] sm:$0xff] %v1359
  %1425 = vst [vmem:[#allocation2 + $0x28] sm:$0xff] %v1400
  %1426 = vst [vmem:[#allocation2 + $0x30] sm:$0xff] %v1321
  %1427 = vst [vmem:[#allocation2 + $0x38] sm:$0xff] %v1362
  %1428 = vst [vmem:[#allocation2 + $0x40] sm:$0xff] %v1403
  %1429 = vst [vmem:[#allocation2 + $0x48] sm:$0xff] %v1324
  %1430 = vst [vmem:[#allocation2 + $0x50] sm:$0xff] %v1365
  %1431 = vst [vmem:[#allocation2 + $0x58] sm:$0xff] %v1406
  %1432 = vst [vmem:[#allocation2 + $0x60] sm:$0xff] %v1327
  %1433 = vst [vmem:[#allocation2 + $0x68] sm:$0xff] %v1368
  %1434 = vst [vmem:[#allocation2 + $0x70] sm:$0xff] %v1409
  %1435 = vst [vmem:[#allocation2 + $0x78] sm:$0xff] %v1330
  %1436 = vst [vmem:[#allocation2 + $0x80] sm:$0xff] %v1371
  %1437 = vst [vmem:[#allocation2 + $0x88] sm:$0xff] %v1412
  %1438 = vst [vmem:[#allocation2 + $0x90] sm:$0xff] %v1333
  %1439 = vst [vmem:[#allocation2 + $0x98] sm:$0xff] %v1374
  %1440 = vst [vmem:[#allocation2 + $0xa0] sm:$0xff] %v1415
  %1441 = vst [vmem:[#allocation2 + $0xa8] sm:$0xff] %v1336
  %1442 = vst [vmem:[#allocation2 + $0xb0] sm:$0xff] %v1377
  %1443 = vst [vmem:[#allocation2 + $0xb8] sm:$0xff] %v1418
  %v1444 = vld [vmem:[%s7] sm:$0xff]
  %v1445 = vld [vmem:[%s7 + $0x8] sm:$0xff]
  %v1446 = vld [vmem:[%s7 + $0x10] sm:$0xff]
  %v1447 = vld [vmem:[%s7 + $0x18] sm:$0xff]
  %v1448 = vld [vmem:[%s7 + $0x20] sm:$0xff]
  %v1449 = vld [vmem:[%s7 + $0x28] sm:$0xff]
  %v1450 = vld [vmem:[%s7 + $0x30] sm:$0xff]
  %v1451 = vld [vmem:[%s7 + $0x38] sm:$0xff]
  %v1452 = vld [vmem:[%s7 + $0x40] sm:$0xff]
  %v1453 = vld [vmem:[%s7 + $0x48] sm:$0xff]
  %v1454 = vld [vmem:[%s7 + $0x50] sm:$0xff]
  %v1455 = vld [vmem:[%s7 + $0x58] sm:$0xff]
  %v1456 = vld [vmem:[%s7 + $0x60] sm:$0xff]
  %v1457 = vld [vmem:[%s7 + $0x68] sm:$0xff]
  %v1458 = vld [vmem:[%s7 + $0x70] sm:$0xff]
  %v1459 = vld [vmem:[%s7 + $0x78] sm:$0xff]
  %v1460 = vld [vmem:[%s7 + $0x80] sm:$0xff]
  %v1461 = vld [vmem:[%s7 + $0x88] sm:$0xff]
  %v1462 = vld [vmem:[%s7 + $0x90] sm:$0xff]
  %v1463 = vld [vmem:[%s7 + $0x98] sm:$0xff]
  %v1464 = vld [vmem:[%s7 + $0xa0] sm:$0xff]
  %v1465 = vld [vmem:[%s7 + $0xa8] sm:$0xff]
  %v1466 = vld [vmem:[%s7 + $0xb0] sm:$0xff]
  %v1467 = vld [vmem:[%s7 + $0xb8] sm:$0xff]
  %v1468 = vld [vmem:[%s7 + $0xc0] sm:$0xff]
  %v1469 = vld [vmem:[%s7 + $0xc8] sm:$0xff]
  %v1470 = vld [vmem:[%s7 + $0xd0] sm:$0xff]
  %v1471 = vld [vmem:[%s7 + $0xd8] sm:$0xff]
  %v1472 = vld [vmem:[%s7 + $0xe0] sm:$0xff]
  %v1473 = vld [vmem:[%s7 + $0xe8] sm:$0xff]
  %v1474 = vld [vmem:[%s7 + $0xf0] sm:$0xff]
  %v1475 = vld [vmem:[%s7 + $0xf8] sm:$0xff]
  %v1476 = vld [vmem:[%s7 + $0x100] sm:$0xff]
  %v1477 = vld [vmem:[%s7 + $0x108] sm:$0xff]
  %v1478 = vld [vmem:[%s7 + $0x110] sm:$0xff]
  %v1479 = vld [vmem:[%s7 + $0x118] sm:$0xff]
  %v1480 = vld [vmem:[%s7 + $0x120] sm:$0xff]
  %v1481 = vld [vmem:[%s7 + $0x128] sm:$0xff]
  %v1482 = vld [vmem:[%s7 + $0x130] sm:$0xff]
  %v1483 = vld [vmem:[%s7 + $0x138] sm:$0xff]
  %v1484 = vld [vmem:[%s7 + $0x140] sm:$0xff]
  %v1485 = vld [vmem:[%s7 + $0x148] sm:$0xff]
  %v1486 = vld [vmem:[%s7 + $0x150] sm:$0xff]
  %v1487 = vld [vmem:[%s7 + $0x158] sm:$0xff]
  %v1488 = vld [vmem:[%s7 + $0x160] sm:$0xff]
  %v1489 = vld [vmem:[%s7 + $0x168] sm:$0xff]
  %v1490 = vld [vmem:[%s7 + $0x170] sm:$0xff]
  %v1491 = vld [vmem:[%s7 + $0x178] sm:$0xff]
  %v1492 = vld [vmem:[%s8] sm:$0x7]
  %v1494 = vperm.slane %v1492, 0
  %v1495 = vperm.slane %v1492, 1
  %v1496 = vperm.slane %v1492, 2
  %v1500 = vld [vmem:[%s315] sm:$0xff]
  %v1501 = vld [vmem:[%s315 + $0x8] sm:$0xff]
  %v1502 = vld [vmem:[%s315 + $0x10] sm:$0xff]
  %1503 = vmatpush.msra.mxu0 %v1489
  %1504 = vmatpush.msra.mxu0 %v1486
  %1505 = vmatpush.msra.mxu0 %v1483
  %1506 = vmatpush.msra.mxu0 %v1480
  %1507 = vmatpush.msra.mxu0 %v1477
  %1508 = vmatpush.msra.mxu0 %v1474
  %1509 = vmatpush.msra.mxu0 %v1471
  %1510 = vmatpush.msra.mxu0 %v1468
  %1511 = vmatpush.msra.mxu0 %v1465
  %1512 = vmatpush.msra.mxu0 %v1462
  %1513 = vmatpush.msra.mxu0 %v1459
  %1514 = vmatpush.msra.mxu0 %v1456
  %1515 = vmatpush.msra.mxu0 %v1453
  %1516 = vmatpush.msra.mxu0 %v1450
  %1517 = vmatpush.msra.mxu0 %v1447
  %1518 = vmatpush.msra.mxu0 %v1444
  %1519 = vmatmul.f32.gmra.mxu0 0.0
  %v1520 = vpop.f32.mrf.mxu0
  %v1521 = vadd.f32 %v1494, %v1520
  %1522 = vdwg.mxu0
  %1523 = vmatpush.msra.mxu0 %v1490
  %1524 = vmatpush.msra.mxu0 %v1487
  %1525 = vmatpush.msra.mxu0 %v1484
  %1526 = vmatpush.msra.mxu0 %v1481
  %1527 = vmatpush.msra.mxu0 %v1478
  %1528 = vmatpush.msra.mxu0 %v1475
  %1529 = vmatpush.msra.mxu0 %v1472
  %1530 = vmatpush.msra.mxu0 %v1469
  %1531 = vmatpush.msra.mxu0 %v1466
  %1532 = vmatpush.msra.mxu0 %v1463
  %1533 = vmatpush.msra.mxu0 %v1460
  %1534 = vmatpush.msra.mxu0 %v1457
  %1535 = vmatpush.msra.mxu0 %v1454
  %1536 = vmatpush.msra.mxu0 %v1451
  %1537 = vmatpush.msra.mxu0 %v1448
  %1538 = vmatpush.msra.mxu0 %v1445
  %1539 = vmatmul.f32.gmra.mxu0 0.0
  %v1540 = vpop.f32.mrf.mxu0
  %v1541 = vadd.f32 %v1495, %v1540
  %1542 = vdwg.mxu0
  %1543 = vmatpush.msra.mxu0 %v1491
  %1544 = vmatpush.msra.mxu0 %v1488
  %1545 = vmatpush.msra.mxu0 %v1485
  %1546 = vmatpush.msra.mxu0 %v1482
  %1547 = vmatpush.msra.mxu0 %v1479
  %1548 = vmatpush.msra.mxu0 %v1476
  %1549 = vmatpush.msra.mxu0 %v1473
  %1550 = vmatpush.msra.mxu0 %v1470
  %1551 = vmatpush.msra.mxu0 %v1467
  %1552 = vmatpush.msra.mxu0 %v1464
  %1553 = vmatpush.msra.mxu0 %v1461
  %1554 = vmatpush.msra.mxu0 %v1458
  %1555 = vmatpush.msra.mxu0 %v1455
  %1556 = vmatpush.msra.mxu0 %v1452
  %1557 = vmatpush.msra.mxu0 %v1449
  %1558 = vmatpush.msra.mxu0 %v1446
  %1559 = vmatmul.f32.gmra.mxu0 0.0
  %v1560 = vpop.f32.mrf.mxu0
  %v1561 = vadd.f32 %v1496, %v1560
  %1562 = vdwg.mxu0
  %v1563 = vadd.f32 %v1500, %v1521
  %v1564 = vxor.u32 %v1563, 2147483648
  %v1565 = vmul.f32 %v1564, 1.442695
  %v1566 = vpow.pop %v1565
  %v1567 = vadd.f32 %v1566, 1.0
  %v1568 = vrcp.pop %v1567
  %v1569 = vmul.f32 %v1567, %v1568
  %v1570 = vsub.f32 1.0, %v1569
  %v1571 = vmul.f32 %v1568, %v1570
  %v1572 = vadd.f32 %v1568, %v1571
  %vm1573 = vweird.f32 %v1567
  %vm1574 = vweird.f32 %v1568
  %vm1575 = vmor %vm1573, %vm1574
  %v1576 = vsel %vm1575, %v1568, %v1572
  %v1577 = vand.u32 2147483647, %v1567
  %vm1578 = vcmp.eq.f32.partialorder %v1577, 8.507059e+37
  %v1579 = vand.u32 %v1567, 2147483648
  %v1580 = vor.u32 1.1754944e-38, %v1579
  %v1581 = vsel %vm1578, %v1580, %v1576
  %v1582 = vmul.f32 1.0, %v1581
  %v1583 = vadd.f32 %v1501, %v1541
  %v1584 = vxor.u32 %v1583, 2147483648
  %v1585 = vmul.f32 %v1584, 1.442695
  %v1586 = vpow.pop %v1585
  %v1587 = vadd.f32 %v1586, 1.0
  %v1588 = vrcp.pop %v1587
  %v1589 = vmul.f32 %v1587, %v1588
  %v1590 = vsub.f32 1.0, %v1589
  %v1591 = vmul.f32 %v1588, %v1590
  %v1592 = vadd.f32 %v1588, %v1591
  %vm1593 = vweird.f32 %v1587
  %vm1594 = vweird.f32 %v1588
  %vm1595 = vmor %vm1593, %vm1594
  %v1596 = vsel %vm1595, %v1588, %v1592
  %v1597 = vand.u32 2147483647, %v1587
  %vm1598 = vcmp.eq.f32.partialorder %v1597, 8.507059e+37
  %v1599 = vand.u32 %v1587, 2147483648
  %v1600 = vor.u32 1.1754944e-38, %v1599
  %v1601 = vsel %vm1598, %v1600, %v1596
  %v1602 = vmul.f32 1.0, %v1601
  %v1603 = vmul.f32 %v1582, %v1561
  %v1604 = vadd.f32 %v1502, %v1603
  %v1605 = vtanh.pop %v1604
  %v1606 = vsub.f32 1.0, %v1602
  %v1607 = vmul.f32 %v1606, %v1605
  %v1608 = vmul.f32 %v1602, 0.0
  %v1609 = vadd.f32 %v1607, %v1608
  %1610 = vst [vmem:[#allocation3] sm:$0xff] %v1609
  %v1611 = vld [vmem:[%s429] sm:$0xff]
  %v1612 = vld [vmem:[%s429 + $0x8] sm:$0xff]
  %v1613 = vld [vmem:[%s429 + $0x10] sm:$0xff]
  %1614 = vmatpush.msra.mxu0 %v1489
  %1615 = vmatpush.msra.mxu0 %v1486
  %1616 = vmatpush.msra.mxu0 %v1483
  %1617 = vmatpush.msra.mxu0 %v1480
  %1618 = vmatpush.msra.mxu0 %v1477
  %1619 = vmatpush.msra.mxu0 %v1474
  %1620 = vmatpush.msra.mxu0 %v1471
  %1621 = vmatpush.msra.mxu0 %v1468
  %1622 = vmatpush.msra.mxu0 %v1465
  %1623 = vmatpush.msra.mxu0 %v1462
  %1624 = vmatpush.msra.mxu0 %v1459
  %1625 = vmatpush.msra.mxu0 %v1456
  %1626 = vmatpush.msra.mxu0 %v1453
  %1627 = vmatpush.msra.mxu0 %v1450
  %1628 = vmatpush.msra.mxu0 %v1447
  %1629 = vmatpush.msra.mxu0 %v1444
  %1630 = vmatmul.f32.gmra.mxu0 %v1609
  %v1631 = vpop.f32.mrf.mxu0
  %v1632 = vadd.f32 %v1494, %v1631
  %1633 = vdwg.mxu0
  %1634 = vmatpush.msra.mxu0 %v1490
  %1635 = vmatpush.msra.mxu0 %v1487
  %1636 = vmatpush.msra.mxu0 %v1484
  %1637 = vmatpush.msra.mxu0 %v1481
  %1638 = vmatpush.msra.mxu0 %v1478
  %1639 = vmatpush.msra.mxu0 %v1475
  %1640 = vmatpush.msra.mxu0 %v1472
  %1641 = vmatpush.msra.mxu0 %v1469
  %1642 = vmatpush.msra.mxu0 %v1466
  %1643 = vmatpush.msra.mxu0 %v1463
  %1644 = vmatpush.msra.mxu0 %v1460
  %1645 = vmatpush.msra.mxu0 %v1457
  %1646 = vmatpush.msra.mxu0 %v1454
  %1647 = vmatpush.msra.mxu0 %v1451
  %1648 = vmatpush.msra.mxu0 %v1448
  %1649 = vmatpush.msra.mxu0 %v1445
  %1650 = vmatmul.f32.gmra.mxu0 %v1609
  %v1651 = vpop.f32.mrf.mxu0
  %v1652 = vadd.f32 %v1495, %v1651
  %1653 = vdwg.mxu0
  %1654 = vmatpush.msra.mxu0 %v1491
  %1655 = vmatpush.msra.mxu0 %v1488
  %1656 = vmatpush.msra.mxu0 %v1485
  %1657 = vmatpush.msra.mxu0 %v1482
  %1658 = vmatpush.msra.mxu0 %v1479
  %1659 = vmatpush.msra.mxu0 %v1476
  %1660 = vmatpush.msra.mxu0 %v1473
  %1661 = vmatpush.msra.mxu0 %v1470
  %1662 = vmatpush.msra.mxu0 %v1467
  %1663 = vmatpush.msra.mxu0 %v1464
  %1664 = vmatpush.msra.mxu0 %v1461
  %1665 = vmatpush.msra.mxu0 %v1458
  %1666 = vmatpush.msra.mxu0 %v1455
  %1667 = vmatpush.msra.mxu0 %v1452
  %1668 = vmatpush.msra.mxu0 %v1449
  %1669 = vmatpush.msra.mxu0 %v1446
  %1670 = vmatmul.f32.gmra.mxu0 %v1609
  %v1671 = vpop.f32.mrf.mxu0
  %v1672 = vadd.f32 %v1496, %v1671
  %1673 = vdwg.mxu0
  %v1674 = vadd.f32 %v1611, %v1632
  %v1675 = vxor.u32 %v1674, 2147483648
  %v1676 = vmul.f32 %v1675, 1.442695
  %v1677 = vpow.pop %v1676
  %v1678 = vadd.f32 %v1677, 1.0
  %v1679 = vrcp.pop %v1678
  %v1680 = vmul.f32 %v1678, %v1679
  %v1681 = vsub.f32 1.0, %v1680
  %v1682 = vmul.f32 %v1679, %v1681
  %v1683 = vadd.f32 %v1679, %v1682
  %vm1684 = vweird.f32 %v1678
  %vm1685 = vweird.f32 %v1679
  %vm1686 = vmor %vm1684, %vm1685
  %v1687 = vsel %vm1686, %v1679, %v1683
  %v1688 = vand.u32 2147483647, %v1678
  %vm1689 = vcmp.eq.f32.partialorder %v1688, 8.507059e+37
  %v1690 = vand.u32 %v1678, 2147483648
  %v1691 = vor.u32 1.1754944e-38, %v1690
  %v1692 = vsel %vm1689, %v1691, %v1687
  %v1693 = vmul.f32 1.0, %v1692
  %v1694 = vadd.f32 %v1612, %v1652
  %v1695 = vxor.u32 %v1694, 2147483648
  %v1696 = vmul.f32 %v1695, 1.442695
  %v1697 = vpow.pop %v1696
  %v1698 = vadd.f32 %v1697, 1.0
  %v1699 = vrcp.pop %v1698
  %v1700 = vmul.f32 %v1698, %v1699
  %v1701 = vsub.f32 1.0, %v1700
  %v1702 = vmul.f32 %v1699, %v1701
  %v1703 = vadd.f32 %v1699, %v1702
  %vm1704 = vweird.f32 %v1698
  %vm1705 = vweird.f32 %v1699
  %vm1706 = vmor %vm1704, %vm1705
  %v1707 = vsel %vm1706, %v1699, %v1703
  %v1708 = vand.u32 2147483647, %v1698
  %vm1709 = vcmp.eq.f32.partialorder %v1708, 8.507059e+37
  %v1710 = vand.u32 %v1698, 2147483648
  %v1711 = vor.u32 1.1754944e-38, %v1710
  %v1712 = vsel %vm1709, %v1711, %v1707
  %v1713 = vmul.f32 1.0, %v1712
  %v1714 = vmul.f32 %v1693, %v1672
  %v1715 = vadd.f32 %v1613, %v1714
  %v1716 = vtanh.pop %v1715
  %v1717 = vsub.f32 1.0, %v1713
  %v1718 = vmul.f32 %v1717, %v1716
  %v1719 = vmul.f32 %v1713, %v1609
  %v1720 = vadd.f32 %v1718, %v1719
  %1721 = vst [vmem:[%s540] sm:$0xff] %v1720
  %v1722 = vld [vmem:[%s544] sm:$0xff]
  %v1723 = vld [vmem:[%s544 + $0x8] sm:$0xff]
  %v1724 = vld [vmem:[%s544 + $0x10] sm:$0xff]
  %1725 = vmatpush.msra.mxu0 %v1489
  %1726 = vmatpush.msra.mxu0 %v1486
  %1727 = vmatpush.msra.mxu0 %v1483
  %1728 = vmatpush.msra.mxu0 %v1480
  %1729 = vmatpush.msra.mxu0 %v1477
  %1730 = vmatpush.msra.mxu0 %v1474
  %1731 = vmatpush.msra.mxu0 %v1471
  %1732 = vmatpush.msra.mxu0 %v1468
  %1733 = vmatpush.msra.mxu0 %v1465
  %1734 = vmatpush.msra.mxu0 %v1462
  %1735 = vmatpush.msra.mxu0 %v1459
  %1736 = vmatpush.msra.mxu0 %v1456
  %1737 = vmatpush.msra.mxu0 %v1453
  %1738 = vmatpush.msra.mxu0 %v1450
  %1739 = vmatpush.msra.mxu0 %v1447
  %1740 = vmatpush.msra.mxu0 %v1444
  %1741 = vmatmul.f32.gmra.mxu0 %v1720
  %v1742 = vpop.f32.mrf.mxu0
  %v1743 = vadd.f32 %v1494, %v1742
  %1744 = vdwg.mxu0
  %1745 = vmatpush.msra.mxu0 %v1490
  %1746 = vmatpush.msra.mxu0 %v1487
  %1747 = vmatpush.msra.mxu0 %v1484
  %1748 = vmatpush.msra.mxu0 %v1481
  %1749 = vmatpush.msra.mxu0 %v1478
  %1750 = vmatpush.msra.mxu0 %v1475
  %1751 = vmatpush.msra.mxu0 %v1472
  %1752 = vmatpush.msra.mxu0 %v1469
  %1753 = vmatpush.msra.mxu0 %v1466
  %1754 = vmatpush.msra.mxu0 %v1463
  %1755 = vmatpush.msra.mxu0 %v1460
  %1756 = vmatpush.msra.mxu0 %v1457
  %1757 = vmatpush.msra.mxu0 %v1454
  %1758 = vmatpush.msra.mxu0 %v1451
  %1759 = vmatpush.msra.mxu0 %v1448
  %1760 = vmatpush.msra.mxu0 %v1445
  %1761 = vmatmul.f32.gmra.mxu0 %v1720
  %v1762 = vpop.f32.mrf.mxu0
  %v1763 = vadd.f32 %v1495, %v1762
  %1764 = vdwg.mxu0
  %1765 = vmatpush.msra.mxu0 %v1491
  %1766 = vmatpush.msra.mxu0 %v1488
  %1767 = vmatpush.msra.mxu0 %v1485
  %1768 = vmatpush.msra.mxu0 %v1482
  %1769 = vmatpush.msra.mxu0 %v1479
  %1770 = vmatpush.msra.mxu0 %v1476
  %1771 = vmatpush.msra.mxu0 %v1473
  %1772 = vmatpush.msra.mxu0 %v1470
  %1773 = vmatpush.msra.mxu0 %v1467
  %1774 = vmatpush.msra.mxu0 %v1464
  %1775 = vmatpush.msra.mxu0 %v1461
  %1776 = vmatpush.msra.mxu0 %v1458
  %1777 = vmatpush.msra.mxu0 %v1455
  %1778 = vmatpush.msra.mxu0 %v1452
  %1779 = vmatpush.msra.mxu0 %v1449
  %1780 = vmatpush.msra.mxu0 %v1446
  %1781 = vmatmul.f32.gmra.mxu0 %v1720
  %v1782 = vpop.f32.mrf.mxu0
  %v1783 = vadd.f32 %v1496, %v1782
  %1784 = vdwg.mxu0
  %v1785 = vadd.f32 %v1722, %v1743
  %v1786 = vxor.u32 %v1785, 2147483648
  %v1787 = vmul.f32 %v1786, 1.442695
  %v1788 = vpow.pop %v1787
  %v1789 = vadd.f32 %v1788, 1.0
  %v1790 = vrcp.pop %v1789
  %v1791 = vmul.f32 %v1789, %v1790
  %v1792 = vsub.f32 1.0, %v1791
  %v1793 = vmul.f32 %v1790, %v1792
  %v1794 = vadd.f32 %v1790, %v1793
  %vm1795 = vweird.f32 %v1789
  %vm1796 = vweird.f32 %v1790
  %vm1797 = vmor %vm1795, %vm1796
  %v1798 = vsel %vm1797, %v1790, %v1794
  %v1799 = vand.u32 2147483647, %v1789
  %vm1800 = vcmp.eq.f32.partialorder %v1799, 8.507059e+37
  %v1801 = vand.u32 %v1789, 2147483648
  %v1802 = vor.u32 1.1754944e-38, %v1801
  %v1803 = vsel %vm1800, %v1802, %v1798
  %v1804 = vmul.f32 1.0, %v1803
  %v1805 = vadd.f32 %v1723, %v1763
  %v1806 = vxor.u32 %v1805, 2147483648
  %v1807 = vmul.f32 %v1806, 1.442695
  %v1808 = vpow.pop %v1807
  %v1809 = vadd.f32 %v1808, 1.0
  %v1810 = vrcp.pop %v1809
  %v1811 = vmul.f32 %v1809, %v1810
  %v1812 = vsub.f32 1.0, %v1811
  %v1813 = vmul.f32 %v1810, %v1812
  %v1814 = vadd.f32 %v1810, %v1813
  %vm1815 = vweird.f32 %v1809
  %vm1816 = vweird.f32 %v1810
  %vm1817 = vmor %vm1815, %vm1816
  %v1818 = vsel %vm1817, %v1810, %v1814
  %v1819 = vand.u32 2147483647, %v1809
  %vm1820 = vcmp.eq.f32.partialorder %v1819, 8.507059e+37
  %v1821 = vand.u32 %v1809, 2147483648
  %v1822 = vor.u32 1.1754944e-38, %v1821
  %v1823 = vsel %vm1820, %v1822, %v1818
  %v1824 = vmul.f32 1.0, %v1823
  %v1825 = vmul.f32 %v1804, %v1783
  %v1826 = vadd.f32 %v1724, %v1825
  %v1827 = vtanh.pop %v1826
  %v1828 = vsub.f32 1.0, %v1824
  %v1829 = vmul.f32 %v1828, %v1827
  %v1830 = vmul.f32 %v1824, %v1720
  %v1831 = vadd.f32 %v1829, %v1830
  %1832 = vst [vmem:[%s655] sm:$0xff] %v1831
  %v1833 = vld [vmem:[%s659] sm:$0xff]
  %v1834 = vld [vmem:[%s659 + $0x8] sm:$0xff]
  %v1835 = vld [vmem:[%s659 + $0x10] sm:$0xff]
  %1836 = vmatpush.msra.mxu0 %v1489
  %1837 = vmatpush.msra.mxu0 %v1486
  %1838 = vmatpush.msra.mxu0 %v1483
  %1839 = vmatpush.msra.mxu0 %v1480
  %1840 = vmatpush.msra.mxu0 %v1477
  %1841 = vmatpush.msra.mxu0 %v1474
  %1842 = vmatpush.msra.mxu0 %v1471
  %1843 = vmatpush.msra.mxu0 %v1468
  %1844 = vmatpush.msra.mxu0 %v1465
  %1845 = vmatpush.msra.mxu0 %v1462
  %1846 = vmatpush.msra.mxu0 %v1459
  %1847 = vmatpush.msra.mxu0 %v1456
  %1848 = vmatpush.msra.mxu0 %v1453
  %1849 = vmatpush.msra.mxu0 %v1450
  %1850 = vmatpush.msra.mxu0 %v1447
  %1851 = vmatpush.msra.mxu0 %v1444
  %1852 = vmatmul.f32.gmra.mxu0 %v1831
  %v1853 = vpop.f32.mrf.mxu0
  %v1854 = vadd.f32 %v1494, %v1853
  %1855 = vdwg.mxu0
  %1856 = vmatpush.msra.mxu0 %v1490
  %1857 = vmatpush.msra.mxu0 %v1487
  %1858 = vmatpush.msra.mxu0 %v1484
  %1859 = vmatpush.msra.mxu0 %v1481
  %1860 = vmatpush.msra.mxu0 %v1478
  %1861 = vmatpush.msra.mxu0 %v1475
  %1862 = vmatpush.msra.mxu0 %v1472
  %1863 = vmatpush.msra.mxu0 %v1469
  %1864 = vmatpush.msra.mxu0 %v1466
  %1865 = vmatpush.msra.mxu0 %v1463
  %1866 = vmatpush.msra.mxu0 %v1460
  %1867 = vmatpush.msra.mxu0 %v1457
  %1868 = vmatpush.msra.mxu0 %v1454
  %1869 = vmatpush.msra.mxu0 %v1451
  %1870 = vmatpush.msra.mxu0 %v1448
  %1871 = vmatpush.msra.mxu0 %v1445
  %1872 = vmatmul.f32.gmra.mxu0 %v1831
  %v1873 = vpop.f32.mrf.mxu0
  %v1874 = vadd.f32 %v1495, %v1873
  %1875 = vdwg.mxu0
  %1876 = vmatpush.msra.mxu0 %v1491
  %1877 = vmatpush.msra.mxu0 %v1488
  %1878 = vmatpush.msra.mxu0 %v1485
  %1879 = vmatpush.msra.mxu0 %v1482
  %1880 = vmatpush.msra.mxu0 %v1479
  %1881 = vmatpush.msra.mxu0 %v1476
  %1882 = vmatpush.msra.mxu0 %v1473
  %1883 = vmatpush.msra.mxu0 %v1470
  %1884 = vmatpush.msra.mxu0 %v1467
  %1885 = vmatpush.msra.mxu0 %v1464
  %1886 = vmatpush.msra.mxu0 %v1461
  %1887 = vmatpush.msra.mxu0 %v1458
  %1888 = vmatpush.msra.mxu0 %v1455
  %1889 = vmatpush.msra.mxu0 %v1452
  %1890 = vmatpush.msra.mxu0 %v1449
  %1891 = vmatpush.msra.mxu0 %v1446
  %1892 = vmatmul.f32.gmra.mxu0 %v1831
  %v1893 = vpop.f32.mrf.mxu0
  %v1894 = vadd.f32 %v1496, %v1893
  %1895 = vdwg.mxu0
  %v1896 = vadd.f32 %v1833, %v1854
  %v1897 = vxor.u32 %v1896, 2147483648
  %v1898 = vmul.f32 %v1897, 1.442695
  %v1899 = vpow.pop %v1898
  %v1900 = vadd.f32 %v1899, 1.0
  %v1901 = vrcp.pop %v1900
  %v1902 = vmul.f32 %v1900, %v1901
  %v1903 = vsub.f32 1.0, %v1902
  %v1904 = vmul.f32 %v1901, %v1903
  %v1905 = vadd.f32 %v1901, %v1904
  %vm1906 = vweird.f32 %v1900
  %vm1907 = vweird.f32 %v1901
  %vm1908 = vmor %vm1906, %vm1907
  %v1909 = vsel %vm1908, %v1901, %v1905
  %v1910 = vand.u32 2147483647, %v1900
  %vm1911 = vcmp.eq.f32.partialorder %v1910, 8.507059e+37
  %v1912 = vand.u32 %v1900, 2147483648
  %v1913 = vor.u32 1.1754944e-38, %v1912
  %v1914 = vsel %vm1911, %v1913, %v1909
  %v1915 = vmul.f32 1.0, %v1914
  %v1916 = vadd.f32 %v1834, %v1874
  %v1917 = vxor.u32 %v1916, 2147483648
  %v1918 = vmul.f32 %v1917, 1.442695
  %v1919 = vpow.pop %v1918
  %v1920 = vadd.f32 %v1919, 1.0
  %v1921 = vrcp.pop %v1920
  %v1922 = vmul.f32 %v1920, %v1921
  %v1923 = vsub.f32 1.0, %v1922
  %v1924 = vmul.f32 %v1921, %v1923
  %v1925 = vadd.f32 %v1921, %v1924
  %vm1926 = vweird.f32 %v1920
  %vm1927 = vweird.f32 %v1921
  %vm1928 = vmor %vm1926, %vm1927
  %v1929 = vsel %vm1928, %v1921, %v1925
  %v1930 = vand.u32 2147483647, %v1920
  %vm1931 = vcmp.eq.f32.partialorder %v1930, 8.507059e+37
  %v1932 = vand.u32 %v1920, 2147483648
  %v1933 = vor.u32 1.1754944e-38, %v1932
  %v1934 = vsel %vm1931, %v1933, %v1929
  %v1935 = vmul.f32 1.0, %v1934
  %v1936 = vmul.f32 %v1915, %v1894
  %v1937 = vadd.f32 %v1835, %v1936
  %v1938 = vtanh.pop %v1937
  %v1939 = vsub.f32 1.0, %v1935
  %v1940 = vmul.f32 %v1939, %v1938
  %v1941 = vmul.f32 %v1935, %v1831
  %v1942 = vadd.f32 %v1940, %v1941
  %1943 = vst [vmem:[%s770] sm:$0xff] %v1942
  %v1944 = vld [vmem:[%s774] sm:$0xff]
  %v1945 = vld [vmem:[%s774 + $0x8] sm:$0xff]
  %v1946 = vld [vmem:[%s774 + $0x10] sm:$0xff]
  %1947 = vmatpush.msra.mxu0 %v1489
  %1948 = vmatpush.msra.mxu0 %v1486
  %1949 = vmatpush.msra.mxu0 %v1483
  %1950 = vmatpush.msra.mxu0 %v1480
  %1951 = vmatpush.msra.mxu0 %v1477
  %1952 = vmatpush.msra.mxu0 %v1474
  %1953 = vmatpush.msra.mxu0 %v1471
  %1954 = vmatpush.msra.mxu0 %v1468
  %1955 = vmatpush.msra.mxu0 %v1465
  %1956 = vmatpush.msra.mxu0 %v1462
  %1957 = vmatpush.msra.mxu0 %v1459
  %1958 = vmatpush.msra.mxu0 %v1456
  %1959 = vmatpush.msra.mxu0 %v1453
  %1960 = vmatpush.msra.mxu0 %v1450
  %1961 = vmatpush.msra.mxu0 %v1447
  %1962 = vmatpush.msra.mxu0 %v1444
  %1963 = vmatmul.f32.gmra.mxu0 %v1942
  %v1964 = vpop.f32.mrf.mxu0
  %v1965 = vadd.f32 %v1494, %v1964
  %1966 = vdwg.mxu0
  %1967 = vmatpush.msra.mxu0 %v1490
  %1968 = vmatpush.msra.mxu0 %v1487
  %1969 = vmatpush.msra.mxu0 %v1484
  %1970 = vmatpush.msra.mxu0 %v1481
  %1971 = vmatpush.msra.mxu0 %v1478
  %1972 = vmatpush.msra.mxu0 %v1475
  %1973 = vmatpush.msra.mxu0 %v1472
  %1974 = vmatpush.msra.mxu0 %v1469
  %1975 = vmatpush.msra.mxu0 %v1466
  %1976 = vmatpush.msra.mxu0 %v1463
  %1977 = vmatpush.msra.mxu0 %v1460
  %1978 = vmatpush.msra.mxu0 %v1457
  %1979 = vmatpush.msra.mxu0 %v1454
  %1980 = vmatpush.msra.mxu0 %v1451
  %1981 = vmatpush.msra.mxu0 %v1448
  %1982 = vmatpush.msra.mxu0 %v1445
  %1983 = vmatmul.f32.gmra.mxu0 %v1942
  %v1984 = vpop.f32.mrf.mxu0
  %v1985 = vadd.f32 %v1495, %v1984
  %1986 = vdwg.mxu0
  %1987 = vmatpush.msra.mxu0 %v1491
  %1988 = vmatpush.msra.mxu0 %v1488
  %1989 = vmatpush.msra.mxu0 %v1485
  %1990 = vmatpush.msra.mxu0 %v1482
  %1991 = vmatpush.msra.mxu0 %v1479
  %1992 = vmatpush.msra.mxu0 %v1476
  %1993 = vmatpush.msra.mxu0 %v1473
  %1994 = vmatpush.msra.mxu0 %v1470
  %1995 = vmatpush.msra.mxu0 %v1467
  %1996 = vmatpush.msra.mxu0 %v1464
  %1997 = vmatpush.msra.mxu0 %v1461
  %1998 = vmatpush.msra.mxu0 %v1458
  %1999 = vmatpush.msra.mxu0 %v1455
  %2000 = vmatpush.msra.mxu0 %v1452
  %2001 = vmatpush.msra.mxu0 %v1449
  %2002 = vmatpush.msra.mxu0 %v1446
  %2003 = vmatmul.f32.gmra.mxu0 %v1942
  %v2004 = vpop.f32.mrf.mxu0
  %v2005 = vadd.f32 %v1496, %v2004
  %2006 = vdwg.mxu0
  %v2007 = vadd.f32 %v1944, %v1965
  %v2008 = vxor.u32 %v2007, 2147483648
  %v2009 = vmul.f32 %v2008, 1.442695
  %v2010 = vpow.pop %v2009
  %v2011 = vadd.f32 %v2010, 1.0
  %v2012 = vrcp.pop %v2011
  %v2013 = vmul.f32 %v2011, %v2012
  %v2014 = vsub.f32 1.0, %v2013
  %v2015 = vmul.f32 %v2012, %v2014
  %v2016 = vadd.f32 %v2012, %v2015
  %vm2017 = vweird.f32 %v2011
  %vm2018 = vweird.f32 %v2012
  %vm2019 = vmor %vm2017, %vm2018
  %v2020 = vsel %vm2019, %v2012, %v2016
  %v2021 = vand.u32 2147483647, %v2011
  %vm2022 = vcmp.eq.f32.partialorder %v2021, 8.507059e+37
  %v2023 = vand.u32 %v2011, 2147483648
  %v2024 = vor.u32 1.1754944e-38, %v2023
  %v2025 = vsel %vm2022, %v2024, %v2020
  %v2026 = vmul.f32 1.0, %v2025
  %v2027 = vadd.f32 %v1945, %v1985
  %v2028 = vxor.u32 %v2027, 2147483648
  %v2029 = vmul.f32 %v2028, 1.442695
  %v2030 = vpow.pop %v2029
  %v2031 = vadd.f32 %v2030, 1.0
  %v2032 = vrcp.pop %v2031
  %v2033 = vmul.f32 %v2031, %v2032
  %v2034 = vsub.f32 1.0, %v2033
  %v2035 = vmul.f32 %v2032, %v2034
  %v2036 = vadd.f32 %v2032, %v2035
  %vm2037 = vweird.f32 %v2031
  %vm2038 = vweird.f32 %v2032
  %vm2039 = vmor %vm2037, %vm2038
  %v2040 = vsel %vm2039, %v2032, %v2036
  %v2041 = vand.u32 2147483647, %v2031
  %vm2042 = vcmp.eq.f32.partialorder %v2041, 8.507059e+37
  %v2043 = vand.u32 %v2031, 2147483648
  %v2044 = vor.u32 1.1754944e-38, %v2043
  %v2045 = vsel %vm2042, %v2044, %v2040
  %v2046 = vmul.f32 1.0, %v2045
  %v2047 = vmul.f32 %v2026, %v2005
  %v2048 = vadd.f32 %v1946, %v2047
  %v2049 = vtanh.pop %v2048
  %v2050 = vsub.f32 1.0, %v2046
  %v2051 = vmul.f32 %v2050, %v2049
  %v2052 = vmul.f32 %v2046, %v1942
  %v2053 = vadd.f32 %v2051, %v2052
  %2054 = vst [vmem:[%s885] sm:$0xff] %v2053
  %v2055 = vld [vmem:[%s889] sm:$0xff]
  %v2056 = vld [vmem:[%s889 + $0x8] sm:$0xff]
  %v2057 = vld [vmem:[%s889 + $0x10] sm:$0xff]
  %2058 = vmatpush.msra.mxu0 %v1489
  %2059 = vmatpush.msra.mxu0 %v1486
  %2060 = vmatpush.msra.mxu0 %v1483
  %2061 = vmatpush.msra.mxu0 %v1480
  %2062 = vmatpush.msra.mxu0 %v1477
  %2063 = vmatpush.msra.mxu0 %v1474
  %2064 = vmatpush.msra.mxu0 %v1471
  %2065 = vmatpush.msra.mxu0 %v1468
  %2066 = vmatpush.msra.mxu0 %v1465
  %2067 = vmatpush.msra.mxu0 %v1462
  %2068 = vmatpush.msra.mxu0 %v1459
  %2069 = vmatpush.msra.mxu0 %v1456
  %2070 = vmatpush.msra.mxu0 %v1453
  %2071 = vmatpush.msra.mxu0 %v1450
  %2072 = vmatpush.msra.mxu0 %v1447
  %2073 = vmatpush.msra.mxu0 %v1444
  %2074 = vmatmul.f32.gmra.mxu0 %v2053
  %v2075 = vpop.f32.mrf.mxu0
  %v2076 = vadd.f32 %v1494, %v2075
  %2077 = vdwg.mxu0
  %2078 = vmatpush.msra.mxu0 %v1490
  %2079 = vmatpush.msra.mxu0 %v1487
  %2080 = vmatpush.msra.mxu0 %v1484
  %2081 = vmatpush.msra.mxu0 %v1481
  %2082 = vmatpush.msra.mxu0 %v1478
  %2083 = vmatpush.msra.mxu0 %v1475
  %2084 = vmatpush.msra.mxu0 %v1472
  %2085 = vmatpush.msra.mxu0 %v1469
  %2086 = vmatpush.msra.mxu0 %v1466
  %2087 = vmatpush.msra.mxu0 %v1463
  %2088 = vmatpush.msra.mxu0 %v1460
  %2089 = vmatpush.msra.mxu0 %v1457
  %2090 = vmatpush.msra.mxu0 %v1454
  %2091 = vmatpush.msra.mxu0 %v1451
  %2092 = vmatpush.msra.mxu0 %v1448
  %2093 = vmatpush.msra.mxu0 %v1445
  %2094 = vmatmul.f32.gmra.mxu0 %v2053
  %v2095 = vpop.f32.mrf.mxu0
  %v2096 = vadd.f32 %v1495, %v2095
  %2097 = vdwg.mxu0
  %2098 = vmatpush.msra.mxu0 %v1491
  %2099 = vmatpush.msra.mxu0 %v1488
  %2100 = vmatpush.msra.mxu0 %v1485
  %2101 = vmatpush.msra.mxu0 %v1482
  %2102 = vmatpush.msra.mxu0 %v1479
  %2103 = vmatpush.msra.mxu0 %v1476
  %2104 = vmatpush.msra.mxu0 %v1473
  %2105 = vmatpush.msra.mxu0 %v1470
  %2106 = vmatpush.msra.mxu0 %v1467
  %2107 = vmatpush.msra.mxu0 %v1464
  %2108 = vmatpush.msra.mxu0 %v1461
  %2109 = vmatpush.msra.mxu0 %v1458
  %2110 = vmatpush.msra.mxu0 %v1455
  %2111 = vmatpush.msra.mxu0 %v1452
  %2112 = vmatpush.msra.mxu0 %v1449
  %2113 = vmatpush.msra.mxu0 %v1446
  %2114 = vmatmul.f32.gmra.mxu0 %v2053
  %v2115 = vpop.f32.mrf.mxu0
  %v2116 = vadd.f32 %v1496, %v2115
  %2117 = vdwg.mxu0
  %v2118 = vadd.f32 %v2055, %v2076
  %v2119 = vxor.u32 %v2118, 2147483648
  %v2120 = vmul.f32 %v2119, 1.442695
  %v2121 = vpow.pop %v2120
  %v2122 = vadd.f32 %v2121, 1.0
  %v2123 = vrcp.pop %v2122
  %v2124 = vmul.f32 %v2122, %v2123
  %v2125 = vsub.f32 1.0, %v2124
  %v2126 = vmul.f32 %v2123, %v2125
  %v2127 = vadd.f32 %v2123, %v2126
  %vm2128 = vweird.f32 %v2122
  %vm2129 = vweird.f32 %v2123
  %vm2130 = vmor %vm2128, %vm2129
  %v2131 = vsel %vm2130, %v2123, %v2127
  %v2132 = vand.u32 2147483647, %v2122
  %vm2133 = vcmp.eq.f32.partialorder %v2132, 8.507059e+37
  %v2134 = vand.u32 %v2122, 2147483648
  %v2135 = vor.u32 1.1754944e-38, %v2134
  %v2136 = vsel %vm2133, %v2135, %v2131
  %v2137 = vmul.f32 1.0, %v2136
  %v2138 = vadd.f32 %v2056, %v2096
  %v2139 = vxor.u32 %v2138, 2147483648
  %v2140 = vmul.f32 %v2139, 1.442695
  %v2141 = vpow.pop %v2140
  %v2142 = vadd.f32 %v2141, 1.0
  %v2143 = vrcp.pop %v2142
  %v2144 = vmul.f32 %v2142, %v2143
  %v2145 = vsub.f32 1.0, %v2144
  %v2146 = vmul.f32 %v2143, %v2145
  %v2147 = vadd.f32 %v2143, %v2146
  %vm2148 = vweird.f32 %v2142
  %vm2149 = vweird.f32 %v2143
  %vm2150 = vmor %vm2148, %vm2149
  %v2151 = vsel %vm2150, %v2143, %v2147
  %v2152 = vand.u32 2147483647, %v2142
  %vm2153 = vcmp.eq.f32.partialorder %v2152, 8.507059e+37
  %v2154 = vand.u32 %v2142, 2147483648
  %v2155 = vor.u32 1.1754944e-38, %v2154
  %v2156 = vsel %vm2153, %v2155, %v2151
  %v2157 = vmul.f32 1.0, %v2156
  %v2158 = vmul.f32 %v2137, %v2116
  %v2159 = vadd.f32 %v2057, %v2158
  %v2160 = vtanh.pop %v2159
  %v2161 = vsub.f32 1.0, %v2157
  %v2162 = vmul.f32 %v2161, %v2160
  %v2163 = vmul.f32 %v2157, %v2053
  %v2164 = vadd.f32 %v2162, %v2163
  %2165 = vst [vmem:[%s1000] sm:$0xff] %v2164
  %v2166 = vld [vmem:[%s1004] sm:$0xff]
  %v2167 = vld [vmem:[%s1004 + $0x8] sm:$0xff]
  %v2168 = vld [vmem:[%s1004 + $0x10] sm:$0xff]
  %2169 = vmatpush.msra.mxu0 %v1489
  %2170 = vmatpush.msra.mxu0 %v1486
  %2171 = vmatpush.msra.mxu0 %v1483
  %2172 = vmatpush.msra.mxu0 %v1480
  %2173 = vmatpush.msra.mxu0 %v1477
  %2174 = vmatpush.msra.mxu0 %v1474
  %2175 = vmatpush.msra.mxu0 %v1471
  %2176 = vmatpush.msra.mxu0 %v1468
  %2177 = vmatpush.msra.mxu0 %v1465
  %2178 = vmatpush.msra.mxu0 %v1462
  %2179 = vmatpush.msra.mxu0 %v1459
  %2180 = vmatpush.msra.mxu0 %v1456
  %2181 = vmatpush.msra.mxu0 %v1453
  %2182 = vmatpush.msra.mxu0 %v1450
  %2183 = vmatpush.msra.mxu0 %v1447
  %2184 = vmatpush.msra.mxu0 %v1444
  %2185 = vmatmul.f32.gmra.mxu0 %v2164
  %v2186 = vpop.f32.mrf.mxu0
  %v2187 = vadd.f32 %v1494, %v2186
  %2188 = vdwg.mxu0
  %2189 = vmatpush.msra.mxu0 %v1490
  %2190 = vmatpush.msra.mxu0 %v1487
  %2191 = vmatpush.msra.mxu0 %v1484
  %2192 = vmatpush.msra.mxu0 %v1481
  %2193 = vmatpush.msra.mxu0 %v1478
  %2194 = vmatpush.msra.mxu0 %v1475
  %2195 = vmatpush.msra.mxu0 %v1472
  %2196 = vmatpush.msra.mxu0 %v1469
  %2197 = vmatpush.msra.mxu0 %v1466
  %2198 = vmatpush.msra.mxu0 %v1463
  %2199 = vmatpush.msra.mxu0 %v1460
  %2200 = vmatpush.msra.mxu0 %v1457
  %2201 = vmatpush.msra.mxu0 %v1454
  %2202 = vmatpush.msra.mxu0 %v1451
  %2203 = vmatpush.msra.mxu0 %v1448
  %2204 = vmatpush.msra.mxu0 %v1445
  %2205 = vmatmul.f32.gmra.mxu0 %v2164
  %v2206 = vpop.f32.mrf.mxu0
  %v2207 = vadd.f32 %v1495, %v2206
  %2208 = vdwg.mxu0
  %2209 = vmatpush.msra.mxu0 %v1491
  %2210 = vmatpush.msra.mxu0 %v1488
  %2211 = vmatpush.msra.mxu0 %v1485
  %2212 = vmatpush.msra.mxu0 %v1482
  %2213 = vmatpush.msra.mxu0 %v1479
  %2214 = vmatpush.msra.mxu0 %v1476
  %2215 = vmatpush.msra.mxu0 %v1473
  %2216 = vmatpush.msra.mxu0 %v1470
  %2217 = vmatpush.msra.mxu0 %v1467
  %2218 = vmatpush.msra.mxu0 %v1464
  %2219 = vmatpush.msra.mxu0 %v1461
  %2220 = vmatpush.msra.mxu0 %v1458
  %2221 = vmatpush.msra.mxu0 %v1455
  %2222 = vmatpush.msra.mxu0 %v1452
  %2223 = vmatpush.msra.mxu0 %v1449
  %2224 = vmatpush.msra.mxu0 %v1446
  %2225 = vmatmul.f32.gmra.mxu0 %v2164
  %v2226 = vpop.f32.mrf.mxu0
  %v2227 = vadd.f32 %v1496, %v2226
  %2228 = vdwg.mxu0
  %v2229 = vadd.f32 %v2166, %v2187
  %v2230 = vxor.u32 %v2229, 2147483648
  %v2231 = vmul.f32 %v2230, 1.442695
  %v2232 = vpow.pop %v2231
  %v2233 = vadd.f32 %v2232, 1.0
  %v2234 = vrcp.pop %v2233
  %v2235 = vmul.f32 %v2233, %v2234
  %v2236 = vsub.f32 1.0, %v2235
  %v2237 = vmul.f32 %v2234, %v2236
  %v2238 = vadd.f32 %v2234, %v2237
  %vm2239 = vweird.f32 %v2233
  %vm2240 = vweird.f32 %v2234
  %vm2241 = vmor %vm2239, %vm2240
  %v2242 = vsel %vm2241, %v2234, %v2238
  %v2243 = vand.u32 2147483647, %v2233
  %vm2244 = vcmp.eq.f32.partialorder %v2243, 8.507059e+37
  %v2245 = vand.u32 %v2233, 2147483648
  %v2246 = vor.u32 1.1754944e-38, %v2245
  %v2247 = vsel %vm2244, %v2246, %v2242
  %v2248 = vmul.f32 1.0, %v2247
  %v2249 = vadd.f32 %v2167, %v2207
  %v2250 = vxor.u32 %v2249, 2147483648
  %v2251 = vmul.f32 %v2250, 1.442695
  %v2252 = vpow.pop %v2251
  %v2253 = vadd.f32 %v2252, 1.0
  %v2254 = vrcp.pop %v2253
  %v2255 = vmul.f32 %v2253, %v2254
  %v2256 = vsub.f32 1.0, %v2255
  %v2257 = vmul.f32 %v2254, %v2256
  %v2258 = vadd.f32 %v2254, %v2257
  %vm2259 = vweird.f32 %v2253
  %vm2260 = vweird.f32 %v2254
  %vm2261 = vmor %vm2259, %vm2260
  %v2262 = vsel %vm2261, %v2254, %v2258
  %v2263 = vand.u32 2147483647, %v2253
  %vm2264 = vcmp.eq.f32.partialorder %v2263, 8.507059e+37
  %v2265 = vand.u32 %v2253, 2147483648
  %v2266 = vor.u32 1.1754944e-38, %v2265
  %v2267 = vsel %vm2264, %v2266, %v2262
  %v2268 = vmul.f32 1.0, %v2267
  %v2269 = vmul.f32 %v2248, %v2227
  %v2270 = vadd.f32 %v2168, %v2269
  %v2271 = vtanh.pop %v2270
  %v2272 = vsub.f32 1.0, %v2268
  %v2273 = vmul.f32 %v2272, %v2271
  %v2274 = vmul.f32 %v2268, %v2164
  %v2275 = vadd.f32 %v2273, %v2274
  %2276 = vst [vmem:[%s1115] sm:$0xff] %v2275
  %v2277 = vld [vmem:[%s1119] sm:$0xff]
  %v2278 = vld [vmem:[%s1119 + $0x8] sm:$0xff]
  %v2279 = vld [vmem:[%s1119 + $0x10] sm:$0xff]
  %2280 = vmatpush.msra.mxu0 %v1489
  %2281 = vmatpush.msra.mxu0 %v1486
  %2282 = vmatpush.msra.mxu0 %v1483
  %2283 = vmatpush.msra.mxu0 %v1480
  %2284 = vmatpush.msra.mxu0 %v1477
  %2285 = vmatpush.msra.mxu0 %v1474
  %2286 = vmatpush.msra.mxu0 %v1471
  %2287 = vmatpush.msra.mxu0 %v1468
  %2288 = vmatpush.msra.mxu0 %v1465
  %2289 = vmatpush.msra.mxu0 %v1462
  %2290 = vmatpush.msra.mxu0 %v1459
  %2291 = vmatpush.msra.mxu0 %v1456
  %2292 = vmatpush.msra.mxu0 %v1453
  %2293 = vmatpush.msra.mxu0 %v1450
  %2294 = vmatpush.msra.mxu0 %v1447
  %2295 = vmatpush.msra.mxu0 %v1444
  %2296 = vmatmul.f32.gmra.mxu0 %v2275
  %v2297 = vpop.f32.mrf.mxu0
  %v2298 = vadd.f32 %v1494, %v2297
  %2299 = vdwg.mxu0
  %2300 = vmatpush.msra.mxu0 %v1490
  %2301 = vmatpush.msra.mxu0 %v1487
  %2302 = vmatpush.msra.mxu0 %v1484
  %2303 = vmatpush.msra.mxu0 %v1481
  %2304 = vmatpush.msra.mxu0 %v1478
  %2305 = vmatpush.msra.mxu0 %v1475
  %2306 = vmatpush.msra.mxu0 %v1472
  %2307 = vmatpush.msra.mxu0 %v1469
  %2308 = vmatpush.msra.mxu0 %v1466
  %2309 = vmatpush.msra.mxu0 %v1463
  %2310 = vmatpush.msra.mxu0 %v1460
  %2311 = vmatpush.msra.mxu0 %v1457
  %2312 = vmatpush.msra.mxu0 %v1454
  %2313 = vmatpush.msra.mxu0 %v1451
  %2314 = vmatpush.msra.mxu0 %v1448
  %2315 = vmatpush.msra.mxu0 %v1445
  %2316 = vmatmul.f32.gmra.mxu0 %v2275
  %v2317 = vpop.f32.mrf.mxu0
  %v2318 = vadd.f32 %v1495, %v2317
  %2319 = vdwg.mxu0
  %2320 = vmatpush.msra.mxu0 %v1491
  %2321 = vmatpush.msra.mxu0 %v1488
  %2322 = vmatpush.msra.mxu0 %v1485
  %2323 = vmatpush.msra.mxu0 %v1482
  %2324 = vmatpush.msra.mxu0 %v1479
  %2325 = vmatpush.msra.mxu0 %v1476
  %2326 = vmatpush.msra.mxu0 %v1473
  %2327 = vmatpush.msra.mxu0 %v1470
  %2328 = vmatpush.msra.mxu0 %v1467
  %2329 = vmatpush.msra.mxu0 %v1464
  %2330 = vmatpush.msra.mxu0 %v1461
  %2331 = vmatpush.msra.mxu0 %v1458
  %2332 = vmatpush.msra.mxu0 %v1455
  %2333 = vmatpush.msra.mxu0 %v1452
  %2334 = vmatpush.msra.mxu0 %v1449
  %2335 = vmatpush.msra.mxu0 %v1446
  %2336 = vmatmul.f32.gmra.mxu0 %v2275
  %v2337 = vpop.f32.mrf.mxu0
  %v2338 = vadd.f32 %v1496, %v2337
  %2339 = vdwg.mxu0
  %v2340 = vadd.f32 %v2277, %v2298
  %v2341 = vxor.u32 %v2340, 2147483648
  %v2342 = vmul.f32 %v2341, 1.442695
  %v2343 = vpow.pop %v2342
  %v2344 = vadd.f32 %v2343, 1.0
  %v2345 = vrcp.pop %v2344
  %v2346 = vmul.f32 %v2344, %v2345
  %v2347 = vsub.f32 1.0, %v2346
  %v2348 = vmul.f32 %v2345, %v2347
  %v2349 = vadd.f32 %v2345, %v2348
  %vm2350 = vweird.f32 %v2344
  %vm2351 = vweird.f32 %v2345
  %vm2352 = vmor %vm2350, %vm2351
  %v2353 = vsel %vm2352, %v2345, %v2349
  %v2354 = vand.u32 2147483647, %v2344
  %vm2355 = vcmp.eq.f32.partialorder %v2354, 8.507059e+37
  %v2356 = vand.u32 %v2344, 2147483648
  %v2357 = vor.u32 1.1754944e-38, %v2356
  %v2358 = vsel %vm2355, %v2357, %v2353
  %v2359 = vmul.f32 1.0, %v2358
  %v2360 = vadd.f32 %v2278, %v2318
  %v2361 = vxor.u32 %v2360, 2147483648
  %v2362 = vmul.f32 %v2361, 1.442695
  %v2363 = vpow.pop %v2362
  %v2364 = vadd.f32 %v2363, 1.0
  %v2365 = vrcp.pop %v2364
  %v2366 = vmul.f32 %v2364, %v2365
  %v2367 = vsub.f32 1.0, %v2366
  %v2368 = vmul.f32 %v2365, %v2367
  %v2369 = vadd.f32 %v2365, %v2368
  %vm2370 = vweird.f32 %v2364
  %vm2371 = vweird.f32 %v2365
  %vm2372 = vmor %vm2370, %vm2371
  %v2373 = vsel %vm2372, %v2365, %v2369
  %v2374 = vand.u32 2147483647, %v2364
  %vm2375 = vcmp.eq.f32.partialorder %v2374, 8.507059e+37
  %v2376 = vand.u32 %v2364, 2147483648
  %v2377 = vor.u32 1.1754944e-38, %v2376
  %v2378 = vsel %vm2375, %v2377, %v2373
  %v2379 = vmul.f32 1.0, %v2378
  %v2380 = vmul.f32 %v2359, %v2338
  %v2381 = vadd.f32 %v2279, %v2380
  %v2382 = vtanh.pop %v2381
  %v2383 = vsub.f32 1.0, %v2379
  %v2384 = vmul.f32 %v2383, %v2382
  %v2385 = vmul.f32 %v2379, %v2275
  %v2386 = vadd.f32 %v2384, %v2385
  %2387 = vst [vmem:[%s1230] sm:$0xff] %v2386
  %s2388 = scalar_lea.vmem %s14, 8
  %2389 = vst [vmem:[%s2388] sm:$0xff] %v2386
  %v2390 = vld [vmem:[#allocation3] sm:$0xff]
  %v2391 = vld [vmem:[#allocation3 + $0x8] sm:$0xff]
  %v2392 = vld [vmem:[#allocation3 + $0x10] sm:$0xff]
  %v2393 = vld [vmem:[#allocation3 + $0x18] sm:$0xff]
  %v2394 = vld [vmem:[#allocation3 + $0x20] sm:$0xff]
  %v2395 = vld [vmem:[#allocation3 + $0x28] sm:$0xff]
  %v2396 = vld [vmem:[#allocation3 + $0x30] sm:$0xff]
  %v2397 = vld [vmem:[#allocation3 + $0x38] sm:$0xff]
  %v2398 = vld [vmem:[%s9] sm:$0xff]
  %v2399 = vld [vmem:[%s9 + $0x8] sm:$0xff]
  %v2400 = vld [vmem:[%s9 + $0x10] sm:$0xff]
  %v2401 = vld [vmem:[%s9 + $0x18] sm:$0xff]
  %v2402 = vld [vmem:[%s9 + $0x20] sm:$0xff]
  %v2403 = vld [vmem:[%s9 + $0x28] sm:$0xff]
  %v2404 = vld [vmem:[%s9 + $0x30] sm:$0xff]
  %v2405 = vld [vmem:[%s9 + $0x38] sm:$0xff]
  %v2406 = vld [vmem:[%s9 + $0x40] sm:$0xff]
  %v2407 = vld [vmem:[%s9 + $0x48] sm:$0xff]
  %v2408 = vld [vmem:[%s9 + $0x50] sm:$0xff]
  %v2409 = vld [vmem:[%s9 + $0x58] sm:$0xff]
  %v2410 = vld [vmem:[%s9 + $0x60] sm:$0xff]
  %v2411 = vld [vmem:[%s9 + $0x68] sm:$0xff]
  %v2412 = vld [vmem:[%s9 + $0x70] sm:$0xff]
  %v2413 = vld [vmem:[%s9 + $0x78] sm:$0xff]
  %v2414 = vld [vmem:[%s10] sm:$0x1]
  %v2416 = vperm.slane %v2414, 0
  %2418 = vmatpush.msra.mxu0 %v2413
  %2419 = vmatpush.msra.mxu0 %v2412
  %2420 = vmatpush.msra.mxu0 %v2411
  %2421 = vmatpush.msra.mxu0 %v2410
  %2422 = vmatpush.msra.mxu0 %v2409
  %2423 = vmatpush.msra.mxu0 %v2408
  %2424 = vmatpush.msra.mxu0 %v2407
  %2425 = vmatpush.msra.mxu0 %v2406
  %2426 = vmatpush.msra.mxu0 %v2405
  %2427 = vmatpush.msra.mxu0 %v2404
  %2428 = vmatpush.msra.mxu0 %v2403
  %2429 = vmatpush.msra.mxu0 %v2402
  %2430 = vmatpush.msra.mxu0 %v2401
  %2431 = vmatpush.msra.mxu0 %v2400
  %2432 = vmatpush.msra.mxu0 %v2399
  %2433 = vmatpush.msra.mxu0 %v2398
  %2434 = vmatmul.f32.gmra.mxu0 %v2390
  %v2435 = vpop.f32.mrf.mxu0
  %v2436 = vadd.f32 %v2416, %v2435
  %2437 = vmatmul.f32.gmra.mxu0 %v2391
  %v2438 = vpop.f32.mrf.mxu0
  %v2439 = vadd.f32 %v2416, %v2438
  %2440 = vmatmul.f32.gmra.mxu0 %v2392
  %v2441 = vpop.f32.mrf.mxu0
  %v2442 = vadd.f32 %v2416, %v2441
  %2443 = vmatmul.f32.gmra.mxu0 %v2393
  %v2444 = vpop.f32.mrf.mxu0
  %v2445 = vadd.f32 %v2416, %v2444
  %2446 = vmatmul.f32.gmra.mxu0 %v2394
  %v2447 = vpop.f32.mrf.mxu0
  %v2448 = vadd.f32 %v2416, %v2447
  %2449 = vmatmul.f32.gmra.mxu0 %v2395
  %v2450 = vpop.f32.mrf.mxu0
  %v2451 = vadd.f32 %v2416, %v2450
  %2452 = vmatmul.f32.gmra.mxu0 %v2396
  %v2453 = vpop.f32.mrf.mxu0
  %v2454 = vadd.f32 %v2416, %v2453
  %2455 = vmatmul.f32.gmra.mxu0 %v2397
  %v2456 = vpop.f32.mrf.mxu0
  %v2457 = vadd.f32 %v2416, %v2456
  %2458 = vdwg.mxu0
  %v2459 = vmax.f32 %v2436, 0.0
  %v2460 = vmax.f32 %v2439, 0.0
  %v2461 = vmax.f32 %v2442, 0.0
  %v2462 = vmax.f32 %v2445, 0.0
  %v2463 = vmax.f32 %v2448, 0.0
  %v2464 = vmax.f32 %v2451, 0.0
  %v2465 = vmax.f32 %v2454, 0.0
  %v2466 = vmax.f32 %v2457, 0.0
  %v2467 = vld [vmem:[%s11] sm:$0xff]
  %v2468 = vld [vmem:[%s11 + $0x8] sm:$0xff]
  %v2469 = vld [vmem:[%s11 + $0x10] sm:$0xff]
  %v2470 = vld [vmem:[%s11 + $0x18] sm:$0xff]
  %v2471 = vld [vmem:[%s11 + $0x20] sm:$0xff]
  %v2472 = vld [vmem:[%s11 + $0x28] sm:$0xff]
  %v2473 = vld [vmem:[%s11 + $0x30] sm:$0xff]
  %v2474 = vld [vmem:[%s11 + $0x38] sm:$0xff]
  %v2475 = vld [vmem:[%s11 + $0x40] sm:$0xff]
  %v2476 = vld [vmem:[%s11 + $0x48] sm:$0xff]
  %v2477 = vld [vmem:[%s11 + $0x50] sm:$0xff]
  %v2478 = vld [vmem:[%s11 + $0x58] sm:$0xff]
  %v2479 = vld [vmem:[%s11 + $0x60] sm:$0xff]
  %v2480 = vld [vmem:[%s11 + $0x68] sm:$0xff]
  %v2481 = vld [vmem:[%s11 + $0x70] sm:$0xff]
  %v2482 = vld [vmem:[%s11 + $0x78] sm:$0xff]
  %v2483 = vld [vmem:[%s12] sm:$0x1]
  %v2485 = vperm.slane %v2483, 0
  %2487 = vmatpush.msra.mxu0 %v2482
  %2488 = vmatpush.msra.mxu0 %v2481
  %2489 = vmatpush.msra.mxu0 %v2480
  %2490 = vmatpush.msra.mxu0 %v2479
  %2491 = vmatpush.msra.mxu0 %v2478
  %2492 = vmatpush.msra.mxu0 %v2477
  %2493 = vmatpush.msra.mxu0 %v2476
  %2494 = vmatpush.msra.mxu0 %v2475
  %2495 = vmatpush.msra.mxu0 %v2474
  %2496 = vmatpush.msra.mxu0 %v2473
  %2497 = vmatpush.msra.mxu0 %v2472
  %2498 = vmatpush.msra.mxu0 %v2471
  %2499 = vmatpush.msra.mxu0 %v2470
  %2500 = vmatpush.msra.mxu0 %v2469
  %2501 = vmatpush.msra.mxu0 %v2468
  %2502 = vmatpush.msra.mxu0 %v2467
  %2503 = vmatmul.f32.gmra.mxu0 %v2459
  %v2504 = vpop.f32.mrf.mxu0
  %v2505 = vadd.f32 %v2485, %v2504
  %2506 = vmatmul.f32.gmra.mxu0 %v2460
  %v2507 = vpop.f32.mrf.mxu0
  %v2508 = vadd.f32 %v2485, %v2507
  %2509 = vmatmul.f32.gmra.mxu0 %v2461
  %v2510 = vpop.f32.mrf.mxu0
  %v2511 = vadd.f32 %v2485, %v2510
  %2512 = vmatmul.f32.gmra.mxu0 %v2462
  %v2513 = vpop.f32.mrf.mxu0
  %v2514 = vadd.f32 %v2485, %v2513
  %2515 = vmatmul.f32.gmra.mxu0 %v2463
  %v2516 = vpop.f32.mrf.mxu0
  %v2517 = vadd.f32 %v2485, %v2516
  %2518 = vmatmul.f32.gmra.mxu0 %v2464
  %v2519 = vpop.f32.mrf.mxu0
  %v2520 = vadd.f32 %v2485, %v2519
  %2521 = vmatmul.f32.gmra.mxu0 %v2465
  %v2522 = vpop.f32.mrf.mxu0
  %v2523 = vadd.f32 %v2485, %v2522
  %2524 = vmatmul.f32.gmra.mxu0 %v2466
  %v2525 = vpop.f32.mrf.mxu0
  %v2526 = vadd.f32 %v2485, %v2525
  %2527 = vdwg.mxu0
  %2528 = vst [vmem:[%s13] sm:$0xff] %v2505
  %2529 = vst [vmem:[%s13 + $0x8] sm:$0xff] %v2508
  %2530 = vst [vmem:[%s13 + $0x10] sm:$0xff] %v2511
  %2531 = vst [vmem:[%s13 + $0x18] sm:$0xff] %v2514
  %2532 = vst [vmem:[%s13 + $0x20] sm:$0xff] %v2517
  %2533 = vst [vmem:[%s13 + $0x28] sm:$0xff] %v2520
  %2534 = vst [vmem:[%s13 + $0x30] sm:$0xff] %v2523
  %2535 = vst [vmem:[%s13 + $0x38] sm:$0xff] %v2526
  // Predicated region
  $region54: #{seq2seq_encoder_forward.1} parent=0 // pred_check
    _
  $region55: #{seq2seq_encoder_forward.1} parent=0 // pred_check_branch
    %2537 = sbr.rel (0) target = $region57
  $region56: #{seq2seq_encoder_forward.1} parent=0 // pred_region
    _
  $region57: #{seq2seq_encoder_forward.1} parent=0 // pred_fallthru
    _
  // Predicated region
  $region58: #{seq2seq_encoder_forward.1} parent=0 // pred_check
    _
  $region59: #{seq2seq_encoder_forward.1} parent=0 // pred_check_branch
    %2539 = sbr.rel (0) target = $region61
  $region60: #{seq2seq_encoder_forward.1} parent=0 // pred_region
    _
  $region61: #{seq2seq_encoder_forward.1} parent=0 // pred_fallthru
    _
  // Predicated region
  $region62: #{seq2seq_encoder_forward.1} parent=0 // pred_check
    _
  $region63: #{seq2seq_encoder_forward.1} parent=0 // pred_check_branch
    %2541 = sbr.rel (0) target = $region65
  $region64: #{seq2seq_encoder_forward.1} parent=0 // pred_region
    _
  $region65: #{seq2seq_encoder_forward.1} parent=0 // pred_fallthru
    _
  // Predicated region
  $region66: #{seq2seq_encoder_forward.1} parent=0 // pred_check
    _
  $region67: #{seq2seq_encoder_forward.1} parent=0 // pred_check_branch
    %2543 = sbr.rel (0) target = $region69
  $region68: #{seq2seq_encoder_forward.1} parent=0 // pred_region
    _
  $region69: #{seq2seq_encoder_forward.1} parent=0 // pred_fallthru
    _

</llo_original>
